<compile_context>
chip_gen: v5e
topology: v5e:2x2
jax: 0.10.0
libtpu: 0.0.40
codegen_flags: <defaults>
</compile_context>

<pallas_src>
import numpy as np
import jax
import jax.numpy as jnp
from jax.experimental import pallas as pl
from jax.experimental.pallas import tpu as pltpu

C1, C2 = 16, 32          # conv1 / conv2 output channels
LANES = 256              # lane width of pooled activations (13*16=208, 5*32=160 used)
BT = 8                   # images per grid step; keep a multiple of 8 (sublane align).
                         # Raise to 32-64 for real batches (M ~256 per review).
K1 = 128                 # conv1 contraction width (3*28=84 used, zero-padded)
H_PAD = 128              # fc1 output lane width (64 used, zero-padded)
NCLS = 128               # logits lane width (10 used, -1e30-masked)
MXU_DTYPE = jnp.float32  # set jnp.bfloat16 on v6e/v7x for native-rate MXU


# ------------------------------ fused kernel ------------------------------- #
#
# Per grid step (BT images):
#   xc_ref  [26*BT, 128]  conv1 inputs: row = group(h mod 4)-major, batch-minor;
#                         lanes 0:84 = [x[h] | x[h+1] | x[h+2]] (K-concat taps)
#   w1_ref  [128, 512]    conv1 banded weights; out lane = wpar*256 + j*16 + c
#   w2_ref  [768, 512]    conv2 banded weights; row = ki*256 + j_in*16 + c_in
#   w3_ref  [1280, 128]   fc1 weights, CHW flatten baked in; row = i2*256 + j2*32 + c2
#   w4_ref  [128, 128]    fc2 weights (rows>=64 and cols>=10 are zero)
#   out_ref [BT, 128]     log_softmax logits (cols >= 10 are -inf-ish junk, sliced off)

def _simplenet_fused_kernel(xc_ref, w1_ref, b1_ref, w2_ref, b2_ref,
                            w3_ref, b3_ref, w4_ref, b4_ref, out_ref):
    bt = out_ref.shape[0]

    def mm(a, b):  # MXU matmul, f32 accumulation; casts A for the bf16 path
        return jnp.dot(a.astype(b.dtype), b, preferred_element_type=jnp.float32)

    # ---- conv1: ONE banded matmul over all 26 conv rows x BT images ----
    rows = mm(xc_ref[...], w1_ref[...])                              # [26*BT, 512]

    # ---- pool1 (2x2) + bias + ReLU (max/bias/ReLU commute with the conv sum) ----
    pe = jnp.maximum(rows[0:7 * bt], rows[7 * bt:14 * bt])           # even pooled rows [7BT,512]
    po = jnp.maximum(rows[14 * bt:20 * bt], rows[20 * bt:26 * bt])   # odd pooled rows  [6BT,512]
    b1 = b1_ref[...]
    pe = jnp.maximum(jnp.maximum(pe[:, 0:256], pe[:, 256:512]) + b1, 0.0)   # [7BT, 256]
    po = jnp.maximum(jnp.maximum(po[:, 0:256], po[:, 256:512]) + b1, 0.0)   # [6BT, 256]

    # ---- conv2: K-concat the 3 row taps (whole-vreg chunks), even/odd stacked on M ----
    pe05, pe16 = pe[0:5 * bt], pe[bt:6 * bt]
    po05, po16 = po[0:5 * bt], po[bt:6 * bt]
    a2 = jnp.concatenate(
        [jnp.concatenate([pe05, po05, pe16], axis=1),                # conv2 rows 2*i2
         jnp.concatenate([po05, pe16, po16], axis=1)],               # conv2 rows 2*i2+1
        axis=0)                                                      # [10*BT, 768]
    r2 = mm(a2, w2_ref[...])                                         # [10*BT, 512]

    # ---- pool2 (2x2) + bias + ReLU ----
    y2 = jnp.maximum(r2[0:5 * bt], r2[5 * bt:10 * bt])               # [5BT, 512]
    p2 = jnp.maximum(jnp.maximum(y2[:, 0:256], y2[:, 256:512]) + b2_ref[...], 0.0)

    # ---- fc1 + ReLU as one matmul (CHW flatten order baked into w3 rows) ----
    a3 = jnp.concatenate([p2[i * bt:(i + 1) * bt] for i in range(5)], axis=1)  # [BT, 1280]
    h = jnp.maximum(mm(a3, w3_ref[...]) + b3_ref[...], 0.0)          # [BT, 128] (64 used)

    # ---- fc2 + masked log_softmax (padded logit lanes carry a -1e30 bias) ----
    logits = mm(h, w4_ref[...]) + b4_ref[...]                        # [BT, 128]
    m = jnp.max(logits, axis=-1, keepdims=True)
    s = logits - m
    lse = jnp.log(jnp.sum(jnp.exp(s), axis=-1, keepdims=True))
    out_ref[...] = (s - lse).astype(out_ref.dtype)


# ------------------------------ forward wrapper ----------------------------- #

@jax.jit
def simplenet_forward(kparams, x_nchw):
    """x_nchw: [B, 1, 28, 28] float32 (PyTorch layout).  Returns [B, 10] log-probs."""
    B = x_nchw.shape[0]
    G = pl.cdiv(B, BT)
    Bp = G * BT
    x = x_nchw.reshape(B, 28, 28).astype(jnp.float32)
    if Bp != B:                                   # pad batch to a BT multiple
        x = jnp.pad(x, ((0, Bp - B), (0, 0), (0, 0)))

    # Host packing: for conv output row h, lanes = [x[h] | x[h+1] | x[h+2]]
    # (K-concat of the 3 row taps); rows grouped by (h mod 4) and laid out
    # (conv-row outer, batch inner) so every in-kernel slice is contiguous.
    taps = jnp.concatenate([x[:, 0:26, :], x[:, 1:27, :], x[:, 2:28, :]], axis=-1)
    grouped = jnp.concatenate([taps[:, r::4, :] for r in range(4)], axis=1)   # [Bp,26,84]
    xc = grouped.reshape(G, BT, 26, 84).transpose(0, 2, 1, 3).reshape(G * 26 * BT, 84)
    xc = jnp.pad(xc, ((0, 0), (0, K1 - 84))).astype(kparams["w1"].dtype)

    out = pl.pallas_call(
        _simplenet_fused_kernel,
        out_shape=jax.ShapeDtypeStruct((Bp, NCLS), jnp.float32),
        grid=(G,),
        in_specs=[
            pl.BlockSpec((26 * BT, K1), lambda g: (g, 0)),      # packed input rows
            pl.BlockSpec((K1, 512), lambda g: (0, 0)),          # conv1 band (K-concat)
            pl.BlockSpec((1, 256), lambda g: (0, 0)),           # bias1 (pooled lanes)
            pl.BlockSpec((768, 512), lambda g: (0, 0)),         # conv2 band (K-concat)
            pl.BlockSpec((1, 256), lambda g: (0, 0)),           # bias2 (pooled lanes)
            pl.BlockSpec((1280, H_PAD), lambda g: (0, 0)),      # fc1 (CHW baked in)
            pl.BlockSpec((1, H_PAD), lambda g: (0, 0)),         # fc1 bias
            pl.BlockSpec((H_PAD, NCLS), lambda g: (0, 0)),      # fc2 weight (padded)
            pl.BlockSpec((1, NCLS), lambda g: (0, 0)),          # fc2 bias (-1e30 pad)
        ],
        out_specs=pl.BlockSpec((BT, NCLS), lambda g: (g, 0)),
        compiler_params=pltpu.CompilerParams(
            dimension_semantics=("parallel",)),                 # megacore over batch tiles
    )(xc, kparams["w1"], kparams["b1"], kparams["w2"], kparams["b2"],
      kparams["w3"], kparams["b3"], kparams["w4"], kparams["b4"])
    return out[:B, :10]


# -------------------------- parameters & repacking -------------------------- #

def init_params(key):
    """PyTorch-layout parameters with nn.Module-default uniform init."""
    ks = jax.random.split(key, 8)

    def u(kk, shape, fan_in):
        bound = 1.0 / jnp.sqrt(jnp.float32(fan_in))
        return jax.random.uniform(kk, shape, jnp.float32, -bound, bound)

    return {
        "conv1_w": u(ks[0], (16, 1, 3, 3), 9),
        "conv1_b": u(ks[1], (16,), 9),
        "conv2_w": u(ks[2], (32, 16, 3, 3), 16 * 9),
        "conv2_b": u(ks[3], (32,), 16 * 9),
        "fc1_w": u(ks[4], (64, 800), 800),
        "fc1_b": u(ks[5], (64,), 800),
        "fc2_w": u(ks[6], (10, 64), 64),
        "fc2_b": u(ks[7], (10,), 64),
    }


def prepare_kernel_params(params, mxu_dtype=MXU_DTYPE):
    """One-time host-side repack of PyTorch weights into lane-banded, K-concatenated
    kernel operands.  Biases stay float32 (f32 epilogue on all chips)."""
    w1 = np.asarray(params["conv1_w"], np.float32)   # [16, 1, 3, 3]
    b1 = np.asarray(params["conv1_b"], np.float32)
    w2 = np.asarray(params["conv2_w"], np.float32)   # [32, 16, 3, 3]
    b2 = np.asarray(params["conv2_b"], np.float32)
    w3 = np.asarray(params["fc1_w"], np.float32)     # [64, 800]  (CHW flatten)
    b3 = np.asarray(params["fc1_b"], np.float32)
    w4 = np.asarray(params["fc2_w"], np.float32)     # [10, 64]
    b4 = np.asarray(params["fc2_b"], np.float32)

    # conv1 band, K-concat taps: row = ki*28 + w_in (zero-padded to K1),
    # out lane = wpar*256 + j*16 + c where output column w_out = 2*j + wpar.
    w1b = np.zeros((K1, 2 * LANES), np.float32)
    for ki in range(3):
        for kj in range(3):
            for wpar in range(2):
                for j in range(13):
                    w_in = 2 * j + wpar + kj
                    base = wpar * LANES + j * C1
                    w1b[ki * 28 + w_in, base:base + C1] = w1[:, 0, ki, kj]
    bias1 = np.zeros((1, LANES), np.float32)
    for j in range(13):
        bias1[0, j * C1:(j + 1) * C1] = b1

    # conv2 band, K-concat taps: row = ki*256 + j_in*16 + c_in,
    # out lane = wpar*256 + j2*32 + c2 where output column = 2*j2 + wpar.
    w2b = np.zeros((3 * LANES, 2 * LANES), np.float32)
    for ki in range(3):
        for kj in range(3):
            for wpar in range(2):
                for j2 in range(5):
                    j_in = 2 * j2 + wpar + kj
                    obase = wpar * LANES + j2 * C2
                    for c_in in range(C1):
                        w2b[ki * LANES + j_in * C1 + c_in, obase:obase + C2] = \
                            w2[:, c_in, ki, kj]
    bias2 = np.zeros((1, LANES), np.float32)
    for j2 in range(5):
        bias2[0, j2 * C2:(j2 + 1) * C2] = b2

    # fc1 with torch CHW flatten baked in:
    # row = i2*256 + j2*32 + c2  ->  torch feature index c2*25 + i2*5 + j2.
    w3e = np.zeros((5 * LANES, H_PAD), np.float32)
    for i2 in range(5):
        for j2 in range(5):
            for c2 in range(C2):
                w3e[i2 * LANES + j2 * C2 + c2, 0:64] = w3[:, c2 * 25 + i2 * 5 + j2]
    bias3 = np.zeros((1, H_PAD), np.float32)
    bias3[0, 0:64] = b3

    # fc2 padded to 128 lanes; padded logit lanes get a -1e30 bias so the
    # in-kernel log_softmax max/sum ignore them.
    w4p = np.zeros((H_PAD, NCLS), np.float32)
    w4p[0:64, 0:10] = w4.T
    bias4 = np.full((1, NCLS), -1e30, np.float32)
    bias4[0, 0:10] = b4

    return {
        "w1": jnp.asarray(w1b, mxu_dtype),
        "b1": jnp.asarray(bias1),
        "w2": jnp.asarray(w2b, mxu_dtype),
        "b2": jnp.asarray(bias2),
        "w3": jnp.asarray(w3e, mxu_dtype),
        "b3": jnp.asarray(bias3),
        "w4": jnp.asarray(w4p, mxu_dtype),
        "b4": jnp.asarray(bias4),
    }


# --------------------------- plain-JAX reference ---------------------------- #

def reference_forward(params, x_nchw):
    """Straightforward XLA implementation of the PyTorch module (for self-check)."""
    x = x_nchw[:, 0].astype(jnp.float32)                       # [B, 28, 28]
    w1, b1 = params["conv1_w"], params["conv1_b"]
    y1 = jnp.zeros(x.shape[:1] + (26, 26, 16), jnp.float32)
    for ki in range(3):
        for kj in range(3):
            y1 = y1 + x[:, ki:ki + 26, kj:kj + 26, None] * w1[:, 0, ki, kj]
    y1 = jax.nn.relu(y1 + b1)
    y1 = y1.reshape(-1, 13, 2, 13, 2, 16).max(axis=(2, 4))     # [B, 13, 13, 16]

    w2, b2 = params["conv2_w"], params["conv2_b"]
    y2 = jnp.zeros(x.shape[:1] + (11, 11, 32), jnp.float32)
    for ki in range(3):
        for kj in range(3):
            y2 = y2 + jnp.einsum("bhwc,dc->bhwd",
                                 y1[:, ki:ki + 11, kj:kj + 11, :],
                                 w2[:, :, ki, kj], precision="highest")
    y2 = jax.nn.relu(y2 + b2)
    y2 = y2[:, :10, :10, :].reshape(-1, 5, 2, 5, 2, 32).max(axis=(2, 4))   # [B,5,5,32]

    feat = jnp.transpose(y2, (0, 3, 1, 2)).reshape(-1, 32 * 5 * 5)         # CHW flatten
    h = jax.nn.relu(jnp.dot(feat, params["fc1_w"].T, precision="highest")
                    + params["fc1_b"])
    logits = jnp.dot(h, params["fc2_w"].T, precision="highest") + params["fc2_b"]
    return jax.nn.log_softmax(logits, axis=-1)


# ----------------------------------- main ----------------------------------- #

if __name__ == "__main__":
    key = jax.random.PRNGKey(0)
    pkey, xkey = jax.random.split(key)
    params = init_params(pkey)
    kparams = prepare_kernel_params(params)

    # fc1 = Linear(32*5*5, 64) implies a 28x28 single-channel input (MNIST-style)
    x = jax.random.normal(xkey, (2, 1, 28, 28), jnp.float32)

    out = jax.block_until_ready(simplenet_forward(kparams, x))
    ref = jax.block_until_ready(reference_forward(params, x))

    assert out.shape == (2, 10)
    # log_softmax rows must exponentiate-sum to 1
    assert bool(jnp.allclose(jnp.sum(jnp.exp(out), axis=1), 1.0, atol=1e-4))
    # fused Pallas kernel must match the plain-JAX (PyTorch-equivalent) reference
    tol = 2e-3 if MXU_DTYPE == jnp.float32 else 5e-2
    assert bool(jnp.allclose(out, ref, atol=tol, rtol=tol)), "kernel/reference mismatch"
    print("KERNEL_OK")
</pallas_src>

<mosaic_0001>
module attributes {stable_mosaic.version = 11 : i64} {
  func.func @_simplenet_fused_kernel(%arg0: i32, %arg1: memref<208x128xf32, #tpu.memory_space<vmem>>, %arg2: memref<128x512xf32, #tpu.memory_space<vmem>>, %arg3: memref<1x256xf32, #tpu.memory_space<vmem>>, %arg4: memref<768x512xf32, #tpu.memory_space<vmem>>, %arg5: memref<1x256xf32, #tpu.memory_space<vmem>>, %arg6: memref<1280x128xf32, #tpu.memory_space<vmem>>, %arg7: memref<1x128xf32, #tpu.memory_space<vmem>>, %arg8: memref<128x128xf32, #tpu.memory_space<vmem>>, %arg9: memref<1x128xf32, #tpu.memory_space<vmem>>, %arg10: memref<8x128xf32, #tpu.memory_space<vmem>>) attributes {dimension_semantics = [#tpu.dimension_semantics<parallel>], iteration_bounds = array<i64: 1>, scalar_prefetch = 0 : i64, scratch_operands = 0 : i64, tpu.core_type = #tpu.core_type<tc>, window_params = [{transform_indices = @transform_0, window_bounds = array<i64: 208, 128>}, {pipeline_mode = #tpu.pipeline_mode<synchronous>, transform_indices = @transform_1, window_bounds = array<i64: 128, 512>}, {pipeline_mode = #tpu.pipeline_mode<synchronous>, transform_indices = @transform_2, window_bounds = array<i64: 1, 256>}, {pipeline_mode = #tpu.pipeline_mode<synchronous>, transform_indices = @transform_3, window_bounds = array<i64: 768, 512>}, {pipeline_mode = #tpu.pipeline_mode<synchronous>, transform_indices = @transform_4, window_bounds = array<i64: 1, 256>}, {pipeline_mode = #tpu.pipeline_mode<synchronous>, transform_indices = @transform_5, window_bounds = array<i64: 1280, 128>}, {pipeline_mode = #tpu.pipeline_mode<synchronous>, transform_indices = @transform_6, window_bounds = array<i64: 1, 128>}, {pipeline_mode = #tpu.pipeline_mode<synchronous>, transform_indices = @transform_7, window_bounds = array<i64: 128, 128>}, {pipeline_mode = #tpu.pipeline_mode<synchronous>, transform_indices = @transform_8, window_bounds = array<i64: 1, 128>}, {transform_indices = @transform_9, window_bounds = array<i64: 8, 128>}]} {
    %c0 = arith.constant 0 : index
    %c0_0 = arith.constant 0 : index
    %0 = vector.load %arg1[%c0, %c0_0] : memref<208x128xf32, #tpu.memory_space<vmem>>, vector<208x128xf32>
    %c0_1 = arith.constant 0 : index
    %c0_2 = arith.constant 0 : index
    %1 = vector.load %arg2[%c0_1, %c0_2] : memref<128x512xf32, #tpu.memory_space<vmem>>, vector<128x512xf32>
    %cst = arith.constant dense<0.000000e+00> : vector<208x512xf32>
    %2 = tpu.matmul %0, %1, %cst {dimension_numbers = #tpu.dot_dimension_numbers<[1], [0], [0], [1], [0, 0, 1, 1], [], []>} : vector<208x128xf32>, vector<128x512xf32>, vector<208x512xf32> -> vector<208x512xf32>
    %3 = vector.extract_strided_slice %2 {offsets = [0, 0], sizes = [56, 512], strides = [1, 1]} : vector<208x512xf32> to vector<56x512xf32>
    %4 = vector.extract_strided_slice %2 {offsets = [56, 0], sizes = [56, 512], strides = [1, 1]} : vector<208x512xf32> to vector<56x512xf32>
    %5 = arith.maximumf %3, %4 : vector<56x512xf32>
    %6 = vector.extract_strided_slice %2 {offsets = [112, 0], sizes = [48, 512], strides = [1, 1]} : vector<208x512xf32> to vector<48x512xf32>
    %7 = vector.extract_strided_slice %2 {offsets = [160, 0], sizes = [48, 512], strides = [1, 1]} : vector<208x512xf32> to vector<48x512xf32>
    %8 = arith.maximumf %6, %7 : vector<48x512xf32>
    %c0_3 = arith.constant 0 : index
    %c0_4 = arith.constant 0 : index
    %9 = vector.load %arg3[%c0_3, %c0_4] : memref<1x256xf32, #tpu.memory_space<vmem>>, vector<1x256xf32>
    %10 = vector.extract_strided_slice %5 {offsets = [0, 0], sizes = [56, 256], strides = [1, 1]} : vector<56x512xf32> to vector<56x256xf32>
    %11 = vector.extract_strided_slice %5 {offsets = [0, 256], sizes = [56, 256], strides = [1, 1]} : vector<56x512xf32> to vector<56x256xf32>
    %12 = arith.maximumf %10, %11 : vector<56x256xf32>
    %13 = vector.broadcast %9 : vector<1x256xf32> to vector<56x256xf32>
    %14 = arith.addf %12, %13 : vector<56x256xf32>
    %cst_5 = arith.constant 0.000000e+00 : f32
    %15 = vector.broadcast %cst_5 : f32 to vector<56x256xf32>
    %16 = arith.maximumf %14, %15 : vector<56x256xf32>
    %17 = vector.extract_strided_slice %8 {offsets = [0, 0], sizes = [48, 256], strides = [1, 1]} : vector<48x512xf32> to vector<48x256xf32>
    %18 = vector.extract_strided_slice %8 {offsets = [0, 256], sizes = [48, 256], strides = [1, 1]} : vector<48x512xf32> to vector<48x256xf32>
    %19 = arith.maximumf %17, %18 : vector<48x256xf32>
    %20 = vector.broadcast %9 : vector<1x256xf32> to vector<48x256xf32>
    %21 = arith.addf %19, %20 : vector<48x256xf32>
    %cst_6 = arith.constant 0.000000e+00 : f32
    %22 = vector.broadcast %cst_6 : f32 to vector<48x256xf32>
    %23 = arith.maximumf %21, %22 : vector<48x256xf32>
    %24 = vector.extract_strided_slice %16 {offsets = [0, 0], sizes = [40, 256], strides = [1, 1]} : vector<56x256xf32> to vector<40x256xf32>
    %25 = vector.extract_strided_slice %16 {offsets = [8, 0], sizes = [40, 256], strides = [1, 1]} : vector<56x256xf32> to vector<40x256xf32>
    %26 = vector.extract_strided_slice %23 {offsets = [0, 0], sizes = [40, 256], strides = [1, 1]} : vector<48x256xf32> to vector<40x256xf32>
    %27 = vector.extract_strided_slice %23 {offsets = [8, 0], sizes = [40, 256], strides = [1, 1]} : vector<48x256xf32> to vector<40x256xf32>
    %28 = tpu.concatenate %24, %26, %25 in 1 : vector<40x256xf32>, vector<40x256xf32>, vector<40x256xf32> -> vector<40x768xf32>
    %29 = tpu.concatenate %26, %25, %27 in 1 : vector<40x256xf32>, vector<40x256xf32>, vector<40x256xf32> -> vector<40x768xf32>
    %30 = tpu.concatenate %28, %29 in 0 : vector<40x768xf32>, vector<40x768xf32> -> vector<80x768xf32>
    %c0_7 = arith.constant 0 : index
    %c0_8 = arith.constant 0 : index
    %31 = vector.load %arg4[%c0_7, %c0_8] : memref<768x512xf32, #tpu.memory_space<vmem>>, vector<768x512xf32>
    %cst_9 = arith.constant dense<0.000000e+00> : vector<80x512xf32>
    %32 = tpu.matmul %30, %31, %cst_9 {dimension_numbers = #tpu.dot_dimension_numbers<[1], [0], [0], [1], [0, 0, 1, 1], [], []>} : vector<80x768xf32>, vector<768x512xf32>, vector<80x512xf32> -> vector<80x512xf32>
    %33 = vector.extract_strided_slice %32 {offsets = [0, 0], sizes = [40, 512], strides = [1, 1]} : vector<80x512xf32> to vector<40x512xf32>
    %34 = vector.extract_strided_slice %32 {offsets = [40, 0], sizes = [40, 512], strides = [1, 1]} : vector<80x512xf32> to vector<40x512xf32>
    %35 = arith.maximumf %33, %34 : vector<40x512xf32>
    %36 = vector.extract_strided_slice %35 {offsets = [0, 0], sizes = [40, 256], strides = [1, 1]} : vector<40x512xf32> to vector<40x256xf32>
    %37 = vector.extract_strided_slice %35 {offsets = [0, 256], sizes = [40, 256], strides = [1, 1]} : vector<40x512xf32> to vector<40x256xf32>
    %38 = arith.maximumf %36, %37 : vector<40x256xf32>
    %c0_10 = arith.constant 0 : index
    %c0_11 = arith.constant 0 : index
    %39 = vector.load %arg5[%c0_10, %c0_11] : memref<1x256xf32, #tpu.memory_space<vmem>>, vector<1x256xf32>
    %40 = vector.broadcast %39 : vector<1x256xf32> to vector<40x256xf32>
    %41 = arith.addf %38, %40 : vector<40x256xf32>
    %cst_12 = arith.constant 0.000000e+00 : f32
    %42 = vector.broadcast %cst_12 : f32 to vector<40x256xf32>
    %43 = arith.maximumf %41, %42 : vector<40x256xf32>
    %44 = vector.extract_strided_slice %43 {offsets = [0, 0], sizes = [8, 256], strides = [1, 1]} : vector<40x256xf32> to vector<8x256xf32>
    %45 = vector.extract_strided_slice %43 {offsets = [8, 0], sizes = [8, 256], strides = [1, 1]} : vector<40x256xf32> to vector<8x256xf32>
    %46 = vector.extract_strided_slice %43 {offsets = [16, 0], sizes = [8, 256], strides = [1, 1]} : vector<40x256xf32> to vector<8x256xf32>
    %47 = vector.extract_strided_slice %43 {offsets = [24, 0], sizes = [8, 256], strides = [1, 1]} : vector<40x256xf32> to vector<8x256xf32>
    %48 = vector.extract_strided_slice %43 {offsets = [32, 0], sizes = [8, 256], strides = [1, 1]} : vector<40x256xf32> to vector<8x256xf32>
    %49 = tpu.concatenate %44, %45, %46, %47, %48 in 1 : vector<8x256xf32>, vector<8x256xf32>, vector<8x256xf32>, vector<8x256xf32>, vector<8x256xf32> -> vector<8x1280xf32>
    %c0_13 = arith.constant 0 : index
    %c0_14 = arith.constant 0 : index
    %50 = vector.load %arg6[%c0_13, %c0_14] : memref<1280x128xf32, #tpu.memory_space<vmem>>, vector<1280x128xf32>
    %cst_15 = arith.constant dense<0.000000e+00> : vector<8x128xf32>
    %51 = tpu.matmul %49, %50, %cst_15 {dimension_numbers = #tpu.dot_dimension_numbers<[1], [0], [0], [1], [0, 0, 1, 1], [], []>} : vector<8x1280xf32>, vector<1280x128xf32>, vector<8x128xf32> -> vector<8x128xf32>
    %c0_16 = arith.constant 0 : index
    %c0_17 = arith.constant 0 : index
    %52 = vector.load %arg7[%c0_16, %c0_17] : memref<1x128xf32, #tpu.memory_space<vmem>>, vector<1x128xf32>
    %53 = vector.broadcast %52 : vector<1x128xf32> to vector<8x128xf32>
    %54 = arith.addf %51, %53 : vector<8x128xf32>
    %cst_18 = arith.constant 0.000000e+00 : f32
    %55 = vector.broadcast %cst_18 : f32 to vector<8x128xf32>
    %56 = arith.maximumf %54, %55 : vector<8x128xf32>
    %c0_19 = arith.constant 0 : index
    %c0_20 = arith.constant 0 : index
    %57 = vector.load %arg8[%c0_19, %c0_20] : memref<128x128xf32, #tpu.memory_space<vmem>>, vector<128x128xf32>
    %cst_21 = arith.constant dense<0.000000e+00> : vector<8x128xf32>
    %58 = tpu.matmul %56, %57, %cst_21 {dimension_numbers = #tpu.dot_dimension_numbers<[1], [0], [0], [1], [0, 0, 1, 1], [], []>} : vector<8x128xf32>, vector<128x128xf32>, vector<8x128xf32> -> vector<8x128xf32>
    %c0_22 = arith.constant 0 : index
    %c0_23 = arith.constant 0 : index
    %59 = vector.load %arg9[%c0_22, %c0_23] : memref<1x128xf32, #tpu.memory_space<vmem>>, vector<1x128xf32>
    %60 = vector.broadcast %59 : vector<1x128xf32> to vector<8x128xf32>
    %61 = arith.addf %58, %60 : vector<8x128xf32>
    %cst_24 = arith.constant dense<0xFF800000> : vector<8xf32>
    %62 = vector.multi_reduction <maximumf>, %61, %cst_24 [1] : vector<8x128xf32> to vector<8xf32>
    %63 = vector.shape_cast %62 : vector<8xf32> to vector<8x1xf32>
    %64 = vector.broadcast %63 : vector<8x1xf32> to vector<8x128xf32>
    %65 = arith.subf %61, %64 : vector<8x128xf32>
    %66 = math.exp %65 : vector<8x128xf32>
    %cst_25 = arith.constant dense<0.000000e+00> : vector<8xf32>
    %67 = vector.multi_reduction <add>, %66, %cst_25 [1] : vector<8x128xf32> to vector<8xf32>
    %68 = vector.shape_cast %67 : vector<8xf32> to vector<8x1xf32>
    %69 = math.log %68 : vector<8x1xf32>
    %70 = vector.broadcast %69 : vector<8x1xf32> to vector<8x128xf32>
    %71 = arith.subf %65, %70 : vector<8x128xf32>
    %c0_26 = arith.constant 0 : index
    %c0_27 = arith.constant 0 : index
    %72 = vector.load %arg10[%c0_26, %c0_27] : memref<8x128xf32, #tpu.memory_space<vmem>>, vector<8x128xf32>
    tpu.vector_store %arg10[%c0_26, %c0_27], %71 {strides = array<i32>} : memref<8x128xf32, #tpu.memory_space<vmem>>, vector<8x128xf32>,
    return
  }
  func.func @transform_0(%arg0: i32) -> (i32, i32) {
    %c0_i32 = arith.constant 0 : i32
    %c0_i32_0 = arith.constant 0 : i32
    return %arg0, %c0_i32 : i32, i32
  }
  func.func @transform_1(%arg0: i32) -> (i32, i32) {
    %c0_i32 = arith.constant 0 : i32
    %c0_i32_0 = arith.constant 0 : i32
    %c0_i32_1 = arith.constant 0 : i32
    return %c0_i32, %c0_i32_0 : i32, i32
  }
  func.func @transform_2(%arg0: i32) -> (i32, i32) {
    %c0_i32 = arith.constant 0 : i32
    %c0_i32_0 = arith.constant 0 : i32
    %c0_i32_1 = arith.constant 0 : i32
    return %c0_i32, %c0_i32_0 : i32, i32
  }
  func.func @transform_3(%arg0: i32) -> (i32, i32) {
    %c0_i32 = arith.constant 0 : i32
    %c0_i32_0 = arith.constant 0 : i32
    %c0_i32_1 = arith.constant 0 : i32
    return %c0_i32, %c0_i32_0 : i32, i32
  }
  func.func @transform_4(%arg0: i32) -> (i32, i32) {
    %c0_i32 = arith.constant 0 : i32
    %c0_i32_0 = arith.constant 0 : i32
    %c0_i32_1 = arith.constant 0 : i32
    return %c0_i32, %c0_i32_0 : i32, i32
  }
  func.func @transform_5(%arg0: i32) -> (i32, i32) {
    %c0_i32 = arith.constant 0 : i32
    %c0_i32_0 = arith.constant 0 : i32
    %c0_i32_1 = arith.constant 0 : i32
    return %c0_i32, %c0_i32_0 : i32, i32
  }
  func.func @transform_6(%arg0: i32) -> (i32, i32) {
    %c0_i32 = arith.constant 0 : i32
    %c0_i32_0 = arith.constant 0 : i32
    %c0_i32_1 = arith.constant 0 : i32
    return %c0_i32, %c0_i32_0 : i32, i32
  }
  func.func @transform_7(%arg0: i32) -> (i32, i32) {
    %c0_i32 = arith.constant 0 : i32
    %c0_i32_0 = arith.constant 0 : i32
    %c0_i32_1 = arith.constant 0 : i32
    return %c0_i32, %c0_i32_0 : i32, i32
  }
  func.func @transform_8(%arg0: i32) -> (i32, i32) {
    %c0_i32 = arith.constant 0 : i32
    %c0_i32_0 = arith.constant 0 : i32
    %c0_i32_1 = arith.constant 0 : i32
    return %c0_i32, %c0_i32_0 : i32, i32
  }
  func.func @transform_9(%arg0: i32) -> (i32, i32) {
    %c0_i32 = arith.constant 0 : i32
    %c0_i32_0 = arith.constant 0 : i32
    return %arg0, %c0_i32 : i32, i32
  }
}

</mosaic_0001>

<llo_original>
// kernel: simplenet_forward.1
$region0: #{simplenet_forward.1}
  #allocation0 [shape = 'u32[]', space=smem, size = 0x4, offset = 0x4, fixed_abs, tag = 'smem constant byte address 0x4 - core index']
  #allocation1 [shape = 'u32[72,128]{1,0:T(1,128)}', space=vmem, size = 0x9000, scoped, tag = 'internal scratch']
  %s0 = inlined_call_operand.vmem [shape: f32[208,128], index: 0, kind: input, shape index: {}]
  %s1 = inlined_call_operand.hbm [shape: f32[128,512], index: 1, kind: input, shape index: {}]
  %s2 = inlined_call_operand.hbm [shape: f32[1,256], index: 2, kind: input, shape index: {}]
  %s3 = inlined_call_operand.hbm [shape: f32[768,512], index: 3, kind: input, shape index: {}]
  %s4 = inlined_call_operand.hbm [shape: f32[1,256], index: 4, kind: input, shape index: {}]
  %s5 = inlined_call_operand.hbm [shape: f32[1280,128], index: 5, kind: input, shape index: {}]
  %s6 = inlined_call_operand.hbm [shape: f32[1,128], index: 6, kind: input, shape index: {}]
  %s7 = inlined_call_operand.hbm [shape: f32[128,128], index: 7, kind: input, shape index: {}]
  %s8 = inlined_call_operand.hbm [shape: f32[1,128], index: 8, kind: input, shape index: {}]
  %s9 = inlined_call_operand.vmem [shape: f32[8,128], index: 9, kind: output, shape index: {}]
  %s10 = sld [smem:[#allocation0]]
  $region78: #{simplenet_forward.1} parent=0
    _
  %s12 = ssub.s32 1, %s10
  %s13 = scalar_select 0, %s12, %s10
  $region1: #{simplenet_forward.1} parent=0
    #allocation2 [shape = 'u8[262144]{0}', space=vmem, size = 0x40000, scoped, tag = 'input window, operand 1, single buffered']
    #allocation3 [shape = 's32[1]{0}', space=sflag, size = 0x4, scoped, tag = 'scoped memory for simplenet_forward.1']
    #allocation4 [shape = 'u8[1024]{0}', space=vmem, size = 0x400, scoped, tag = 'input window, operand 2, single buffered']
    #allocation5 [shape = 's32[1]{0}', space=sflag, size = 0x4, scoped, tag = 'scoped memory for simplenet_forward.1']
    #allocation6 [shape = 'u8[1572864]{0}', space=vmem, size = 0x180000, scoped, tag = 'input window, operand 3, single buffered']
    #allocation7 [shape = 'u8[1024]{0}', space=vmem, size = 0x400, scoped, tag = 'input window, operand 4, single buffered']
    #allocation8 [shape = 's32[1]{0}', space=sflag, size = 0x4, scoped, tag = 'scoped memory for simplenet_forward.1']
    #allocation9 [shape = 'u8[655360]{0}', space=vmem, size = 0xa0000, scoped, tag = 'input window, operand 5, single buffered']
    #allocation10 [shape = 'u8[512]{0}', space=vmem, size = 0x400, scoped, tag = 'input window, operand 6, single buffered']
    #allocation11 [shape = 's32[1]{0}', space=sflag, size = 0x4, scoped, tag = 'scoped memory for simplenet_forward.1']
    #allocation12 [shape = 'u8[65536]{0}', space=vmem, size = 0x10000, scoped, tag = 'input window, operand 7, single buffered']
    #allocation13 [shape = 'u8[512]{0}', space=vmem, size = 0x400, scoped, tag = 'input window, operand 8, single buffered']
    #allocation14 [shape = 's32[1]{0}', space=sflag, size = 0x4, scoped, tag = 'scoped memory for simplenet_forward.1']
    %14 = vsyncpa [#allocation3], 0
    %15 = vsyncpa [#allocation5], 0
    %16 = vsyncpa [#allocation8], 0
    %17 = vsyncpa [#allocation11], 0
    %18 = vsyncpa [#allocation14], 0
    // Predicated region
    $region2: #{simplenet_forward.1} parent=1 // pred_check
      _
    $region3: #{simplenet_forward.1} parent=1 // pred_check_branch
      %20 = sbr.rel (0) target = $region5
    $region4: #{simplenet_forward.1} parent=1 // pred_region
      _
    $region5: #{simplenet_forward.1} parent=1 // pred_fallthru
      _
    // Predicated region
    $region6: #{simplenet_forward.1} parent=1 // pred_check
      _
    $region7: #{simplenet_forward.1} parent=1 // pred_check_branch
      %22 = sbr.rel (0) target = $region9
    $region8: #{simplenet_forward.1} parent=1 // pred_region
      %24 = vsyncadd [#allocation3], 0
      %s25 = sshll.u32 %s1, 4
      %s26 = int_to_ptr.hbm [resolvable:$true] %s25
      %s27 = sshll.u32 [#allocation2], 4
      %s28 = int_to_ptr.vmem [resolvable:$true] %s27
      %33 = dma.hbm_to_vmem [thread:$0]  %s26, 8192, %s28, [#allocation3], 512, 512, 32
    $region9: #{simplenet_forward.1} parent=1 // pred_fallthru
      _
    // Predicated region
    $region10: #{simplenet_forward.1} parent=1 // pred_check
      _
    $region11: #{simplenet_forward.1} parent=1 // pred_check_branch
      %35 = sbr.rel (0) target = $region13
    $region12: #{simplenet_forward.1} parent=1 // pred_region
      %37 = vsyncadd [#allocation5], 0
      %s39 = sshll.u32 %s2, 4
      %s40 = int_to_ptr.hbm [resolvable:$true] %s39
      %s41 = sshll.u32 [#allocation4], 4
      %s42 = int_to_ptr.vmem [resolvable:$true] %s41
      %44 = dma.hbm_to_vmem [thread:$0]  %s40, 32, %s42, [#allocation5]
    $region13: #{simplenet_forward.1} parent=1 // pred_fallthru
      _
    // Predicated region
    $region14: #{simplenet_forward.1} parent=1 // pred_check
      _
    $region15: #{simplenet_forward.1} parent=1 // pred_check_branch
      %46 = sbr.rel (0) target = $region17
    $region16: #{simplenet_forward.1} parent=1 // pred_region
      %48 = vsyncadd [#allocation5], 0
      %s49 = sshll.u32 %s3, 4
      %s50 = int_to_ptr.hbm [resolvable:$true] %s49
      %s51 = sshll.u32 [#allocation6], 4
      %s52 = int_to_ptr.vmem [resolvable:$true] %s51
      %57 = dma.hbm_to_vmem [thread:$0]  %s50, 49152, %s52, [#allocation5], 512, 512, 32
    $region17: #{simplenet_forward.1} parent=1 // pred_fallthru
      _
    // Predicated region
    $region18: #{simplenet_forward.1} parent=1 // pred_check
      _
    $region19: #{simplenet_forward.1} parent=1 // pred_check_branch
      %59 = sbr.rel (0) target = $region21
    $region20: #{simplenet_forward.1} parent=1 // pred_region
      %61 = vsyncadd [#allocation8], 0
      %s63 = sshll.u32 %s4, 4
      %s64 = int_to_ptr.hbm [resolvable:$true] %s63
      %s65 = sshll.u32 [#allocation7], 4
      %s66 = int_to_ptr.vmem [resolvable:$true] %s65
      %68 = dma.hbm_to_vmem [thread:$0]  %s64, 32, %s66, [#allocation8]
    $region21: #{simplenet_forward.1} parent=1 // pred_fallthru
      _
    // Predicated region
    $region22: #{simplenet_forward.1} parent=1 // pred_check
      _
    $region23: #{simplenet_forward.1} parent=1 // pred_check_branch
      %70 = sbr.rel (0) target = $region25
    $region24: #{simplenet_forward.1} parent=1 // pred_region
      %72 = vsyncadd [#allocation8], 0
      %s73 = sshll.u32 %s5, 4
      %s74 = int_to_ptr.hbm [resolvable:$true] %s73
      %s75 = sshll.u32 [#allocation9], 4
      %s76 = int_to_ptr.vmem [resolvable:$true] %s75
      %81 = dma.hbm_to_vmem [thread:$0]  %s74, 20480, %s76, [#allocation8], 128, 128, 8
    $region25: #{simplenet_forward.1} parent=1 // pred_fallthru
      _
    // Predicated region
    $region26: #{simplenet_forward.1} parent=1 // pred_check
      _
    $region27: #{simplenet_forward.1} parent=1 // pred_check_branch
      %83 = sbr.rel (0) target = $region29
    $region28: #{simplenet_forward.1} parent=1 // pred_region
      %85 = vsyncadd [#allocation11], 0
      %s87 = sshll.u32 %s6, 4
      %s88 = int_to_ptr.hbm [resolvable:$true] %s87
      %s89 = sshll.u32 [#allocation10], 4
      %s90 = int_to_ptr.vmem [resolvable:$true] %s89
      %92 = dma.hbm_to_vmem [thread:$0]  %s88, 16, %s90, [#allocation11]
    $region29: #{simplenet_forward.1} parent=1 // pred_fallthru
      _
    // Predicated region
    $region30: #{simplenet_forward.1} parent=1 // pred_check
      _
    $region31: #{simplenet_forward.1} parent=1 // pred_check_branch
      %94 = sbr.rel (0) target = $region33
    $region32: #{simplenet_forward.1} parent=1 // pred_region
      %96 = vsyncadd [#allocation11], 0
      %s97 = sshll.u32 %s7, 4
      %s98 = int_to_ptr.hbm [resolvable:$true] %s97
      %s99 = sshll.u32 [#allocation12], 4
      %s100 = int_to_ptr.vmem [resolvable:$true] %s99
      %105 = dma.hbm_to_vmem [thread:$0]  %s98, 2048, %s100, [#allocation11], 128, 128, 8
    $region33: #{simplenet_forward.1} parent=1 // pred_fallthru
      _
    // Predicated region
    $region34: #{simplenet_forward.1} parent=1 // pred_check
      _
    $region35: #{simplenet_forward.1} parent=1 // pred_check_branch
      %107 = sbr.rel (0) target = $region37
    $region36: #{simplenet_forward.1} parent=1 // pred_region
      %109 = vsyncadd [#allocation14], 0
      %s111 = sshll.u32 %s8, 4
      %s112 = int_to_ptr.hbm [resolvable:$true] %s111
      %s113 = sshll.u32 [#allocation13], 4
      %s114 = int_to_ptr.vmem [resolvable:$true] %s113
      %116 = dma.hbm_to_vmem [thread:$0]  %s112, 16, %s114, [#allocation14]
    $region37: #{simplenet_forward.1} parent=1 // pred_fallthru
      _
    // Predicated region
    $region38: #{simplenet_forward.1} parent=1 // pred_check
      _
    $region39: #{simplenet_forward.1} parent=1 // pred_check_branch
      %118 = sbr.rel (0) target = $region41
    $region40: #{simplenet_forward.1} parent=1 // pred_region
      %120 = dma.done [#allocation3], 8192
    $region41: #{simplenet_forward.1} parent=1 // pred_fallthru
      _
    // Predicated region
    $region42: #{simplenet_forward.1} parent=1 // pred_check
      _
    $region43: #{simplenet_forward.1} parent=1 // pred_check_branch
      %122 = sbr.rel (0) target = $region45
    $region44: #{simplenet_forward.1} parent=1 // pred_region
      %124 = dma.done [#allocation5], 32
    $region45: #{simplenet_forward.1} parent=1 // pred_fallthru
      _
    // Predicated region
    $region46: #{simplenet_forward.1} parent=1 // pred_check
      _
    $region47: #{simplenet_forward.1} parent=1 // pred_check_branch
      %126 = sbr.rel (0) target = $region49
    $region48: #{simplenet_forward.1} parent=1 // pred_region
      %128 = dma.done [#allocation5], 49152
    $region49: #{simplenet_forward.1} parent=1 // pred_fallthru
      _
    // Predicated region
    $region50: #{simplenet_forward.1} parent=1 // pred_check
      _
    $region51: #{simplenet_forward.1} parent=1 // pred_check_branch
      %130 = sbr.rel (0) target = $region53
    $region52: #{simplenet_forward.1} parent=1 // pred_region
      %132 = dma.done [#allocation8], 32
    $region53: #{simplenet_forward.1} parent=1 // pred_fallthru
      _
    // Predicated region
    $region54: #{simplenet_forward.1} parent=1 // pred_check
      _
    $region55: #{simplenet_forward.1} parent=1 // pred_check_branch
      %134 = sbr.rel (0) target = $region57
    $region56: #{simplenet_forward.1} parent=1 // pred_region
      %136 = dma.done [#allocation8], 20480
    $region57: #{simplenet_forward.1} parent=1 // pred_fallthru
      _
    // Predicated region
    $region58: #{simplenet_forward.1} parent=1 // pred_check
      _
    $region59: #{simplenet_forward.1} parent=1 // pred_check_branch
      %138 = sbr.rel (0) target = $region61
    $region60: #{simplenet_forward.1} parent=1 // pred_region
      %140 = dma.done [#allocation11], 16
    $region61: #{simplenet_forward.1} parent=1 // pred_fallthru
      _
    // Predicated region
    $region62: #{simplenet_forward.1} parent=1 // pred_check
      _
    $region63: #{simplenet_forward.1} parent=1 // pred_check_branch
      %142 = sbr.rel (0) target = $region65
    $region64: #{simplenet_forward.1} parent=1 // pred_region
      %144 = dma.done [#allocation11], 2048
    $region65: #{simplenet_forward.1} parent=1 // pred_fallthru
      _
    // Predicated region
    $region66: #{simplenet_forward.1} parent=1 // pred_check
      _
    $region67: #{simplenet_forward.1} parent=1 // pred_check_branch
      %146 = sbr.rel (0) target = $region69
    $region68: #{simplenet_forward.1} parent=1 // pred_region
      %148 = dma.done [#allocation14], 16
    $region69: #{simplenet_forward.1} parent=1 // pred_fallthru
      _
    %v149 = vld [vmem:[%s0] sm:$0xff]
    %v150 = vld [vmem:[%s0 + $0x8] sm:$0xff]
    %v151 = vld [vmem:[%s0 + $0x10] sm:$0xff]
    %v152 = vld [vmem:[%s0 + $0x18] sm:$0xff]
    %v153 = vld [vmem:[%s0 + $0x20] sm:$0xff]
    %v154 = vld [vmem:[%s0 + $0x28] sm:$0xff]
    %v155 = vld [vmem:[%s0 + $0x30] sm:$0xff]
    %v156 = vld [vmem:[%s0 + $0x38] sm:$0xff]
    %v157 = vld [vmem:[%s0 + $0x40] sm:$0xff]
    %v158 = vld [vmem:[%s0 + $0x48] sm:$0xff]
    %v159 = vld [vmem:[%s0 + $0x50] sm:$0xff]
    %v160 = vld [vmem:[%s0 + $0x58] sm:$0xff]
    %v161 = vld [vmem:[%s0 + $0x60] sm:$0xff]
    %v162 = vld [vmem:[%s0 + $0x68] sm:$0xff]
    %v163 = vld [vmem:[%s0 + $0x70] sm:$0xff]
    %v164 = vld [vmem:[%s0 + $0x78] sm:$0xff]
    %v165 = vld [vmem:[%s0 + $0x80] sm:$0xff]
    %v166 = vld [vmem:[%s0 + $0x88] sm:$0xff]
    %v167 = vld [vmem:[%s0 + $0x90] sm:$0xff]
    %v168 = vld [vmem:[%s0 + $0x98] sm:$0xff]
    %v169 = vld [vmem:[%s0 + $0xa0] sm:$0xff]
    %v170 = vld [vmem:[%s0 + $0xa8] sm:$0xff]
    %v171 = vld [vmem:[%s0 + $0xb0] sm:$0xff]
    %v172 = vld [vmem:[%s0 + $0xb8] sm:$0xff]
    %v173 = vld [vmem:[%s0 + $0xc0] sm:$0xff]
    %v174 = vld [vmem:[%s0 + $0xc8] sm:$0xff]
    %v175 = vld [vmem:[#allocation2] sm:$0xff]
    %v176 = vld [vmem:[#allocation2 + $0x8] sm:$0xff]
    %v177 = vld [vmem:[#allocation2 + $0x10] sm:$0xff]
    %v178 = vld [vmem:[#allocation2 + $0x18] sm:$0xff]
    %v179 = vld [vmem:[#allocation2 + $0x20] sm:$0xff]
    %v180 = vld [vmem:[#allocation2 + $0x28] sm:$0xff]
    %v181 = vld [vmem:[#allocation2 + $0x30] sm:$0xff]
    %v182 = vld [vmem:[#allocation2 + $0x38] sm:$0xff]
    %v183 = vld [vmem:[#allocation2 + $0x40] sm:$0xff]
    %v184 = vld [vmem:[#allocation2 + $0x48] sm:$0xff]
    %v185 = vld [vmem:[#allocation2 + $0x50] sm:$0xff]
    %v186 = vld [vmem:[#allocation2 + $0x58] sm:$0xff]
    %v187 = vld [vmem:[#allocation2 + $0x60] sm:$0xff]
    %v188 = vld [vmem:[#allocation2 + $0x68] sm:$0xff]
    %v189 = vld [vmem:[#allocation2 + $0x70] sm:$0xff]
    %v190 = vld [vmem:[#allocation2 + $0x78] sm:$0xff]
    %v191 = vld [vmem:[#allocation2 + $0x80] sm:$0xff]
    %v192 = vld [vmem:[#allocation2 + $0x88] sm:$0xff]
    %v193 = vld [vmem:[#allocation2 + $0x90] sm:$0xff]
    %v194 = vld [vmem:[#allocation2 + $0x98] sm:$0xff]
    %v195 = vld [vmem:[#allocation2 + $0xa0] sm:$0xff]
    %v196 = vld [vmem:[#allocation2 + $0xa8] sm:$0xff]
    %v197 = vld [vmem:[#allocation2 + $0xb0] sm:$0xff]
    %v198 = vld [vmem:[#allocation2 + $0xb8] sm:$0xff]
    %v199 = vld [vmem:[#allocation2 + $0xc0] sm:$0xff]
    %v200 = vld [vmem:[#allocation2 + $0xc8] sm:$0xff]
    %v201 = vld [vmem:[#allocation2 + $0xd0] sm:$0xff]
    %v202 = vld [vmem:[#allocation2 + $0xd8] sm:$0xff]
    %v203 = vld [vmem:[#allocation2 + $0xe0] sm:$0xff]
    %v204 = vld [vmem:[#allocation2 + $0xe8] sm:$0xff]
    %v205 = vld [vmem:[#allocation2 + $0xf0] sm:$0xff]
    %v206 = vld [vmem:[#allocation2 + $0xf8] sm:$0xff]
    %v207 = vld [vmem:[#allocation2 + $0x100] sm:$0xff]
    %v208 = vld [vmem:[#allocation2 + $0x108] sm:$0xff]
    %v209 = vld [vmem:[#allocation2 + $0x110] sm:$0xff]
    %v210 = vld [vmem:[#allocation2 + $0x118] sm:$0xff]
    %v211 = vld [vmem:[#allocation2 + $0x120] sm:$0xff]
    %v212 = vld [vmem:[#allocation2 + $0x128] sm:$0xff]
    %v213 = vld [vmem:[#allocation2 + $0x130] sm:$0xff]
    %v214 = vld [vmem:[#allocation2 + $0x138] sm:$0xff]
    %v215 = vld [vmem:[#allocation2 + $0x140] sm:$0xff]
    %v216 = vld [vmem:[#allocation2 + $0x148] sm:$0xff]
    %v217 = vld [vmem:[#allocation2 + $0x150] sm:$0xff]
    %v218 = vld [vmem:[#allocation2 + $0x158] sm:$0xff]
    %v219 = vld [vmem:[#allocation2 + $0x160] sm:$0xff]
    %v220 = vld [vmem:[#allocation2 + $0x168] sm:$0xff]
    %v221 = vld [vmem:[#allocation2 + $0x170] sm:$0xff]
    %v222 = vld [vmem:[#allocation2 + $0x178] sm:$0xff]
    %v223 = vld [vmem:[#allocation2 + $0x180] sm:$0xff]
    %v224 = vld [vmem:[#allocation2 + $0x188] sm:$0xff]
    %v225 = vld [vmem:[#allocation2 + $0x190] sm:$0xff]
    %v226 = vld [vmem:[#allocation2 + $0x198] sm:$0xff]
    %v227 = vld [vmem:[#allocation2 + $0x1a0] sm:$0xff]
    %v228 = vld [vmem:[#allocation2 + $0x1a8] sm:$0xff]
    %v229 = vld [vmem:[#allocation2 + $0x1b0] sm:$0xff]
    %v230 = vld [vmem:[#allocation2 + $0x1b8] sm:$0xff]
    %v231 = vld [vmem:[#allocation2 + $0x1c0] sm:$0xff]
    %v232 = vld [vmem:[#allocation2 + $0x1c8] sm:$0xff]
    %v233 = vld [vmem:[#allocation2 + $0x1d0] sm:$0xff]
    %v234 = vld [vmem:[#allocation2 + $0x1d8] sm:$0xff]
    %v235 = vld [vmem:[#allocation2 + $0x1e0] sm:$0xff]
    %v236 = vld [vmem:[#allocation2 + $0x1e8] sm:$0xff]
    %v237 = vld [vmem:[#allocation2 + $0x1f0] sm:$0xff]
    %v238 = vld [vmem:[#allocation2 + $0x1f8] sm:$0xff]
    %239 = vmatpush.msra.mxu0 %v235
    %240 = vmatpush.msra.mxu0 %v231
    %241 = vmatpush.msra.mxu0 %v227
    %242 = vmatpush.msra.mxu0 %v223
    %243 = vmatpush.msra.mxu0 %v219
    %244 = vmatpush.msra.mxu0 %v215
    %245 = vmatpush.msra.mxu0 %v211
    %246 = vmatpush.msra.mxu0 %v207
    %247 = vmatpush.msra.mxu0 %v203
    %248 = vmatpush.msra.mxu0 %v199
    %249 = vmatpush.msra.mxu0 %v195
    %250 = vmatpush.msra.mxu0 %v191
    %251 = vmatpush.msra.mxu0 %v187
    %252 = vmatpush.msra.mxu0 %v183
    %253 = vmatpush.msra.mxu0 %v179
    %254 = vmatpush.msra.mxu0 %v175
    %255 = vmatmul.f32.gmra.mxu0 %v149
    %v256 = vpop.f32.mrf.mxu0
    %v257 = vadd.f32 0.0, %v256
    %258 = vmatmul.f32.gmra.mxu0 %v150
    %v259 = vpop.f32.mrf.mxu0
    %v260 = vadd.f32 0.0, %v259
    %261 = vmatmul.f32.gmra.mxu0 %v151
    %v262 = vpop.f32.mrf.mxu0
    %v263 = vadd.f32 0.0, %v262
    %264 = vmatmul.f32.gmra.mxu0 %v152
    %v265 = vpop.f32.mrf.mxu0
    %v266 = vadd.f32 0.0, %v265
    %267 = vmatmul.f32.gmra.mxu0 %v153
    %v268 = vpop.f32.mrf.mxu0
    %v269 = vadd.f32 0.0, %v268
    %270 = vmatmul.f32.gmra.mxu0 %v154
    %v271 = vpop.f32.mrf.mxu0
    %v272 = vadd.f32 0.0, %v271
    %273 = vmatmul.f32.gmra.mxu0 %v155
    %v274 = vpop.f32.mrf.mxu0
    %275 = vmatmul.f32.gmra.mxu0 %v156
    %v276 = vpop.f32.mrf.mxu0
    %v277 = vadd.f32 0.0, %v276
    %278 = vmatmul.f32.gmra.mxu0 %v157
    %v279 = vpop.f32.mrf.mxu0
    %v280 = vadd.f32 0.0, %v279
    %281 = vmatmul.f32.gmra.mxu0 %v158
    %v282 = vpop.f32.mrf.mxu0
    %v283 = vadd.f32 0.0, %v282
    %284 = vmatmul.f32.gmra.mxu0 %v159
    %v285 = vpop.f32.mrf.mxu0
    %v286 = vadd.f32 0.0, %v285
    %287 = vmatmul.f32.gmra.mxu0 %v160
    %v288 = vpop.f32.mrf.mxu0
    %v289 = vadd.f32 0.0, %v288
    %290 = vmatmul.f32.gmra.mxu0 %v161
    %v291 = vpop.f32.mrf.mxu0
    %v292 = vadd.f32 0.0, %v291
    %293 = vmatmul.f32.gmra.mxu0 %v162
    %v294 = vpop.f32.mrf.mxu0
    %295 = vmatmul.f32.gmra.mxu0 %v163
    %v296 = vpop.f32.mrf.mxu0
    %v297 = vadd.f32 0.0, %v296
    %298 = vmatmul.f32.gmra.mxu0 %v164
    %v299 = vpop.f32.mrf.mxu0
    %v300 = vadd.f32 0.0, %v299
    %301 = vmatmul.f32.gmra.mxu0 %v165
    %v302 = vpop.f32.mrf.mxu0
    %v303 = vadd.f32 0.0, %v302
    %304 = vmatmul.f32.gmra.mxu0 %v166
    %v305 = vpop.f32.mrf.mxu0
    %v306 = vadd.f32 0.0, %v305
    %307 = vmatmul.f32.gmra.mxu0 %v167
    %v308 = vpop.f32.mrf.mxu0
    %v309 = vadd.f32 0.0, %v308
    %310 = vmatmul.f32.gmra.mxu0 %v168
    %v311 = vpop.f32.mrf.mxu0
    %v312 = vadd.f32 0.0, %v311
    %313 = vmatmul.f32.gmra.mxu0 %v169
    %v314 = vpop.f32.mrf.mxu0
    %v315 = vadd.f32 0.0, %v314
    %316 = vmatmul.f32.gmra.mxu0 %v170
    %v317 = vpop.f32.mrf.mxu0
    %v318 = vadd.f32 0.0, %v317
    %319 = vmatmul.f32.gmra.mxu0 %v171
    %v320 = vpop.f32.mrf.mxu0
    %v321 = vadd.f32 0.0, %v320
    %322 = vmatmul.f32.gmra.mxu0 %v172
    %v323 = vpop.f32.mrf.mxu0
    %v324 = vadd.f32 0.0, %v323
    %325 = vmatmul.f32.gmra.mxu0 %v173
    %v326 = vpop.f32.mrf.mxu0
    %v327 = vadd.f32 0.0, %v326
    %328 = vmatmul.f32.gmra.mxu0 %v174
    %v329 = vpop.f32.mrf.mxu0
    %v330 = vadd.f32 0.0, %v329
    %331 = vdwg.mxu0
    %332 = vmatpush.msra.mxu0 %v236
    %333 = vmatpush.msra.mxu0 %v232
    %334 = vmatpush.msra.mxu0 %v228
    %335 = vmatpush.msra.mxu0 %v224
    %336 = vmatpush.msra.mxu0 %v220
    %337 = vmatpush.msra.mxu0 %v216
    %338 = vmatpush.msra.mxu0 %v212
    %339 = vmatpush.msra.mxu0 %v208
    %340 = vmatpush.msra.mxu0 %v204
    %341 = vmatpush.msra.mxu0 %v200
    %342 = vmatpush.msra.mxu0 %v196
    %343 = vmatpush.msra.mxu0 %v192
    %344 = vmatpush.msra.mxu0 %v188
    %345 = vmatpush.msra.mxu0 %v184
    %346 = vmatpush.msra.mxu0 %v180
    %347 = vmatpush.msra.mxu0 %v176
    %348 = vmatmul.f32.gmra.mxu0 %v149
    %v349 = vpop.f32.mrf.mxu0
    %v350 = vadd.f32 0.0, %v349
    %351 = vmatmul.f32.gmra.mxu0 %v150
    %v352 = vpop.f32.mrf.mxu0
    %v353 = vadd.f32 0.0, %v352
    %354 = vmatmul.f32.gmra.mxu0 %v151
    %v355 = vpop.f32.mrf.mxu0
    %v356 = vadd.f32 0.0, %v355
    %357 = vmatmul.f32.gmra.mxu0 %v152
    %v358 = vpop.f32.mrf.mxu0
    %v359 = vadd.f32 0.0, %v358
    %360 = vmatmul.f32.gmra.mxu0 %v153
    %v361 = vpop.f32.mrf.mxu0
    %v362 = vadd.f32 0.0, %v361
    %363 = vmatmul.f32.gmra.mxu0 %v154
    %v364 = vpop.f32.mrf.mxu0
    %v365 = vadd.f32 0.0, %v364
    %366 = vmatmul.f32.gmra.mxu0 %v155
    %v367 = vpop.f32.mrf.mxu0
    %368 = vmatmul.f32.gmra.mxu0 %v156
    %v369 = vpop.f32.mrf.mxu0
    %v370 = vadd.f32 0.0, %v369
    %371 = vmatmul.f32.gmra.mxu0 %v157
    %v372 = vpop.f32.mrf.mxu0
    %v373 = vadd.f32 0.0, %v372
    %374 = vmatmul.f32.gmra.mxu0 %v158
    %v375 = vpop.f32.mrf.mxu0
    %v376 = vadd.f32 0.0, %v375
    %377 = vmatmul.f32.gmra.mxu0 %v159
    %v378 = vpop.f32.mrf.mxu0
    %v379 = vadd.f32 0.0, %v378
    %380 = vmatmul.f32.gmra.mxu0 %v160
    %v381 = vpop.f32.mrf.mxu0
    %v382 = vadd.f32 0.0, %v381
    %383 = vmatmul.f32.gmra.mxu0 %v161
    %v384 = vpop.f32.mrf.mxu0
    %v385 = vadd.f32 0.0, %v384
    %386 = vmatmul.f32.gmra.mxu0 %v162
    %v387 = vpop.f32.mrf.mxu0
    %388 = vmatmul.f32.gmra.mxu0 %v163
    %v389 = vpop.f32.mrf.mxu0
    %v390 = vadd.f32 0.0, %v389
    %391 = vmatmul.f32.gmra.mxu0 %v164
    %v392 = vpop.f32.mrf.mxu0
    %v393 = vadd.f32 0.0, %v392
    %394 = vmatmul.f32.gmra.mxu0 %v165
    %v395 = vpop.f32.mrf.mxu0
    %v396 = vadd.f32 0.0, %v395
    %397 = vmatmul.f32.gmra.mxu0 %v166
    %v398 = vpop.f32.mrf.mxu0
    %v399 = vadd.f32 0.0, %v398
    %400 = vmatmul.f32.gmra.mxu0 %v167
    %v401 = vpop.f32.mrf.mxu0
    %v402 = vadd.f32 0.0, %v401
    %403 = vmatmul.f32.gmra.mxu0 %v168
    %v404 = vpop.f32.mrf.mxu0
    %v405 = vadd.f32 0.0, %v404
    %406 = vmatmul.f32.gmra.mxu0 %v169
    %v407 = vpop.f32.mrf.mxu0
    %v408 = vadd.f32 0.0, %v407
    %409 = vmatmul.f32.gmra.mxu0 %v170
    %v410 = vpop.f32.mrf.mxu0
    %v411 = vadd.f32 0.0, %v410
    %412 = vmatmul.f32.gmra.mxu0 %v171
    %v413 = vpop.f32.mrf.mxu0
    %v414 = vadd.f32 0.0, %v413
    %415 = vmatmul.f32.gmra.mxu0 %v172
    %v416 = vpop.f32.mrf.mxu0
    %v417 = vadd.f32 0.0, %v416
    %418 = vmatmul.f32.gmra.mxu0 %v173
    %v419 = vpop.f32.mrf.mxu0
    %v420 = vadd.f32 0.0, %v419
    %421 = vmatmul.f32.gmra.mxu0 %v174
    %v422 = vpop.f32.mrf.mxu0
    %v423 = vadd.f32 0.0, %v422
    %424 = vdwg.mxu0
    %425 = vmatpush.msra.mxu0 %v237
    %426 = vmatpush.msra.mxu0 %v233
    %427 = vmatpush.msra.mxu0 %v229
    %428 = vmatpush.msra.mxu0 %v225
    %429 = vmatpush.msra.mxu0 %v221
    %430 = vmatpush.msra.mxu0 %v217
    %431 = vmatpush.msra.mxu0 %v213
    %432 = vmatpush.msra.mxu0 %v209
    %433 = vmatpush.msra.mxu0 %v205
    %434 = vmatpush.msra.mxu0 %v201
    %435 = vmatpush.msra.mxu0 %v197
    %436 = vmatpush.msra.mxu0 %v193
    %437 = vmatpush.msra.mxu0 %v189
    %438 = vmatpush.msra.mxu0 %v185
    %439 = vmatpush.msra.mxu0 %v181
    %440 = vmatpush.msra.mxu0 %v177
    %441 = vmatmul.f32.gmra.mxu0 %v149
    %v442 = vpop.f32.mrf.mxu0
    %v443 = vadd.f32 0.0, %v442
    %444 = vmatmul.f32.gmra.mxu0 %v150
    %v445 = vpop.f32.mrf.mxu0
    %v446 = vadd.f32 0.0, %v445
    %447 = vmatmul.f32.gmra.mxu0 %v151
    %v448 = vpop.f32.mrf.mxu0
    %v449 = vadd.f32 0.0, %v448
    %450 = vmatmul.f32.gmra.mxu0 %v152
    %v451 = vpop.f32.mrf.mxu0
    %v452 = vadd.f32 0.0, %v451
    %453 = vmatmul.f32.gmra.mxu0 %v153
    %v454 = vpop.f32.mrf.mxu0
    %v455 = vadd.f32 0.0, %v454
    %456 = vmatmul.f32.gmra.mxu0 %v154
    %v457 = vpop.f32.mrf.mxu0
    %v458 = vadd.f32 0.0, %v457
    %459 = vmatmul.f32.gmra.mxu0 %v155
    %v460 = vpop.f32.mrf.mxu0
    %461 = vmatmul.f32.gmra.mxu0 %v156
    %v462 = vpop.f32.mrf.mxu0
    %v463 = vadd.f32 0.0, %v462
    %464 = vmatmul.f32.gmra.mxu0 %v157
    %v465 = vpop.f32.mrf.mxu0
    %v466 = vadd.f32 0.0, %v465
    %467 = vmatmul.f32.gmra.mxu0 %v158
    %v468 = vpop.f32.mrf.mxu0
    %v469 = vadd.f32 0.0, %v468
    %470 = vmatmul.f32.gmra.mxu0 %v159
    %v471 = vpop.f32.mrf.mxu0
    %v472 = vadd.f32 0.0, %v471
    %473 = vmatmul.f32.gmra.mxu0 %v160
    %v474 = vpop.f32.mrf.mxu0
    %v475 = vadd.f32 0.0, %v474
    %476 = vmatmul.f32.gmra.mxu0 %v161
    %v477 = vpop.f32.mrf.mxu0
    %v478 = vadd.f32 0.0, %v477
    %479 = vmatmul.f32.gmra.mxu0 %v162
    %v480 = vpop.f32.mrf.mxu0
    %481 = vmatmul.f32.gmra.mxu0 %v163
    %v482 = vpop.f32.mrf.mxu0
    %v483 = vadd.f32 0.0, %v482
    %484 = vmatmul.f32.gmra.mxu0 %v164
    %v485 = vpop.f32.mrf.mxu0
    %v486 = vadd.f32 0.0, %v485
    %487 = vmatmul.f32.gmra.mxu0 %v165
    %v488 = vpop.f32.mrf.mxu0
    %v489 = vadd.f32 0.0, %v488
    %490 = vmatmul.f32.gmra.mxu0 %v166
    %v491 = vpop.f32.mrf.mxu0
    %v492 = vadd.f32 0.0, %v491
    %493 = vmatmul.f32.gmra.mxu0 %v167
    %v494 = vpop.f32.mrf.mxu0
    %v495 = vadd.f32 0.0, %v494
    %496 = vmatmul.f32.gmra.mxu0 %v168
    %v497 = vpop.f32.mrf.mxu0
    %v498 = vadd.f32 0.0, %v497
    %499 = vmatmul.f32.gmra.mxu0 %v169
    %v500 = vpop.f32.mrf.mxu0
    %v501 = vadd.f32 0.0, %v500
    %502 = vmatmul.f32.gmra.mxu0 %v170
    %v503 = vpop.f32.mrf.mxu0
    %v504 = vadd.f32 0.0, %v503
    %505 = vmatmul.f32.gmra.mxu0 %v171
    %v506 = vpop.f32.mrf.mxu0
    %v507 = vadd.f32 0.0, %v506
    %508 = vmatmul.f32.gmra.mxu0 %v172
    %v509 = vpop.f32.mrf.mxu0
    %v510 = vadd.f32 0.0, %v509
    %511 = vmatmul.f32.gmra.mxu0 %v173
    %v512 = vpop.f32.mrf.mxu0
    %v513 = vadd.f32 0.0, %v512
    %514 = vmatmul.f32.gmra.mxu0 %v174
    %v515 = vpop.f32.mrf.mxu0
    %v516 = vadd.f32 0.0, %v515
    %517 = vdwg.mxu0
    %518 = vmatpush.msra.mxu0 %v238
    %519 = vmatpush.msra.mxu0 %v234
    %520 = vmatpush.msra.mxu0 %v230
    %521 = vmatpush.msra.mxu0 %v226
    %522 = vmatpush.msra.mxu0 %v222
    %523 = vmatpush.msra.mxu0 %v218
    %524 = vmatpush.msra.mxu0 %v214
    %525 = vmatpush.msra.mxu0 %v210
    %526 = vmatpush.msra.mxu0 %v206
    %527 = vmatpush.msra.mxu0 %v202
    %528 = vmatpush.msra.mxu0 %v198
    %529 = vmatpush.msra.mxu0 %v194
    %530 = vmatpush.msra.mxu0 %v190
    %531 = vmatpush.msra.mxu0 %v186
    %532 = vmatpush.msra.mxu0 %v182
    %533 = vmatpush.msra.mxu0 %v178
    %534 = vmatmul.f32.gmra.mxu0 %v149
    %v535 = vpop.f32.mrf.mxu0
    %v536 = vadd.f32 0.0, %v535
    %537 = vmatmul.f32.gmra.mxu0 %v150
    %v538 = vpop.f32.mrf.mxu0
    %v539 = vadd.f32 0.0, %v538
    %540 = vmatmul.f32.gmra.mxu0 %v151
    %v541 = vpop.f32.mrf.mxu0
    %v542 = vadd.f32 0.0, %v541
    %543 = vmatmul.f32.gmra.mxu0 %v152
    %v544 = vpop.f32.mrf.mxu0
    %v545 = vadd.f32 0.0, %v544
    %546 = vmatmul.f32.gmra.mxu0 %v153
    %v547 = vpop.f32.mrf.mxu0
    %v548 = vadd.f32 0.0, %v547
    %549 = vmatmul.f32.gmra.mxu0 %v154
    %v550 = vpop.f32.mrf.mxu0
    %v551 = vadd.f32 0.0, %v550
    %552 = vmatmul.f32.gmra.mxu0 %v155
    %v553 = vpop.f32.mrf.mxu0
    %554 = vmatmul.f32.gmra.mxu0 %v156
    %v555 = vpop.f32.mrf.mxu0
    %v556 = vadd.f32 0.0, %v555
    %557 = vmatmul.f32.gmra.mxu0 %v157
    %v558 = vpop.f32.mrf.mxu0
    %v559 = vadd.f32 0.0, %v558
    %560 = vmatmul.f32.gmra.mxu0 %v158
    %v561 = vpop.f32.mrf.mxu0
    %v562 = vadd.f32 0.0, %v561
    %563 = vmatmul.f32.gmra.mxu0 %v159
    %v564 = vpop.f32.mrf.mxu0
    %v565 = vadd.f32 0.0, %v564
    %566 = vmatmul.f32.gmra.mxu0 %v160
    %v567 = vpop.f32.mrf.mxu0
    %v568 = vadd.f32 0.0, %v567
    %569 = vmatmul.f32.gmra.mxu0 %v161
    %v570 = vpop.f32.mrf.mxu0
    %v571 = vadd.f32 0.0, %v570
    %572 = vmatmul.f32.gmra.mxu0 %v162
    %v573 = vpop.f32.mrf.mxu0
    %574 = vmatmul.f32.gmra.mxu0 %v163
    %v575 = vpop.f32.mrf.mxu0
    %v576 = vadd.f32 0.0, %v575
    %577 = vmatmul.f32.gmra.mxu0 %v164
    %v578 = vpop.f32.mrf.mxu0
    %v579 = vadd.f32 0.0, %v578
    %580 = vmatmul.f32.gmra.mxu0 %v165
    %v581 = vpop.f32.mrf.mxu0
    %v582 = vadd.f32 0.0, %v581
    %583 = vmatmul.f32.gmra.mxu0 %v166
    %v584 = vpop.f32.mrf.mxu0
    %v585 = vadd.f32 0.0, %v584
    %586 = vmatmul.f32.gmra.mxu0 %v167
    %v587 = vpop.f32.mrf.mxu0
    %v588 = vadd.f32 0.0, %v587
    %589 = vmatmul.f32.gmra.mxu0 %v168
    %v590 = vpop.f32.mrf.mxu0
    %v591 = vadd.f32 0.0, %v590
    %592 = vmatmul.f32.gmra.mxu0 %v169
    %v593 = vpop.f32.mrf.mxu0
    %v594 = vadd.f32 0.0, %v593
    %595 = vmatmul.f32.gmra.mxu0 %v170
    %v596 = vpop.f32.mrf.mxu0
    %v597 = vadd.f32 0.0, %v596
    %598 = vmatmul.f32.gmra.mxu0 %v171
    %v599 = vpop.f32.mrf.mxu0
    %v600 = vadd.f32 0.0, %v599
    %601 = vmatmul.f32.gmra.mxu0 %v172
    %v602 = vpop.f32.mrf.mxu0
    %v603 = vadd.f32 0.0, %v602
    %604 = vmatmul.f32.gmra.mxu0 %v173
    %v605 = vpop.f32.mrf.mxu0
    %v606 = vadd.f32 0.0, %v605
    %607 = vmatmul.f32.gmra.mxu0 %v174
    %v608 = vpop.f32.mrf.mxu0
    %v609 = vadd.f32 0.0, %v608
    %610 = vdwg.mxu0
    %v611 = vmax.f32 %v257, %v277
    %v612 = vmax.f32 %v350, %v370
    %v613 = vmax.f32 %v443, %v463
    %v614 = vmax.f32 %v536, %v556
    %v615 = vmax.f32 %v260, %v280
    %v616 = vmax.f32 %v353, %v373
    %v617 = vmax.f32 %v446, %v466
    %v618 = vmax.f32 %v539, %v559
    %v619 = vmax.f32 %v263, %v283
    %v620 = vmax.f32 %v356, %v376
    %v621 = vmax.f32 %v449, %v469
    %v622 = vmax.f32 %v542, %v562
    %v623 = vmax.f32 %v266, %v286
    %v624 = vmax.f32 %v359, %v379
    %v625 = vmax.f32 %v452, %v472
    %v626 = vmax.f32 %v545, %v565
    %v627 = vmax.f32 %v269, %v289
    %v628 = vmax.f32 %v362, %v382
    %v629 = vmax.f32 %v455, %v475
    %v630 = vmax.f32 %v548, %v568
    %v631 = vmax.f32 %v272, %v292
    %v632 = vmax.f32 %v365, %v385
    %v633 = vmax.f32 %v458, %v478
    %v634 = vmax.f32 %v551, %v571
    %v635 = vmax.f32 %v297, %v315
    %v636 = vmax.f32 %v390, %v408
    %v637 = vmax.f32 %v483, %v501
    %v638 = vmax.f32 %v576, %v594
    %v639 = vmax.f32 %v300, %v318
    %v640 = vmax.f32 %v393, %v411
    %v641 = vmax.f32 %v486, %v504
    %v642 = vmax.f32 %v579, %v597
    %v643 = vmax.f32 %v303, %v321
    %v644 = vmax.f32 %v396, %v414
    %v645 = vmax.f32 %v489, %v507
    %v646 = vmax.f32 %v582, %v600
    %v647 = vmax.f32 %v306, %v324
    %v648 = vmax.f32 %v399, %v417
    %v649 = vmax.f32 %v492, %v510
    %v650 = vmax.f32 %v585, %v603
    %v651 = vmax.f32 %v309, %v327
    %v652 = vmax.f32 %v402, %v420
    %v653 = vmax.f32 %v495, %v513
    %v654 = vmax.f32 %v588, %v606
    %v655 = vmax.f32 %v312, %v330
    %v656 = vmax.f32 %v405, %v423
    %v657 = vmax.f32 %v498, %v516
    %v658 = vmax.f32 %v591, %v609
    %v659 = vld [vmem:[#allocation4] sm:$0x3]
    %v660 = vmax.f32 %v611, %v613
    %v661 = vmax.f32 %v612, %v614
    %v662 = vmax.f32 %v615, %v617
    %v663 = vmax.f32 %v616, %v618
    %v664 = vmax.f32 %v619, %v621
    %v665 = vmax.f32 %v620, %v622
    %v666 = vmax.f32 %v623, %v625
    %v667 = vmax.f32 %v624, %v626
    %v668 = vmax.f32 %v627, %v629
    %v669 = vmax.f32 %v628, %v630
    %v670 = vmax.f32 %v631, %v633
    %v671 = vmax.f32 %v632, %v634
    %v673 = vperm.slane %v659, 0
    %v674 = vperm.slane %v659, 1
    %v677 = vadd.f32 %v660, %v673
    %v678 = vadd.f32 %v661, %v674
    %v679 = vadd.f32 %v662, %v673
    %v680 = vadd.f32 %v663, %v674
    %v681 = vadd.f32 %v664, %v673
    %v682 = vadd.f32 %v665, %v674
    %v683 = vadd.f32 %v666, %v673
    %v684 = vadd.f32 %v667, %v674
    %v685 = vadd.f32 %v668, %v673
    %v686 = vadd.f32 %v669, %v674
    %v687 = vadd.f32 %v670, %v673
    %v688 = vadd.f32 %v671, %v674
    %v689 = vmax.f32 %v677, 0.0
    %v690 = vmax.f32 %v678, 0.0
    %v691 = vmax.f32 %v679, 0.0
    %v692 = vmax.f32 %v680, 0.0
    %v693 = vmax.f32 %v681, 0.0
    %v694 = vmax.f32 %v682, 0.0
    %v695 = vmax.f32 %v683, 0.0
    %v696 = vmax.f32 %v684, 0.0
    %v697 = vmax.f32 %v685, 0.0
    %v698 = vmax.f32 %v686, 0.0
    %v699 = vmax.f32 %v687, 0.0
    %v700 = vmax.f32 %v688, 0.0
    %v701 = vmax.f32 %v635, %v637
    %v702 = vmax.f32 %v636, %v638
    %v703 = vmax.f32 %v639, %v641
    %v704 = vmax.f32 %v640, %v642
    %v705 = vmax.f32 %v643, %v645
    %v706 = vmax.f32 %v644, %v646
    %v707 = vmax.f32 %v647, %v649
    %v708 = vmax.f32 %v648, %v650
    %v709 = vmax.f32 %v651, %v653
    %v710 = vmax.f32 %v652, %v654
    %v711 = vmax.f32 %v655, %v657
    %v712 = vmax.f32 %v656, %v658
    %v713 = vadd.f32 %v701, %v673
    %v714 = vadd.f32 %v702, %v674
    %v715 = vadd.f32 %v703, %v673
    %v716 = vadd.f32 %v704, %v674
    %v717 = vadd.f32 %v705, %v673
    %v718 = vadd.f32 %v706, %v674
    %v719 = vadd.f32 %v707, %v673
    %v720 = vadd.f32 %v708, %v674
    %v721 = vadd.f32 %v709, %v673
    %v722 = vadd.f32 %v710, %v674
    %v723 = vadd.f32 %v711, %v673
    %v724 = vadd.f32 %v712, %v674
    %v725 = vmax.f32 %v713, 0.0
    %v726 = vmax.f32 %v714, 0.0
    %v727 = vmax.f32 %v715, 0.0
    %v728 = vmax.f32 %v716, 0.0
    %v729 = vmax.f32 %v717, 0.0
    %v730 = vmax.f32 %v718, 0.0
    %v731 = vmax.f32 %v719, 0.0
    %v732 = vmax.f32 %v720, 0.0
    %v733 = vmax.f32 %v721, 0.0
    %v734 = vmax.f32 %v722, 0.0
    %v735 = vmax.f32 %v723, 0.0
    %v736 = vmax.f32 %v724, 0.0
    %v737 = vld [vmem:[#allocation6] sm:$0xff]
    %v738 = vld [vmem:[#allocation6 + $0x8] sm:$0xff]
    %v739 = vld [vmem:[#allocation6 + $0x10] sm:$0xff]
    %v740 = vld [vmem:[#allocation6 + $0x18] sm:$0xff]
    %v741 = vld [vmem:[#allocation6 + $0x20] sm:$0xff]
    %v742 = vld [vmem:[#allocation6 + $0x28] sm:$0xff]
    %v743 = vld [vmem:[#allocation6 + $0x30] sm:$0xff]
    %v744 = vld [vmem:[#allocation6 + $0x38] sm:$0xff]
    %v745 = vld [vmem:[#allocation6 + $0x40] sm:$0xff]
    %v746 = vld [vmem:[#allocation6 + $0x48] sm:$0xff]
    %v747 = vld [vmem:[#allocation6 + $0x50] sm:$0xff]
    %v748 = vld [vmem:[#allocation6 + $0x58] sm:$0xff]
    %v749 = vld [vmem:[#allocation6 + $0x60] sm:$0xff]
    %v750 = vld [vmem:[#allocation6 + $0x68] sm:$0xff]
    %v751 = vld [vmem:[#allocation6 + $0x70] sm:$0xff]
    %v752 = vld [vmem:[#allocation6 + $0x78] sm:$0xff]
    %v753 = vld [vmem:[#allocation6 + $0x80] sm:$0xff]
    %v754 = vld [vmem:[#allocation6 + $0x88] sm:$0xff]
    %v755 = vld [vmem:[#allocation6 + $0x90] sm:$0xff]
    %v756 = vld [vmem:[#allocation6 + $0x98] sm:$0xff]
    %v757 = vld [vmem:[#allocation6 + $0xa0] sm:$0xff]
    %v758 = vld [vmem:[#allocation6 + $0xa8] sm:$0xff]
    %v759 = vld [vmem:[#allocation6 + $0xb0] sm:$0xff]
    %v760 = vld [vmem:[#allocation6 + $0xb8] sm:$0xff]
    %v761 = vld [vmem:[#allocation6 + $0xc0] sm:$0xff]
    %v762 = vld [vmem:[#allocation6 + $0xc8] sm:$0xff]
    %v763 = vld [vmem:[#allocation6 + $0xd0] sm:$0xff]
    %v764 = vld [vmem:[#allocation6 + $0xd8] sm:$0xff]
    %v765 = vld [vmem:[#allocation6 + $0xe0] sm:$0xff]
    %v766 = vld [vmem:[#allocation6 + $0xe8] sm:$0xff]
    %v767 = vld [vmem:[#allocation6 + $0xf0] sm:$0xff]
    %v768 = vld [vmem:[#allocation6 + $0xf8] sm:$0xff]
    %v769 = vld [vmem:[#allocation6 + $0x100] sm:$0xff]
    %v770 = vld [vmem:[#allocation6 + $0x108] sm:$0xff]
    %v771 = vld [vmem:[#allocation6 + $0x110] sm:$0xff]
    %v772 = vld [vmem:[#allocation6 + $0x118] sm:$0xff]
    %v773 = vld [vmem:[#allocation6 + $0x120] sm:$0xff]
    %v774 = vld [vmem:[#allocation6 + $0x128] sm:$0xff]
    %v775 = vld [vmem:[#allocation6 + $0x130] sm:$0xff]
    %v776 = vld [vmem:[#allocation6 + $0x138] sm:$0xff]
    %v777 = vld [vmem:[#allocation6 + $0x140] sm:$0xff]
    %v778 = vld [vmem:[#allocation6 + $0x148] sm:$0xff]
    %v779 = vld [vmem:[#allocation6 + $0x150] sm:$0xff]
    %v780 = vld [vmem:[#allocation6 + $0x158] sm:$0xff]
    %v781 = vld [vmem:[#allocation6 + $0x160] sm:$0xff]
    %v782 = vld [vmem:[#allocation6 + $0x168] sm:$0xff]
    %v783 = vld [vmem:[#allocation6 + $0x170] sm:$0xff]
    %v784 = vld [vmem:[#allocation6 + $0x178] sm:$0xff]
    %v785 = vld [vmem:[#allocation6 + $0x180] sm:$0xff]
    %v786 = vld [vmem:[#allocation6 + $0x188] sm:$0xff]
    %v787 = vld [vmem:[#allocation6 + $0x190] sm:$0xff]
    %v788 = vld [vmem:[#allocation6 + $0x198] sm:$0xff]
    %v789 = vld [vmem:[#allocation6 + $0x1a0] sm:$0xff]
    %v790 = vld [vmem:[#allocation6 + $0x1a8] sm:$0xff]
    %v791 = vld [vmem:[#allocation6 + $0x1b0] sm:$0xff]
    %v792 = vld [vmem:[#allocation6 + $0x1b8] sm:$0xff]
    %v793 = vld [vmem:[#allocation6 + $0x1c0] sm:$0xff]
    %v794 = vld [vmem:[#allocation6 + $0x1c8] sm:$0xff]
    %v795 = vld [vmem:[#allocation6 + $0x1d0] sm:$0xff]
    %v796 = vld [vmem:[#allocation6 + $0x1d8] sm:$0xff]
    %v797 = vld [vmem:[#allocation6 + $0x1e0] sm:$0xff]
    %v798 = vld [vmem:[#allocation6 + $0x1e8] sm:$0xff]
    %v799 = vld [vmem:[#allocation6 + $0x1f0] sm:$0xff]
    %v800 = vld [vmem:[#allocation6 + $0x1f8] sm:$0xff]
    %v801 = vld [vmem:[#allocation6 + $0x200] sm:$0xff]
    %v802 = vld [vmem:[#allocation6 + $0x208] sm:$0xff]
    %v803 = vld [vmem:[#allocation6 + $0x210] sm:$0xff]
    %v804 = vld [vmem:[#allocation6 + $0x218] sm:$0xff]
    %v805 = vld [vmem:[#allocation6 + $0x220] sm:$0xff]
    %v806 = vld [vmem:[#allocation6 + $0x228] sm:$0xff]
    %v807 = vld [vmem:[#allocation6 + $0x230] sm:$0xff]
    %v808 = vld [vmem:[#allocation6 + $0x238] sm:$0xff]
    %v809 = vld [vmem:[#allocation6 + $0x240] sm:$0xff]
    %v810 = vld [vmem:[#allocation6 + $0x248] sm:$0xff]
    %v811 = vld [vmem:[#allocation6 + $0x250] sm:$0xff]
    %v812 = vld [vmem:[#allocation6 + $0x258] sm:$0xff]
    %v813 = vld [vmem:[#allocation6 + $0x260] sm:$0xff]
    %v814 = vld [vmem:[#allocation6 + $0x268] sm:$0xff]
    %v815 = vld [vmem:[#allocation6 + $0x270] sm:$0xff]
    %v816 = vld [vmem:[#allocation6 + $0x278] sm:$0xff]
    %v817 = vld [vmem:[#allocation6 + $0x280] sm:$0xff]
    %v818 = vld [vmem:[#allocation6 + $0x288] sm:$0xff]
    %v819 = vld [vmem:[#allocation6 + $0x290] sm:$0xff]
    %v820 = vld [vmem:[#allocation6 + $0x298] sm:$0xff]
    %v821 = vld [vmem:[#allocation6 + $0x2a0] sm:$0xff]
    %v822 = vld [vmem:[#allocation6 + $0x2a8] sm:$0xff]
    %v823 = vld [vmem:[#allocation6 + $0x2b0] sm:$0xff]
    %v824 = vld [vmem:[#allocation6 + $0x2b8] sm:$0xff]
    %v825 = vld [vmem:[#allocation6 + $0x2c0] sm:$0xff]
    %v826 = vld [vmem:[#allocation6 + $0x2c8] sm:$0xff]
    %v827 = vld [vmem:[#allocation6 + $0x2d0] sm:$0xff]
    %v828 = vld [vmem:[#allocation6 + $0x2d8] sm:$0xff]
    %v829 = vld [vmem:[#allocation6 + $0x2e0] sm:$0xff]
    %v830 = vld [vmem:[#allocation6 + $0x2e8] sm:$0xff]
    %v831 = vld [vmem:[#allocation6 + $0x2f0] sm:$0xff]
    %v832 = vld [vmem:[#allocation6 + $0x2f8] sm:$0xff]
    %v833 = vld [vmem:[#allocation6 + $0x300] sm:$0xff]
    %v834 = vld [vmem:[#allocation6 + $0x308] sm:$0xff]
    %v835 = vld [vmem:[#allocation6 + $0x310] sm:$0xff]
    %v836 = vld [vmem:[#allocation6 + $0x318] sm:$0xff]
    %v837 = vld [vmem:[#allocation6 + $0x320] sm:$0xff]
    %v838 = vld [vmem:[#allocation6 + $0x328] sm:$0xff]
    %v839 = vld [vmem:[#allocation6 + $0x330] sm:$0xff]
    %v840 = vld [vmem:[#allocation6 + $0x338] sm:$0xff]
    %v841 = vld [vmem:[#allocation6 + $0x340] sm:$0xff]
    %v842 = vld [vmem:[#allocation6 + $0x348] sm:$0xff]
    %v843 = vld [vmem:[#allocation6 + $0x350] sm:$0xff]
    %v844 = vld [vmem:[#allocation6 + $0x358] sm:$0xff]
    %v845 = vld [vmem:[#allocation6 + $0x360] sm:$0xff]
    %v846 = vld [vmem:[#allocation6 + $0x368] sm:$0xff]
    %v847 = vld [vmem:[#allocation6 + $0x370] sm:$0xff]
    %v848 = vld [vmem:[#allocation6 + $0x378] sm:$0xff]
    %v849 = vld [vmem:[#allocation6 + $0x380] sm:$0xff]
    %v850 = vld [vmem:[#allocation6 + $0x388] sm:$0xff]
    %v851 = vld [vmem:[#allocation6 + $0x390] sm:$0xff]
    %v852 = vld [vmem:[#allocation6 + $0x398] sm:$0xff]
    %v853 = vld [vmem:[#allocation6 + $0x3a0] sm:$0xff]
    %v854 = vld [vmem:[#allocation6 + $0x3a8] sm:$0xff]
    %v855 = vld [vmem:[#allocation6 + $0x3b0] sm:$0xff]
    %v856 = vld [vmem:[#allocation6 + $0x3b8] sm:$0xff]
    %v857 = vld [vmem:[#allocation6 + $0x3c0] sm:$0xff]
    %v858 = vld [vmem:[#allocation6 + $0x3c8] sm:$0xff]
    %v859 = vld [vmem:[#allocation6 + $0x3d0] sm:$0xff]
    %v860 = vld [vmem:[#allocation6 + $0x3d8] sm:$0xff]
    %v861 = vld [vmem:[#allocation6 + $0x3e0] sm:$0xff]
    %v862 = vld [vmem:[#allocation6 + $0x3e8] sm:$0xff]
    %v863 = vld [vmem:[#allocation6 + $0x3f0] sm:$0xff]
    %v864 = vld [vmem:[#allocation6 + $0x3f8] sm:$0xff]
    %v865 = vld [vmem:[#allocation6 + $0x400] sm:$0xff]
    %v866 = vld [vmem:[#allocation6 + $0x408] sm:$0xff]
    %v867 = vld [vmem:[#allocation6 + $0x410] sm:$0xff]
    %v868 = vld [vmem:[#allocation6 + $0x418] sm:$0xff]
    %v869 = vld [vmem:[#allocation6 + $0x420] sm:$0xff]
    %v870 = vld [vmem:[#allocation6 + $0x428] sm:$0xff]
    %v871 = vld [vmem:[#allocation6 + $0x430] sm:$0xff]
    %v872 = vld [vmem:[#allocation6 + $0x438] sm:$0xff]
    %v873 = vld [vmem:[#allocation6 + $0x440] sm:$0xff]
    %v874 = vld [vmem:[#allocation6 + $0x448] sm:$0xff]
    %v875 = vld [vmem:[#allocation6 + $0x450] sm:$0xff]
    %v876 = vld [vmem:[#allocation6 + $0x458] sm:$0xff]
    %v877 = vld [vmem:[#allocation6 + $0x460] sm:$0xff]
    %v878 = vld [vmem:[#allocation6 + $0x468] sm:$0xff]
    %v879 = vld [vmem:[#allocation6 + $0x470] sm:$0xff]
    %v880 = vld [vmem:[#allocation6 + $0x478] sm:$0xff]
    %v881 = vld [vmem:[#allocation6 + $0x480] sm:$0xff]
    %v882 = vld [vmem:[#allocation6 + $0x488] sm:$0xff]
    %v883 = vld [vmem:[#allocation6 + $0x490] sm:$0xff]
    %v884 = vld [vmem:[#allocation6 + $0x498] sm:$0xff]
    %v885 = vld [vmem:[#allocation6 + $0x4a0] sm:$0xff]
    %v886 = vld [vmem:[#allocation6 + $0x4a8] sm:$0xff]
    %v887 = vld [vmem:[#allocation6 + $0x4b0] sm:$0xff]
    %v888 = vld [vmem:[#allocation6 + $0x4b8] sm:$0xff]
    %v889 = vld [vmem:[#allocation6 + $0x4c0] sm:$0xff]
    %v890 = vld [vmem:[#allocation6 + $0x4c8] sm:$0xff]
    %v891 = vld [vmem:[#allocation6 + $0x4d0] sm:$0xff]
    %v892 = vld [vmem:[#allocation6 + $0x4d8] sm:$0xff]
    %v893 = vld [vmem:[#allocation6 + $0x4e0] sm:$0xff]
    %v894 = vld [vmem:[#allocation6 + $0x4e8] sm:$0xff]
    %v895 = vld [vmem:[#allocation6 + $0x4f0] sm:$0xff]
    %v896 = vld [vmem:[#allocation6 + $0x4f8] sm:$0xff]
    %v897 = vld [vmem:[#allocation6 + $0x500] sm:$0xff]
    %v898 = vld [vmem:[#allocation6 + $0x508] sm:$0xff]
    %v899 = vld [vmem:[#allocation6 + $0x510] sm:$0xff]
    %v900 = vld [vmem:[#allocation6 + $0x518] sm:$0xff]
    %v901 = vld [vmem:[#allocation6 + $0x520] sm:$0xff]
    %v902 = vld [vmem:[#allocation6 + $0x528] sm:$0xff]
    %v903 = vld [vmem:[#allocation6 + $0x530] sm:$0xff]
    %v904 = vld [vmem:[#allocation6 + $0x538] sm:$0xff]
    %v905 = vld [vmem:[#allocation6 + $0x540] sm:$0xff]
    %v906 = vld [vmem:[#allocation6 + $0x548] sm:$0xff]
    %v907 = vld [vmem:[#allocation6 + $0x550] sm:$0xff]
    %v908 = vld [vmem:[#allocation6 + $0x558] sm:$0xff]
    %v909 = vld [vmem:[#allocation6 + $0x560] sm:$0xff]
    %v910 = vld [vmem:[#allocation6 + $0x568] sm:$0xff]
    %v911 = vld [vmem:[#allocation6 + $0x570] sm:$0xff]
    %v912 = vld [vmem:[#allocation6 + $0x578] sm:$0xff]
    %v913 = vld [vmem:[#allocation6 + $0x580] sm:$0xff]
    %v914 = vld [vmem:[#allocation6 + $0x588] sm:$0xff]
    %v915 = vld [vmem:[#allocation6 + $0x590] sm:$0xff]
    %v916 = vld [vmem:[#allocation6 + $0x598] sm:$0xff]
    %v917 = vld [vmem:[#allocation6 + $0x5a0] sm:$0xff]
    %v918 = vld [vmem:[#allocation6 + $0x5a8] sm:$0xff]
    %v919 = vld [vmem:[#allocation6 + $0x5b0] sm:$0xff]
    %v920 = vld [vmem:[#allocation6 + $0x5b8] sm:$0xff]
    %v921 = vld [vmem:[#allocation6 + $0x5c0] sm:$0xff]
    %v922 = vld [vmem:[#allocation6 + $0x5c8] sm:$0xff]
    %v923 = vld [vmem:[#allocation6 + $0x5d0] sm:$0xff]
    %v924 = vld [vmem:[#allocation6 + $0x5d8] sm:$0xff]
    %v925 = vld [vmem:[#allocation6 + $0x5e0] sm:$0xff]
    %v926 = vld [vmem:[#allocation6 + $0x5e8] sm:$0xff]
    %v927 = vld [vmem:[#allocation6 + $0x5f0] sm:$0xff]
    %v928 = vld [vmem:[#allocation6 + $0x5f8] sm:$0xff]
    %v929 = vld [vmem:[#allocation6 + $0x600] sm:$0xff]
    %v930 = vld [vmem:[#allocation6 + $0x608] sm:$0xff]
    %v931 = vld [vmem:[#allocation6 + $0x610] sm:$0xff]
    %v932 = vld [vmem:[#allocation6 + $0x618] sm:$0xff]
    %v933 = vld [vmem:[#allocation6 + $0x620] sm:$0xff]
    %v934 = vld [vmem:[#allocation6 + $0x628] sm:$0xff]
    %v935 = vld [vmem:[#allocation6 + $0x630] sm:$0xff]
    %v936 = vld [vmem:[#allocation6 + $0x638] sm:$0xff]
    %v937 = vld [vmem:[#allocation6 + $0x640] sm:$0xff]
    %v938 = vld [vmem:[#allocation6 + $0x648] sm:$0xff]
    %v939 = vld [vmem:[#allocation6 + $0x650] sm:$0xff]
    %v940 = vld [vmem:[#allocation6 + $0x658] sm:$0xff]
    %v941 = vld [vmem:[#allocation6 + $0x660] sm:$0xff]
    %v942 = vld [vmem:[#allocation6 + $0x668] sm:$0xff]
    %v943 = vld [vmem:[#allocation6 + $0x670] sm:$0xff]
    %v944 = vld [vmem:[#allocation6 + $0x678] sm:$0xff]
    %v945 = vld [vmem:[#allocation6 + $0x680] sm:$0xff]
    %v946 = vld [vmem:[#allocation6 + $0x688] sm:$0xff]
    %v947 = vld [vmem:[#allocation6 + $0x690] sm:$0xff]
    %v948 = vld [vmem:[#allocation6 + $0x698] sm:$0xff]
    %v949 = vld [vmem:[#allocation6 + $0x6a0] sm:$0xff]
    %v950 = vld [vmem:[#allocation6 + $0x6a8] sm:$0xff]
    %v951 = vld [vmem:[#allocation6 + $0x6b0] sm:$0xff]
    %v952 = vld [vmem:[#allocation6 + $0x6b8] sm:$0xff]
    %v953 = vld [vmem:[#allocation6 + $0x6c0] sm:$0xff]
    %v954 = vld [vmem:[#allocation6 + $0x6c8] sm:$0xff]
    %v955 = vld [vmem:[#allocation6 + $0x6d0] sm:$0xff]
    %v956 = vld [vmem:[#allocation6 + $0x6d8] sm:$0xff]
    %v957 = vld [vmem:[#allocation6 + $0x6e0] sm:$0xff]
    %v958 = vld [vmem:[#allocation6 + $0x6e8] sm:$0xff]
    %v959 = vld [vmem:[#allocation6 + $0x6f0] sm:$0xff]
    %v960 = vld [vmem:[#allocation6 + $0x6f8] sm:$0xff]
    %v961 = vld [vmem:[#allocation6 + $0x700] sm:$0xff]
    %v962 = vld [vmem:[#allocation6 + $0x708] sm:$0xff]
    %v963 = vld [vmem:[#allocation6 + $0x710] sm:$0xff]
    %v964 = vld [vmem:[#allocation6 + $0x718] sm:$0xff]
    %v965 = vld [vmem:[#allocation6 + $0x720] sm:$0xff]
    %v966 = vld [vmem:[#allocation6 + $0x728] sm:$0xff]
    %v967 = vld [vmem:[#allocation6 + $0x730] sm:$0xff]
    %v968 = vld [vmem:[#allocation6 + $0x738] sm:$0xff]
    %v969 = vld [vmem:[#allocation6 + $0x740] sm:$0xff]
    %v970 = vld [vmem:[#allocation6 + $0x748] sm:$0xff]
    %v971 = vld [vmem:[#allocation6 + $0x750] sm:$0xff]
    %v972 = vld [vmem:[#allocation6 + $0x758] sm:$0xff]
    %v973 = vld [vmem:[#allocation6 + $0x760] sm:$0xff]
    %v974 = vld [vmem:[#allocation6 + $0x768] sm:$0xff]
    %v975 = vld [vmem:[#allocation6 + $0x770] sm:$0xff]
    %v976 = vld [vmem:[#allocation6 + $0x778] sm:$0xff]
    %v977 = vld [vmem:[#allocation6 + $0x780] sm:$0xff]
    %v978 = vld [vmem:[#allocation6 + $0x788] sm:$0xff]
    %v979 = vld [vmem:[#allocation6 + $0x790] sm:$0xff]
    %v980 = vld [vmem:[#allocation6 + $0x798] sm:$0xff]
    %v981 = vld [vmem:[#allocation6 + $0x7a0] sm:$0xff]
    %v982 = vld [vmem:[#allocation6 + $0x7a8] sm:$0xff]
    %v983 = vld [vmem:[#allocation6 + $0x7b0] sm:$0xff]
    %v984 = vld [vmem:[#allocation6 + $0x7b8] sm:$0xff]
    %v985 = vld [vmem:[#allocation6 + $0x7c0] sm:$0xff]
    %v986 = vld [vmem:[#allocation6 + $0x7c8] sm:$0xff]
    %v987 = vld [vmem:[#allocation6 + $0x7d0] sm:$0xff]
    %v988 = vld [vmem:[#allocation6 + $0x7d8] sm:$0xff]
    %v989 = vld [vmem:[#allocation6 + $0x7e0] sm:$0xff]
    %v990 = vld [vmem:[#allocation6 + $0x7e8] sm:$0xff]
    %v991 = vld [vmem:[#allocation6 + $0x7f0] sm:$0xff]
    %v992 = vld [vmem:[#allocation6 + $0x7f8] sm:$0xff]
    %v993 = vld [vmem:[#allocation6 + $0x800] sm:$0xff]
    %v994 = vld [vmem:[#allocation6 + $0x808] sm:$0xff]
    %v995 = vld [vmem:[#allocation6 + $0x810] sm:$0xff]
    %v996 = vld [vmem:[#allocation6 + $0x818] sm:$0xff]
    %v997 = vld [vmem:[#allocation6 + $0x820] sm:$0xff]
    %v998 = vld [vmem:[#allocation6 + $0x828] sm:$0xff]
    %v999 = vld [vmem:[#allocation6 + $0x830] sm:$0xff]
    %v1000 = vld [vmem:[#allocation6 + $0x838] sm:$0xff]
    %v1001 = vld [vmem:[#allocation6 + $0x840] sm:$0xff]
    %v1002 = vld [vmem:[#allocation6 + $0x848] sm:$0xff]
    %v1003 = vld [vmem:[#allocation6 + $0x850] sm:$0xff]
    %v1004 = vld [vmem:[#allocation6 + $0x858] sm:$0xff]
    %v1005 = vld [vmem:[#allocation6 + $0x860] sm:$0xff]
    %v1006 = vld [vmem:[#allocation6 + $0x868] sm:$0xff]
    %v1007 = vld [vmem:[#allocation6 + $0x870] sm:$0xff]
    %v1008 = vld [vmem:[#allocation6 + $0x878] sm:$0xff]
    %v1009 = vld [vmem:[#allocation6 + $0x880] sm:$0xff]
    %v1010 = vld [vmem:[#allocation6 + $0x888] sm:$0xff]
    %v1011 = vld [vmem:[#allocation6 + $0x890] sm:$0xff]
    %v1012 = vld [vmem:[#allocation6 + $0x898] sm:$0xff]
    %v1013 = vld [vmem:[#allocation6 + $0x8a0] sm:$0xff]
    %v1014 = vld [vmem:[#allocation6 + $0x8a8] sm:$0xff]
    %v1015 = vld [vmem:[#allocation6 + $0x8b0] sm:$0xff]
    %v1016 = vld [vmem:[#allocation6 + $0x8b8] sm:$0xff]
    %v1017 = vld [vmem:[#allocation6 + $0x8c0] sm:$0xff]
    %v1018 = vld [vmem:[#allocation6 + $0x8c8] sm:$0xff]
    %v1019 = vld [vmem:[#allocation6 + $0x8d0] sm:$0xff]
    %v1020 = vld [vmem:[#allocation6 + $0x8d8] sm:$0xff]
    %v1021 = vld [vmem:[#allocation6 + $0x8e0] sm:$0xff]
    %v1022 = vld [vmem:[#allocation6 + $0x8e8] sm:$0xff]
    %v1023 = vld [vmem:[#allocation6 + $0x8f0] sm:$0xff]
    %v1024 = vld [vmem:[#allocation6 + $0x8f8] sm:$0xff]
    %v1025 = vld [vmem:[#allocation6 + $0x900] sm:$0xff]
    %v1026 = vld [vmem:[#allocation6 + $0x908] sm:$0xff]
    %v1027 = vld [vmem:[#allocation6 + $0x910] sm:$0xff]
    %v1028 = vld [vmem:[#allocation6 + $0x918] sm:$0xff]
    %v1029 = vld [vmem:[#allocation6 + $0x920] sm:$0xff]
    %v1030 = vld [vmem:[#allocation6 + $0x928] sm:$0xff]
    %v1031 = vld [vmem:[#allocation6 + $0x930] sm:$0xff]
    %v1032 = vld [vmem:[#allocation6 + $0x938] sm:$0xff]
    %v1033 = vld [vmem:[#allocation6 + $0x940] sm:$0xff]
    %v1034 = vld [vmem:[#allocation6 + $0x948] sm:$0xff]
    %v1035 = vld [vmem:[#allocation6 + $0x950] sm:$0xff]
    %v1036 = vld [vmem:[#allocation6 + $0x958] sm:$0xff]
    %v1037 = vld [vmem:[#allocation6 + $0x960] sm:$0xff]
    %v1038 = vld [vmem:[#allocation6 + $0x968] sm:$0xff]
    %v1039 = vld [vmem:[#allocation6 + $0x970] sm:$0xff]
    %v1040 = vld [vmem:[#allocation6 + $0x978] sm:$0xff]
    %v1041 = vld [vmem:[#allocation6 + $0x980] sm:$0xff]
    %v1042 = vld [vmem:[#allocation6 + $0x988] sm:$0xff]
    %v1043 = vld [vmem:[#allocation6 + $0x990] sm:$0xff]
    %v1044 = vld [vmem:[#allocation6 + $0x998] sm:$0xff]
    %v1045 = vld [vmem:[#allocation6 + $0x9a0] sm:$0xff]
    %v1046 = vld [vmem:[#allocation6 + $0x9a8] sm:$0xff]
    %v1047 = vld [vmem:[#allocation6 + $0x9b0] sm:$0xff]
    %v1048 = vld [vmem:[#allocation6 + $0x9b8] sm:$0xff]
    %v1049 = vld [vmem:[#allocation6 + $0x9c0] sm:$0xff]
    %v1050 = vld [vmem:[#allocation6 + $0x9c8] sm:$0xff]
    %v1051 = vld [vmem:[#allocation6 + $0x9d0] sm:$0xff]
    %v1052 = vld [vmem:[#allocation6 + $0x9d8] sm:$0xff]
    %v1053 = vld [vmem:[#allocation6 + $0x9e0] sm:$0xff]
    %v1054 = vld [vmem:[#allocation6 + $0x9e8] sm:$0xff]
    %v1055 = vld [vmem:[#allocation6 + $0x9f0] sm:$0xff]
    %v1056 = vld [vmem:[#allocation6 + $0x9f8] sm:$0xff]
    %v1057 = vld [vmem:[#allocation6 + $0xa00] sm:$0xff]
    %v1058 = vld [vmem:[#allocation6 + $0xa08] sm:$0xff]
    %v1059 = vld [vmem:[#allocation6 + $0xa10] sm:$0xff]
    %v1060 = vld [vmem:[#allocation6 + $0xa18] sm:$0xff]
    %v1061 = vld [vmem:[#allocation6 + $0xa20] sm:$0xff]
    %v1062 = vld [vmem:[#allocation6 + $0xa28] sm:$0xff]
    %v1063 = vld [vmem:[#allocation6 + $0xa30] sm:$0xff]
    %v1064 = vld [vmem:[#allocation6 + $0xa38] sm:$0xff]
    %v1065 = vld [vmem:[#allocation6 + $0xa40] sm:$0xff]
    %v1066 = vld [vmem:[#allocation6 + $0xa48] sm:$0xff]
    %v1067 = vld [vmem:[#allocation6 + $0xa50] sm:$0xff]
    %v1068 = vld [vmem:[#allocation6 + $0xa58] sm:$0xff]
    %v1069 = vld [vmem:[#allocation6 + $0xa60] sm:$0xff]
    %v1070 = vld [vmem:[#allocation6 + $0xa68] sm:$0xff]
    %v1071 = vld [vmem:[#allocation6 + $0xa70] sm:$0xff]
    %v1072 = vld [vmem:[#allocation6 + $0xa78] sm:$0xff]
    %v1073 = vld [vmem:[#allocation6 + $0xa80] sm:$0xff]
    %v1074 = vld [vmem:[#allocation6 + $0xa88] sm:$0xff]
    %v1075 = vld [vmem:[#allocation6 + $0xa90] sm:$0xff]
    %v1076 = vld [vmem:[#allocation6 + $0xa98] sm:$0xff]
    %v1077 = vld [vmem:[#allocation6 + $0xaa0] sm:$0xff]
    %v1078 = vld [vmem:[#allocation6 + $0xaa8] sm:$0xff]
    %v1079 = vld [vmem:[#allocation6 + $0xab0] sm:$0xff]
    %v1080 = vld [vmem:[#allocation6 + $0xab8] sm:$0xff]
    %v1081 = vld [vmem:[#allocation6 + $0xac0] sm:$0xff]
    %v1082 = vld [vmem:[#allocation6 + $0xac8] sm:$0xff]
    %v1083 = vld [vmem:[#allocation6 + $0xad0] sm:$0xff]
    %v1084 = vld [vmem:[#allocation6 + $0xad8] sm:$0xff]
    %v1085 = vld [vmem:[#allocation6 + $0xae0] sm:$0xff]
    %v1086 = vld [vmem:[#allocation6 + $0xae8] sm:$0xff]
    %v1087 = vld [vmem:[#allocation6 + $0xaf0] sm:$0xff]
    %v1088 = vld [vmem:[#allocation6 + $0xaf8] sm:$0xff]
    %v1089 = vld [vmem:[#allocation6 + $0xb00] sm:$0xff]
    %v1090 = vld [vmem:[#allocation6 + $0xb08] sm:$0xff]
    %v1091 = vld [vmem:[#allocation6 + $0xb10] sm:$0xff]
    %v1092 = vld [vmem:[#allocation6 + $0xb18] sm:$0xff]
    %v1093 = vld [vmem:[#allocation6 + $0xb20] sm:$0xff]
    %v1094 = vld [vmem:[#allocation6 + $0xb28] sm:$0xff]
    %v1095 = vld [vmem:[#allocation6 + $0xb30] sm:$0xff]
    %v1096 = vld [vmem:[#allocation6 + $0xb38] sm:$0xff]
    %v1097 = vld [vmem:[#allocation6 + $0xb40] sm:$0xff]
    %v1098 = vld [vmem:[#allocation6 + $0xb48] sm:$0xff]
    %v1099 = vld [vmem:[#allocation6 + $0xb50] sm:$0xff]
    %v1100 = vld [vmem:[#allocation6 + $0xb58] sm:$0xff]
    %v1101 = vld [vmem:[#allocation6 + $0xb60] sm:$0xff]
    %v1102 = vld [vmem:[#allocation6 + $0xb68] sm:$0xff]
    %v1103 = vld [vmem:[#allocation6 + $0xb70] sm:$0xff]
    %v1104 = vld [vmem:[#allocation6 + $0xb78] sm:$0xff]
    %v1105 = vld [vmem:[#allocation6 + $0xb80] sm:$0xff]
    %v1106 = vld [vmem:[#allocation6 + $0xb88] sm:$0xff]
    %v1107 = vld [vmem:[#allocation6 + $0xb90] sm:$0xff]
    %v1108 = vld [vmem:[#allocation6 + $0xb98] sm:$0xff]
    %v1109 = vld [vmem:[#allocation6 + $0xba0] sm:$0xff]
    %v1110 = vld [vmem:[#allocation6 + $0xba8] sm:$0xff]
    %v1111 = vld [vmem:[#allocation6 + $0xbb0] sm:$0xff]
    %v1112 = vld [vmem:[#allocation6 + $0xbb8] sm:$0xff]
    %v1113 = vld [vmem:[#allocation6 + $0xbc0] sm:$0xff]
    %v1114 = vld [vmem:[#allocation6 + $0xbc8] sm:$0xff]
    %v1115 = vld [vmem:[#allocation6 + $0xbd0] sm:$0xff]
    %v1116 = vld [vmem:[#allocation6 + $0xbd8] sm:$0xff]
    %v1117 = vld [vmem:[#allocation6 + $0xbe0] sm:$0xff]
    %v1118 = vld [vmem:[#allocation6 + $0xbe8] sm:$0xff]
    %v1119 = vld [vmem:[#allocation6 + $0xbf0] sm:$0xff]
    %v1120 = vld [vmem:[#allocation6 + $0xbf8] sm:$0xff]
    %1121 = vmatpush.msra.mxu0 %v797
    %1122 = vmatpush.msra.mxu0 %v793
    %1123 = vmatpush.msra.mxu0 %v789
    %1124 = vmatpush.msra.mxu0 %v785
    %1125 = vmatpush.msra.mxu0 %v781
    %1126 = vmatpush.msra.mxu0 %v777
    %1127 = vmatpush.msra.mxu0 %v773
    %1128 = vmatpush.msra.mxu0 %v769
    %1129 = vmatpush.msra.mxu0 %v765
    %1130 = vmatpush.msra.mxu0 %v761
    %1131 = vmatpush.msra.mxu0 %v757
    %1132 = vmatpush.msra.mxu0 %v753
    %1133 = vmatpush.msra.mxu0 %v749
    %1134 = vmatpush.msra.mxu0 %v745
    %1135 = vmatpush.msra.mxu0 %v741
    %1136 = vmatpush.msra.mxu0 %v737
    %1137 = vmatmul.f32.gmra.mxu0 %v689
    %v1138 = vpop.f32.mrf.mxu0
    %v1139 = vadd.f32 0.0, %v1138
    %1140 = vmatmul.f32.gmra.mxu0 %v691
    %v1141 = vpop.f32.mrf.mxu0
    %v1142 = vadd.f32 0.0, %v1141
    %1143 = vmatmul.f32.gmra.mxu0 %v693
    %v1144 = vpop.f32.mrf.mxu0
    %v1145 = vadd.f32 0.0, %v1144
    %1146 = vmatmul.f32.gmra.mxu0 %v695
    %v1147 = vpop.f32.mrf.mxu0
    %v1148 = vadd.f32 0.0, %v1147
    %1149 = vmatmul.f32.gmra.mxu0 %v697
    %v1150 = vpop.f32.mrf.mxu0
    %v1151 = vadd.f32 0.0, %v1150
    %1152 = vmatmul.f32.gmra.mxu0 %v725
    %v1153 = vpop.f32.mrf.mxu0
    %v1154 = vadd.f32 0.0, %v1153
    %1155 = vmatmul.f32.gmra.mxu0 %v727
    %v1156 = vpop.f32.mrf.mxu0
    %v1157 = vadd.f32 0.0, %v1156
    %1158 = vmatmul.f32.gmra.mxu0 %v729
    %v1159 = vpop.f32.mrf.mxu0
    %v1160 = vadd.f32 0.0, %v1159
    %1161 = vmatmul.f32.gmra.mxu0 %v731
    %v1162 = vpop.f32.mrf.mxu0
    %v1163 = vadd.f32 0.0, %v1162
    %1164 = vmatmul.f32.gmra.mxu0 %v733
    %v1165 = vpop.f32.mrf.mxu0
    %v1166 = vadd.f32 0.0, %v1165
    %1167 = vdwg.mxu0
    %1168 = vmatpush.msra.mxu0 %v861
    %1169 = vmatpush.msra.mxu0 %v857
    %1170 = vmatpush.msra.mxu0 %v853
    %1171 = vmatpush.msra.mxu0 %v849
    %1172 = vmatpush.msra.mxu0 %v845
    %1173 = vmatpush.msra.mxu0 %v841
    %1174 = vmatpush.msra.mxu0 %v837
    %1175 = vmatpush.msra.mxu0 %v833
    %1176 = vmatpush.msra.mxu0 %v829
    %1177 = vmatpush.msra.mxu0 %v825
    %1178 = vmatpush.msra.mxu0 %v821
    %1179 = vmatpush.msra.mxu0 %v817
    %1180 = vmatpush.msra.mxu0 %v813
    %1181 = vmatpush.msra.mxu0 %v809
    %1182 = vmatpush.msra.mxu0 %v805
    %1183 = vmatpush.msra.mxu0 %v801
    %1184 = vmatmul.f32.gmra.mxu0 %v690
    %v1185 = vpop.f32.mrf.mxu0
    %v1186 = vadd.f32 %v1139, %v1185
    %1187 = vmatmul.f32.gmra.mxu0 %v692
    %v1188 = vpop.f32.mrf.mxu0
    %v1189 = vadd.f32 %v1142, %v1188
    %1190 = vmatmul.f32.gmra.mxu0 %v694
    %v1191 = vpop.f32.mrf.mxu0
    %v1192 = vadd.f32 %v1145, %v1191
    %1193 = vmatmul.f32.gmra.mxu0 %v696
    %v1194 = vpop.f32.mrf.mxu0
    %v1195 = vadd.f32 %v1148, %v1194
    %1196 = vmatmul.f32.gmra.mxu0 %v698
    %v1197 = vpop.f32.mrf.mxu0
    %v1198 = vadd.f32 %v1151, %v1197
    %1199 = vmatmul.f32.gmra.mxu0 %v726
    %v1200 = vpop.f32.mrf.mxu0
    %v1201 = vadd.f32 %v1154, %v1200
    %1202 = vmatmul.f32.gmra.mxu0 %v728
    %v1203 = vpop.f32.mrf.mxu0
    %v1204 = vadd.f32 %v1157, %v1203
    %1205 = vmatmul.f32.gmra.mxu0 %v730
    %v1206 = vpop.f32.mrf.mxu0
    %v1207 = vadd.f32 %v1160, %v1206
    %1208 = vmatmul.f32.gmra.mxu0 %v732
    %v1209 = vpop.f32.mrf.mxu0
    %v1210 = vadd.f32 %v1163, %v1209
    %1211 = vmatmul.f32.gmra.mxu0 %v734
    %v1212 = vpop.f32.mrf.mxu0
    %v1213 = vadd.f32 %v1166, %v1212
    %1214 = vdwg.mxu0
    %1215 = vmatpush.msra.mxu0 %v925
    %1216 = vmatpush.msra.mxu0 %v921
    %1217 = vmatpush.msra.mxu0 %v917
    %1218 = vmatpush.msra.mxu0 %v913
    %1219 = vmatpush.msra.mxu0 %v909
    %1220 = vmatpush.msra.mxu0 %v905
    %1221 = vmatpush.msra.mxu0 %v901
    %1222 = vmatpush.msra.mxu0 %v897
    %1223 = vmatpush.msra.mxu0 %v893
    %1224 = vmatpush.msra.mxu0 %v889
    %1225 = vmatpush.msra.mxu0 %v885
    %1226 = vmatpush.msra.mxu0 %v881
    %1227 = vmatpush.msra.mxu0 %v877
    %1228 = vmatpush.msra.mxu0 %v873
    %1229 = vmatpush.msra.mxu0 %v869
    %1230 = vmatpush.msra.mxu0 %v865
    %1231 = vmatmul.f32.gmra.mxu0 %v725
    %v1232 = vpop.f32.mrf.mxu0
    %v1233 = vadd.f32 %v1186, %v1232
    %1234 = vmatmul.f32.gmra.mxu0 %v727
    %v1235 = vpop.f32.mrf.mxu0
    %v1236 = vadd.f32 %v1189, %v1235
    %1237 = vmatmul.f32.gmra.mxu0 %v729
    %v1238 = vpop.f32.mrf.mxu0
    %v1239 = vadd.f32 %v1192, %v1238
    %1240 = vmatmul.f32.gmra.mxu0 %v731
    %v1241 = vpop.f32.mrf.mxu0
    %v1242 = vadd.f32 %v1195, %v1241
    %1243 = vmatmul.f32.gmra.mxu0 %v733
    %v1244 = vpop.f32.mrf.mxu0
    %v1245 = vadd.f32 %v1198, %v1244
    %1246 = vmatmul.f32.gmra.mxu0 %v691
    %v1247 = vpop.f32.mrf.mxu0
    %v1248 = vadd.f32 %v1201, %v1247
    %1249 = vmatmul.f32.gmra.mxu0 %v693
    %v1250 = vpop.f32.mrf.mxu0
    %v1251 = vadd.f32 %v1204, %v1250
    %1252 = vmatmul.f32.gmra.mxu0 %v695
    %v1253 = vpop.f32.mrf.mxu0
    %v1254 = vadd.f32 %v1207, %v1253
    %1255 = vmatmul.f32.gmra.mxu0 %v697
    %v1256 = vpop.f32.mrf.mxu0
    %v1257 = vadd.f32 %v1210, %v1256
    %1258 = vmatmul.f32.gmra.mxu0 %v699
    %v1259 = vpop.f32.mrf.mxu0
    %v1260 = vadd.f32 %v1213, %v1259
    %1261 = vdwg.mxu0
    %1262 = vmatpush.msra.mxu0 %v989
    %1263 = vmatpush.msra.mxu0 %v985
    %1264 = vmatpush.msra.mxu0 %v981
    %1265 = vmatpush.msra.mxu0 %v977
    %1266 = vmatpush.msra.mxu0 %v973
    %1267 = vmatpush.msra.mxu0 %v969
    %1268 = vmatpush.msra.mxu0 %v965
    %1269 = vmatpush.msra.mxu0 %v961
    %1270 = vmatpush.msra.mxu0 %v957
    %1271 = vmatpush.msra.mxu0 %v953
    %1272 = vmatpush.msra.mxu0 %v949
    %1273 = vmatpush.msra.mxu0 %v945
    %1274 = vmatpush.msra.mxu0 %v941
    %1275 = vmatpush.msra.mxu0 %v937
    %1276 = vmatpush.msra.mxu0 %v933
    %1277 = vmatpush.msra.mxu0 %v929
    %1278 = vmatmul.f32.gmra.mxu0 %v726
    %v1279 = vpop.f32.mrf.mxu0
    %v1280 = vadd.f32 %v1233, %v1279
    %1281 = vmatmul.f32.gmra.mxu0 %v728
    %v1282 = vpop.f32.mrf.mxu0
    %v1283 = vadd.f32 %v1236, %v1282
    %1284 = vmatmul.f32.gmra.mxu0 %v730
    %v1285 = vpop.f32.mrf.mxu0
    %v1286 = vadd.f32 %v1239, %v1285
    %1287 = vmatmul.f32.gmra.mxu0 %v732
    %v1288 = vpop.f32.mrf.mxu0
    %v1289 = vadd.f32 %v1242, %v1288
    %1290 = vmatmul.f32.gmra.mxu0 %v734
    %v1291 = vpop.f32.mrf.mxu0
    %v1292 = vadd.f32 %v1245, %v1291
    %1293 = vmatmul.f32.gmra.mxu0 %v692
    %v1294 = vpop.f32.mrf.mxu0
    %v1295 = vadd.f32 %v1248, %v1294
    %1296 = vmatmul.f32.gmra.mxu0 %v694
    %v1297 = vpop.f32.mrf.mxu0
    %v1298 = vadd.f32 %v1251, %v1297
    %1299 = vmatmul.f32.gmra.mxu0 %v696
    %v1300 = vpop.f32.mrf.mxu0
    %v1301 = vadd.f32 %v1254, %v1300
    %1302 = vmatmul.f32.gmra.mxu0 %v698
    %v1303 = vpop.f32.mrf.mxu0
    %v1304 = vadd.f32 %v1257, %v1303
    %1305 = vmatmul.f32.gmra.mxu0 %v700
    %v1306 = vpop.f32.mrf.mxu0
    %v1307 = vadd.f32 %v1260, %v1306
    %1308 = vdwg.mxu0
    %1309 = vmatpush.msra.mxu0 %v1053
    %1310 = vmatpush.msra.mxu0 %v1049
    %1311 = vmatpush.msra.mxu0 %v1045
    %1312 = vmatpush.msra.mxu0 %v1041
    %1313 = vmatpush.msra.mxu0 %v1037
    %1314 = vmatpush.msra.mxu0 %v1033
    %1315 = vmatpush.msra.mxu0 %v1029
    %1316 = vmatpush.msra.mxu0 %v1025
    %1317 = vmatpush.msra.mxu0 %v1021
    %1318 = vmatpush.msra.mxu0 %v1017
    %1319 = vmatpush.msra.mxu0 %v1013
    %1320 = vmatpush.msra.mxu0 %v1009
    %1321 = vmatpush.msra.mxu0 %v1005
    %1322 = vmatpush.msra.mxu0 %v1001
    %1323 = vmatpush.msra.mxu0 %v997
    %1324 = vmatpush.msra.mxu0 %v993
    %1325 = vmatmul.f32.gmra.mxu0 %v691
    %v1326 = vpop.f32.mrf.mxu0
    %v1327 = vadd.f32 %v1280, %v1326
    %1328 = vmatmul.f32.gmra.mxu0 %v693
    %v1329 = vpop.f32.mrf.mxu0
    %v1330 = vadd.f32 %v1283, %v1329
    %1331 = vmatmul.f32.gmra.mxu0 %v695
    %v1332 = vpop.f32.mrf.mxu0
    %v1333 = vadd.f32 %v1286, %v1332
    %1334 = vmatmul.f32.gmra.mxu0 %v697
    %v1335 = vpop.f32.mrf.mxu0
    %v1336 = vadd.f32 %v1289, %v1335
    %1337 = vmatmul.f32.gmra.mxu0 %v699
    %v1338 = vpop.f32.mrf.mxu0
    %v1339 = vadd.f32 %v1292, %v1338
    %1340 = vmatmul.f32.gmra.mxu0 %v727
    %v1341 = vpop.f32.mrf.mxu0
    %v1342 = vadd.f32 %v1295, %v1341
    %1343 = vmatmul.f32.gmra.mxu0 %v729
    %v1344 = vpop.f32.mrf.mxu0
    %v1345 = vadd.f32 %v1298, %v1344
    %1346 = vmatmul.f32.gmra.mxu0 %v731
    %v1347 = vpop.f32.mrf.mxu0
    %v1348 = vadd.f32 %v1301, %v1347
    %1349 = vmatmul.f32.gmra.mxu0 %v733
    %v1350 = vpop.f32.mrf.mxu0
    %v1351 = vadd.f32 %v1304, %v1350
    %1352 = vmatmul.f32.gmra.mxu0 %v735
    %v1353 = vpop.f32.mrf.mxu0
    %v1354 = vadd.f32 %v1307, %v1353
    %1355 = vdwg.mxu0
    %1356 = vmatpush.msra.mxu0 %v1117
    %1357 = vmatpush.msra.mxu0 %v1113
    %1358 = vmatpush.msra.mxu0 %v1109
    %1359 = vmatpush.msra.mxu0 %v1105
    %1360 = vmatpush.msra.mxu0 %v1101
    %1361 = vmatpush.msra.mxu0 %v1097
    %1362 = vmatpush.msra.mxu0 %v1093
    %1363 = vmatpush.msra.mxu0 %v1089
    %1364 = vmatpush.msra.mxu0 %v1085
    %1365 = vmatpush.msra.mxu0 %v1081
    %1366 = vmatpush.msra.mxu0 %v1077
    %1367 = vmatpush.msra.mxu0 %v1073
    %1368 = vmatpush.msra.mxu0 %v1069
    %1369 = vmatpush.msra.mxu0 %v1065
    %1370 = vmatpush.msra.mxu0 %v1061
    %1371 = vmatpush.msra.mxu0 %v1057
    %1372 = vmatmul.f32.gmra.mxu0 %v692
    %v1373 = vpop.f32.mrf.mxu0
    %v1374 = vadd.f32 %v1327, %v1373
    %1375 = vmatmul.f32.gmra.mxu0 %v694
    %v1376 = vpop.f32.mrf.mxu0
    %v1377 = vadd.f32 %v1330, %v1376
    %1378 = vmatmul.f32.gmra.mxu0 %v696
    %v1379 = vpop.f32.mrf.mxu0
    %v1380 = vadd.f32 %v1333, %v1379
    %1381 = vmatmul.f32.gmra.mxu0 %v698
    %v1382 = vpop.f32.mrf.mxu0
    %v1383 = vadd.f32 %v1336, %v1382
    %1384 = vmatmul.f32.gmra.mxu0 %v700
    %v1385 = vpop.f32.mrf.mxu0
    %v1386 = vadd.f32 %v1339, %v1385
    %1387 = vmatmul.f32.gmra.mxu0 %v728
    %v1388 = vpop.f32.mrf.mxu0
    %v1389 = vadd.f32 %v1342, %v1388
    %1390 = vmatmul.f32.gmra.mxu0 %v730
    %v1391 = vpop.f32.mrf.mxu0
    %v1392 = vadd.f32 %v1345, %v1391
    %1393 = vmatmul.f32.gmra.mxu0 %v732
    %v1394 = vpop.f32.mrf.mxu0
    %v1395 = vadd.f32 %v1348, %v1394
    %1396 = vmatmul.f32.gmra.mxu0 %v734
    %v1397 = vpop.f32.mrf.mxu0
    %v1398 = vadd.f32 %v1351, %v1397
    %1399 = vmatmul.f32.gmra.mxu0 %v736
    %v1400 = vpop.f32.mrf.mxu0
    %v1401 = vadd.f32 %v1354, %v1400
    %1402 = vdwg.mxu0
    %1403 = vmatpush.msra.mxu0 %v798
    %1404 = vmatpush.msra.mxu0 %v794
    %1405 = vmatpush.msra.mxu0 %v790
    %1406 = vmatpush.msra.mxu0 %v786
    %1407 = vmatpush.msra.mxu0 %v782
    %1408 = vmatpush.msra.mxu0 %v778
    %1409 = vmatpush.msra.mxu0 %v774
    %1410 = vmatpush.msra.mxu0 %v770
    %1411 = vmatpush.msra.mxu0 %v766
    %1412 = vmatpush.msra.mxu0 %v762
    %1413 = vmatpush.msra.mxu0 %v758
    %1414 = vmatpush.msra.mxu0 %v754
    %1415 = vmatpush.msra.mxu0 %v750
    %1416 = vmatpush.msra.mxu0 %v746
    %1417 = vmatpush.msra.mxu0 %v742
    %1418 = vmatpush.msra.mxu0 %v738
    %1419 = vmatmul.f32.gmra.mxu0 %v689
    %v1420 = vpop.f32.mrf.mxu0
    %v1421 = vadd.f32 0.0, %v1420
    %1422 = vmatmul.f32.gmra.mxu0 %v691
    %v1423 = vpop.f32.mrf.mxu0
    %v1424 = vadd.f32 0.0, %v1423
    %1425 = vmatmul.f32.gmra.mxu0 %v693
    %v1426 = vpop.f32.mrf.mxu0
    %v1427 = vadd.f32 0.0, %v1426
    %1428 = vmatmul.f32.gmra.mxu0 %v695
    %v1429 = vpop.f32.mrf.mxu0
    %v1430 = vadd.f32 0.0, %v1429
    %1431 = vmatmul.f32.gmra.mxu0 %v697
    %v1432 = vpop.f32.mrf.mxu0
    %v1433 = vadd.f32 0.0, %v1432
    %1434 = vmatmul.f32.gmra.mxu0 %v725
    %v1435 = vpop.f32.mrf.mxu0
    %v1436 = vadd.f32 0.0, %v1435
    %1437 = vmatmul.f32.gmra.mxu0 %v727
    %v1438 = vpop.f32.mrf.mxu0
    %v1439 = vadd.f32 0.0, %v1438
    %1440 = vmatmul.f32.gmra.mxu0 %v729
    %v1441 = vpop.f32.mrf.mxu0
    %v1442 = vadd.f32 0.0, %v1441
    %1443 = vmatmul.f32.gmra.mxu0 %v731
    %v1444 = vpop.f32.mrf.mxu0
    %v1445 = vadd.f32 0.0, %v1444
    %1446 = vmatmul.f32.gmra.mxu0 %v733
    %v1447 = vpop.f32.mrf.mxu0
    %v1448 = vadd.f32 0.0, %v1447
    %1449 = vdwg.mxu0
    %1450 = vmatpush.msra.mxu0 %v862
    %1451 = vmatpush.msra.mxu0 %v858
    %1452 = vmatpush.msra.mxu0 %v854
    %1453 = vmatpush.msra.mxu0 %v850
    %1454 = vmatpush.msra.mxu0 %v846
    %1455 = vmatpush.msra.mxu0 %v842
    %1456 = vmatpush.msra.mxu0 %v838
    %1457 = vmatpush.msra.mxu0 %v834
    %1458 = vmatpush.msra.mxu0 %v830
    %1459 = vmatpush.msra.mxu0 %v826
    %1460 = vmatpush.msra.mxu0 %v822
    %1461 = vmatpush.msra.mxu0 %v818
    %1462 = vmatpush.msra.mxu0 %v814
    %1463 = vmatpush.msra.mxu0 %v810
    %1464 = vmatpush.msra.mxu0 %v806
    %1465 = vmatpush.msra.mxu0 %v802
    %1466 = vmatmul.f32.gmra.mxu0 %v690
    %v1467 = vpop.f32.mrf.mxu0
    %v1468 = vadd.f32 %v1421, %v1467
    %1469 = vmatmul.f32.gmra.mxu0 %v692
    %v1470 = vpop.f32.mrf.mxu0
    %v1471 = vadd.f32 %v1424, %v1470
    %1472 = vmatmul.f32.gmra.mxu0 %v694
    %v1473 = vpop.f32.mrf.mxu0
    %v1474 = vadd.f32 %v1427, %v1473
    %1475 = vmatmul.f32.gmra.mxu0 %v696
    %v1476 = vpop.f32.mrf.mxu0
    %v1477 = vadd.f32 %v1430, %v1476
    %1478 = vmatmul.f32.gmra.mxu0 %v698
    %v1479 = vpop.f32.mrf.mxu0
    %v1480 = vadd.f32 %v1433, %v1479
    %1481 = vmatmul.f32.gmra.mxu0 %v726
    %v1482 = vpop.f32.mrf.mxu0
    %v1483 = vadd.f32 %v1436, %v1482
    %1484 = vmatmul.f32.gmra.mxu0 %v728
    %v1485 = vpop.f32.mrf.mxu0
    %v1486 = vadd.f32 %v1439, %v1485
    %1487 = vmatmul.f32.gmra.mxu0 %v730
    %v1488 = vpop.f32.mrf.mxu0
    %v1489 = vadd.f32 %v1442, %v1488
    %1490 = vmatmul.f32.gmra.mxu0 %v732
    %v1491 = vpop.f32.mrf.mxu0
    %v1492 = vadd.f32 %v1445, %v1491
    %1493 = vmatmul.f32.gmra.mxu0 %v734
    %v1494 = vpop.f32.mrf.mxu0
    %v1495 = vadd.f32 %v1448, %v1494
    %1496 = vdwg.mxu0
    %1497 = vmatpush.msra.mxu0 %v926
    %1498 = vmatpush.msra.mxu0 %v922
    %1499 = vmatpush.msra.mxu0 %v918
    %1500 = vmatpush.msra.mxu0 %v914
    %1501 = vmatpush.msra.mxu0 %v910
    %1502 = vmatpush.msra.mxu0 %v906
    %1503 = vmatpush.msra.mxu0 %v902
    %1504 = vmatpush.msra.mxu0 %v898
    %1505 = vmatpush.msra.mxu0 %v894
    %1506 = vmatpush.msra.mxu0 %v890
    %1507 = vmatpush.msra.mxu0 %v886
    %1508 = vmatpush.msra.mxu0 %v882
    %1509 = vmatpush.msra.mxu0 %v878
    %1510 = vmatpush.msra.mxu0 %v874
    %1511 = vmatpush.msra.mxu0 %v870
    %1512 = vmatpush.msra.mxu0 %v866
    %1513 = vmatmul.f32.gmra.mxu0 %v725
    %v1514 = vpop.f32.mrf.mxu0
    %v1515 = vadd.f32 %v1468, %v1514
    %1516 = vmatmul.f32.gmra.mxu0 %v727
    %v1517 = vpop.f32.mrf.mxu0
    %v1518 = vadd.f32 %v1471, %v1517
    %1519 = vmatmul.f32.gmra.mxu0 %v729
    %v1520 = vpop.f32.mrf.mxu0
    %v1521 = vadd.f32 %v1474, %v1520
    %1522 = vmatmul.f32.gmra.mxu0 %v731
    %v1523 = vpop.f32.mrf.mxu0
    %v1524 = vadd.f32 %v1477, %v1523
    %1525 = vmatmul.f32.gmra.mxu0 %v733
    %v1526 = vpop.f32.mrf.mxu0
    %v1527 = vadd.f32 %v1480, %v1526
    %1528 = vmatmul.f32.gmra.mxu0 %v691
    %v1529 = vpop.f32.mrf.mxu0
    %v1530 = vadd.f32 %v1483, %v1529
    %1531 = vmatmul.f32.gmra.mxu0 %v693
    %v1532 = vpop.f32.mrf.mxu0
    %v1533 = vadd.f32 %v1486, %v1532
    %1534 = vmatmul.f32.gmra.mxu0 %v695
    %v1535 = vpop.f32.mrf.mxu0
    %v1536 = vadd.f32 %v1489, %v1535
    %1537 = vmatmul.f32.gmra.mxu0 %v697
    %v1538 = vpop.f32.mrf.mxu0
    %v1539 = vadd.f32 %v1492, %v1538
    %1540 = vmatmul.f32.gmra.mxu0 %v699
    %v1541 = vpop.f32.mrf.mxu0
    %v1542 = vadd.f32 %v1495, %v1541
    %1543 = vdwg.mxu0
    %1544 = vmatpush.msra.mxu0 %v990
    %1545 = vmatpush.msra.mxu0 %v986
    %1546 = vmatpush.msra.mxu0 %v982
    %1547 = vmatpush.msra.mxu0 %v978
    %1548 = vmatpush.msra.mxu0 %v974
    %1549 = vmatpush.msra.mxu0 %v970
    %1550 = vmatpush.msra.mxu0 %v966
    %1551 = vmatpush.msra.mxu0 %v962
    %1552 = vmatpush.msra.mxu0 %v958
    %1553 = vmatpush.msra.mxu0 %v954
    %1554 = vmatpush.msra.mxu0 %v950
    %1555 = vmatpush.msra.mxu0 %v946
    %1556 = vmatpush.msra.mxu0 %v942
    %1557 = vmatpush.msra.mxu0 %v938
    %1558 = vmatpush.msra.mxu0 %v934
    %1559 = vmatpush.msra.mxu0 %v930
    %1560 = vmatmul.f32.gmra.mxu0 %v726
    %v1561 = vpop.f32.mrf.mxu0
    %v1562 = vadd.f32 %v1515, %v1561
    %1563 = vmatmul.f32.gmra.mxu0 %v728
    %v1564 = vpop.f32.mrf.mxu0
    %v1565 = vadd.f32 %v1518, %v1564
    %1566 = vmatmul.f32.gmra.mxu0 %v730
    %v1567 = vpop.f32.mrf.mxu0
    %v1568 = vadd.f32 %v1521, %v1567
    %1569 = vmatmul.f32.gmra.mxu0 %v732
    %v1570 = vpop.f32.mrf.mxu0
    %v1571 = vadd.f32 %v1524, %v1570
    %1572 = vmatmul.f32.gmra.mxu0 %v734
    %v1573 = vpop.f32.mrf.mxu0
    %v1574 = vadd.f32 %v1527, %v1573
    %1575 = vmatmul.f32.gmra.mxu0 %v692
    %v1576 = vpop.f32.mrf.mxu0
    %v1577 = vadd.f32 %v1530, %v1576
    %1578 = vmatmul.f32.gmra.mxu0 %v694
    %v1579 = vpop.f32.mrf.mxu0
    %v1580 = vadd.f32 %v1533, %v1579
    %1581 = vmatmul.f32.gmra.mxu0 %v696
    %v1582 = vpop.f32.mrf.mxu0
    %v1583 = vadd.f32 %v1536, %v1582
    %1584 = vmatmul.f32.gmra.mxu0 %v698
    %v1585 = vpop.f32.mrf.mxu0
    %v1586 = vadd.f32 %v1539, %v1585
    %1587 = vmatmul.f32.gmra.mxu0 %v700
    %v1588 = vpop.f32.mrf.mxu0
    %v1589 = vadd.f32 %v1542, %v1588
    %1590 = vdwg.mxu0
    %1591 = vmatpush.msra.mxu0 %v1054
    %1592 = vmatpush.msra.mxu0 %v1050
    %1593 = vmatpush.msra.mxu0 %v1046
    %1594 = vmatpush.msra.mxu0 %v1042
    %1595 = vmatpush.msra.mxu0 %v1038
    %1596 = vmatpush.msra.mxu0 %v1034
    %1597 = vmatpush.msra.mxu0 %v1030
    %1598 = vmatpush.msra.mxu0 %v1026
    %1599 = vmatpush.msra.mxu0 %v1022
    %1600 = vmatpush.msra.mxu0 %v1018
    %1601 = vmatpush.msra.mxu0 %v1014
    %1602 = vmatpush.msra.mxu0 %v1010
    %1603 = vmatpush.msra.mxu0 %v1006
    %1604 = vmatpush.msra.mxu0 %v1002
    %1605 = vmatpush.msra.mxu0 %v998
    %1606 = vmatpush.msra.mxu0 %v994
    %1607 = vmatmul.f32.gmra.mxu0 %v691
    %v1608 = vpop.f32.mrf.mxu0
    %v1609 = vadd.f32 %v1562, %v1608
    %1610 = vmatmul.f32.gmra.mxu0 %v693
    %v1611 = vpop.f32.mrf.mxu0
    %v1612 = vadd.f32 %v1565, %v1611
    %1613 = vmatmul.f32.gmra.mxu0 %v695
    %v1614 = vpop.f32.mrf.mxu0
    %v1615 = vadd.f32 %v1568, %v1614
    %1616 = vmatmul.f32.gmra.mxu0 %v697
    %v1617 = vpop.f32.mrf.mxu0
    %v1618 = vadd.f32 %v1571, %v1617
    %1619 = vmatmul.f32.gmra.mxu0 %v699
    %v1620 = vpop.f32.mrf.mxu0
    %v1621 = vadd.f32 %v1574, %v1620
    %1622 = vmatmul.f32.gmra.mxu0 %v727
    %v1623 = vpop.f32.mrf.mxu0
    %v1624 = vadd.f32 %v1577, %v1623
    %1625 = vmatmul.f32.gmra.mxu0 %v729
    %v1626 = vpop.f32.mrf.mxu0
    %v1627 = vadd.f32 %v1580, %v1626
    %1628 = vmatmul.f32.gmra.mxu0 %v731
    %v1629 = vpop.f32.mrf.mxu0
    %v1630 = vadd.f32 %v1583, %v1629
    %1631 = vmatmul.f32.gmra.mxu0 %v733
    %v1632 = vpop.f32.mrf.mxu0
    %v1633 = vadd.f32 %v1586, %v1632
    %1634 = vmatmul.f32.gmra.mxu0 %v735
    %v1635 = vpop.f32.mrf.mxu0
    %v1636 = vadd.f32 %v1589, %v1635
    %1637 = vdwg.mxu0
    %1638 = vmatpush.msra.mxu0 %v1118
    %1639 = vmatpush.msra.mxu0 %v1114
    %1640 = vmatpush.msra.mxu0 %v1110
    %1641 = vmatpush.msra.mxu0 %v1106
    %1642 = vmatpush.msra.mxu0 %v1102
    %1643 = vmatpush.msra.mxu0 %v1098
    %1644 = vmatpush.msra.mxu0 %v1094
    %1645 = vmatpush.msra.mxu0 %v1090
    %1646 = vmatpush.msra.mxu0 %v1086
    %1647 = vmatpush.msra.mxu0 %v1082
    %1648 = vmatpush.msra.mxu0 %v1078
    %1649 = vmatpush.msra.mxu0 %v1074
    %1650 = vmatpush.msra.mxu0 %v1070
    %1651 = vmatpush.msra.mxu0 %v1066
    %1652 = vmatpush.msra.mxu0 %v1062
    %1653 = vmatpush.msra.mxu0 %v1058
    %1654 = vmatmul.f32.gmra.mxu0 %v692
    %v1655 = vpop.f32.mrf.mxu0
    %v1656 = vadd.f32 %v1609, %v1655
    %1657 = vmatmul.f32.gmra.mxu0 %v694
    %v1658 = vpop.f32.mrf.mxu0
    %v1659 = vadd.f32 %v1612, %v1658
    %1660 = vmatmul.f32.gmra.mxu0 %v696
    %v1661 = vpop.f32.mrf.mxu0
    %v1662 = vadd.f32 %v1615, %v1661
    %1663 = vmatmul.f32.gmra.mxu0 %v698
    %v1664 = vpop.f32.mrf.mxu0
    %v1665 = vadd.f32 %v1618, %v1664
    %1666 = vmatmul.f32.gmra.mxu0 %v700
    %v1667 = vpop.f32.mrf.mxu0
    %v1668 = vadd.f32 %v1621, %v1667
    %1669 = vmatmul.f32.gmra.mxu0 %v728
    %v1670 = vpop.f32.mrf.mxu0
    %v1671 = vadd.f32 %v1624, %v1670
    %1672 = vmatmul.f32.gmra.mxu0 %v730
    %v1673 = vpop.f32.mrf.mxu0
    %v1674 = vadd.f32 %v1627, %v1673
    %1675 = vmatmul.f32.gmra.mxu0 %v732
    %v1676 = vpop.f32.mrf.mxu0
    %v1677 = vadd.f32 %v1630, %v1676
    %1678 = vmatmul.f32.gmra.mxu0 %v734
    %v1679 = vpop.f32.mrf.mxu0
    %v1680 = vadd.f32 %v1633, %v1679
    %1681 = vmatmul.f32.gmra.mxu0 %v736
    %v1682 = vpop.f32.mrf.mxu0
    %v1683 = vadd.f32 %v1636, %v1682
    %1684 = vdwg.mxu0
    %1685 = vmatpush.msra.mxu0 %v799
    %1686 = vmatpush.msra.mxu0 %v795
    %1687 = vmatpush.msra.mxu0 %v791
    %1688 = vmatpush.msra.mxu0 %v787
    %1689 = vmatpush.msra.mxu0 %v783
    %1690 = vmatpush.msra.mxu0 %v779
    %1691 = vmatpush.msra.mxu0 %v775
    %1692 = vmatpush.msra.mxu0 %v771
    %1693 = vmatpush.msra.mxu0 %v767
    %1694 = vmatpush.msra.mxu0 %v763
    %1695 = vmatpush.msra.mxu0 %v759
    %1696 = vmatpush.msra.mxu0 %v755
    %1697 = vmatpush.msra.mxu0 %v751
    %1698 = vmatpush.msra.mxu0 %v747
    %1699 = vmatpush.msra.mxu0 %v743
    %1700 = vmatpush.msra.mxu0 %v739
    %1701 = vmatmul.f32.gmra.mxu0 %v689
    %v1702 = vpop.f32.mrf.mxu0
    %v1703 = vadd.f32 0.0, %v1702
    %1704 = vmatmul.f32.gmra.mxu0 %v691
    %v1705 = vpop.f32.mrf.mxu0
    %v1706 = vadd.f32 0.0, %v1705
    %1707 = vmatmul.f32.gmra.mxu0 %v693
    %v1708 = vpop.f32.mrf.mxu0
    %v1709 = vadd.f32 0.0, %v1708
    %1710 = vmatmul.f32.gmra.mxu0 %v695
    %v1711 = vpop.f32.mrf.mxu0
    %v1712 = vadd.f32 0.0, %v1711
    %1713 = vmatmul.f32.gmra.mxu0 %v697
    %v1714 = vpop.f32.mrf.mxu0
    %v1715 = vadd.f32 0.0, %v1714
    %1716 = vmatmul.f32.gmra.mxu0 %v725
    %v1717 = vpop.f32.mrf.mxu0
    %v1718 = vadd.f32 0.0, %v1717
    %1719 = vmatmul.f32.gmra.mxu0 %v727
    %v1720 = vpop.f32.mrf.mxu0
    %v1721 = vadd.f32 0.0, %v1720
    %1722 = vmatmul.f32.gmra.mxu0 %v729
    %v1723 = vpop.f32.mrf.mxu0
    %v1724 = vadd.f32 0.0, %v1723
    %1725 = vmatmul.f32.gmra.mxu0 %v731
    %v1726 = vpop.f32.mrf.mxu0
    %v1727 = vadd.f32 0.0, %v1726
    %1728 = vmatmul.f32.gmra.mxu0 %v733
    %v1729 = vpop.f32.mrf.mxu0
    %v1730 = vadd.f32 0.0, %v1729
    %1731 = vdwg.mxu0
    %1732 = vmatpush.msra.mxu0 %v863
    %1733 = vmatpush.msra.mxu0 %v859
    %1734 = vmatpush.msra.mxu0 %v855
    %1735 = vmatpush.msra.mxu0 %v851
    %1736 = vmatpush.msra.mxu0 %v847
    %1737 = vmatpush.msra.mxu0 %v843
    %1738 = vmatpush.msra.mxu0 %v839
    %1739 = vmatpush.msra.mxu0 %v835
    %1740 = vmatpush.msra.mxu0 %v831
    %1741 = vmatpush.msra.mxu0 %v827
    %1742 = vmatpush.msra.mxu0 %v823
    %1743 = vmatpush.msra.mxu0 %v819
    %1744 = vmatpush.msra.mxu0 %v815
    %1745 = vmatpush.msra.mxu0 %v811
    %1746 = vmatpush.msra.mxu0 %v807
    %1747 = vmatpush.msra.mxu0 %v803
    %1748 = vmatmul.f32.gmra.mxu0 %v690
    %v1749 = vpop.f32.mrf.mxu0
    %v1750 = vadd.f32 %v1703, %v1749
    %1751 = vmatmul.f32.gmra.mxu0 %v692
    %v1752 = vpop.f32.mrf.mxu0
    %v1753 = vadd.f32 %v1706, %v1752
    %1754 = vmatmul.f32.gmra.mxu0 %v694
    %v1755 = vpop.f32.mrf.mxu0
    %v1756 = vadd.f32 %v1709, %v1755
    %1757 = vmatmul.f32.gmra.mxu0 %v696
    %v1758 = vpop.f32.mrf.mxu0
    %v1759 = vadd.f32 %v1712, %v1758
    %1760 = vmatmul.f32.gmra.mxu0 %v698
    %v1761 = vpop.f32.mrf.mxu0
    %v1762 = vadd.f32 %v1715, %v1761
    %1763 = vmatmul.f32.gmra.mxu0 %v726
    %v1764 = vpop.f32.mrf.mxu0
    %v1765 = vadd.f32 %v1718, %v1764
    %1766 = vmatmul.f32.gmra.mxu0 %v728
    %v1767 = vpop.f32.mrf.mxu0
    %v1768 = vadd.f32 %v1721, %v1767
    %1769 = vmatmul.f32.gmra.mxu0 %v730
    %v1770 = vpop.f32.mrf.mxu0
    %v1771 = vadd.f32 %v1724, %v1770
    %1772 = vmatmul.f32.gmra.mxu0 %v732
    %v1773 = vpop.f32.mrf.mxu0
    %v1774 = vadd.f32 %v1727, %v1773
    %1775 = vmatmul.f32.gmra.mxu0 %v734
    %v1776 = vpop.f32.mrf.mxu0
    %v1777 = vadd.f32 %v1730, %v1776
    %1778 = vdwg.mxu0
    %1779 = vmatpush.msra.mxu0 %v927
    %1780 = vmatpush.msra.mxu0 %v923
    %1781 = vmatpush.msra.mxu0 %v919
    %1782 = vmatpush.msra.mxu0 %v915
    %1783 = vmatpush.msra.mxu0 %v911
    %1784 = vmatpush.msra.mxu0 %v907
    %1785 = vmatpush.msra.mxu0 %v903
    %1786 = vmatpush.msra.mxu0 %v899
    %1787 = vmatpush.msra.mxu0 %v895
    %1788 = vmatpush.msra.mxu0 %v891
    %1789 = vmatpush.msra.mxu0 %v887
    %1790 = vmatpush.msra.mxu0 %v883
    %1791 = vmatpush.msra.mxu0 %v879
    %1792 = vmatpush.msra.mxu0 %v875
    %1793 = vmatpush.msra.mxu0 %v871
    %1794 = vmatpush.msra.mxu0 %v867
    %1795 = vmatmul.f32.gmra.mxu0 %v725
    %v1796 = vpop.f32.mrf.mxu0
    %v1797 = vadd.f32 %v1750, %v1796
    %1798 = vmatmul.f32.gmra.mxu0 %v727
    %v1799 = vpop.f32.mrf.mxu0
    %v1800 = vadd.f32 %v1753, %v1799
    %1801 = vmatmul.f32.gmra.mxu0 %v729
    %v1802 = vpop.f32.mrf.mxu0
    %v1803 = vadd.f32 %v1756, %v1802
    %1804 = vmatmul.f32.gmra.mxu0 %v731
    %v1805 = vpop.f32.mrf.mxu0
    %v1806 = vadd.f32 %v1759, %v1805
    %1807 = vmatmul.f32.gmra.mxu0 %v733
    %v1808 = vpop.f32.mrf.mxu0
    %v1809 = vadd.f32 %v1762, %v1808
    %1810 = vmatmul.f32.gmra.mxu0 %v691
    %v1811 = vpop.f32.mrf.mxu0
    %v1812 = vadd.f32 %v1765, %v1811
    %1813 = vmatmul.f32.gmra.mxu0 %v693
    %v1814 = vpop.f32.mrf.mxu0
    %v1815 = vadd.f32 %v1768, %v1814
    %1816 = vmatmul.f32.gmra.mxu0 %v695
    %v1817 = vpop.f32.mrf.mxu0
    %v1818 = vadd.f32 %v1771, %v1817
    %1819 = vmatmul.f32.gmra.mxu0 %v697
    %v1820 = vpop.f32.mrf.mxu0
    %v1821 = vadd.f32 %v1774, %v1820
    %1822 = vmatmul.f32.gmra.mxu0 %v699
    %v1823 = vpop.f32.mrf.mxu0
    %v1824 = vadd.f32 %v1777, %v1823
    %1825 = vdwg.mxu0
    %1826 = vmatpush.msra.mxu0 %v991
    %1827 = vmatpush.msra.mxu0 %v987
    %1828 = vmatpush.msra.mxu0 %v983
    %1829 = vmatpush.msra.mxu0 %v979
    %1830 = vmatpush.msra.mxu0 %v975
    %1831 = vmatpush.msra.mxu0 %v971
    %1832 = vmatpush.msra.mxu0 %v967
    %1833 = vmatpush.msra.mxu0 %v963
    %1834 = vmatpush.msra.mxu0 %v959
    %1835 = vmatpush.msra.mxu0 %v955
    %1836 = vmatpush.msra.mxu0 %v951
    %1837 = vmatpush.msra.mxu0 %v947
    %1838 = vmatpush.msra.mxu0 %v943
    %1839 = vmatpush.msra.mxu0 %v939
    %1840 = vmatpush.msra.mxu0 %v935
    %1841 = vmatpush.msra.mxu0 %v931
    %1842 = vmatmul.f32.gmra.mxu0 %v726
    %v1843 = vpop.f32.mrf.mxu0
    %v1844 = vadd.f32 %v1797, %v1843
    %1845 = vmatmul.f32.gmra.mxu0 %v728
    %v1846 = vpop.f32.mrf.mxu0
    %v1847 = vadd.f32 %v1800, %v1846
    %1848 = vmatmul.f32.gmra.mxu0 %v730
    %v1849 = vpop.f32.mrf.mxu0
    %v1850 = vadd.f32 %v1803, %v1849
    %1851 = vmatmul.f32.gmra.mxu0 %v732
    %v1852 = vpop.f32.mrf.mxu0
    %v1853 = vadd.f32 %v1806, %v1852
    %1854 = vmatmul.f32.gmra.mxu0 %v734
    %v1855 = vpop.f32.mrf.mxu0
    %v1856 = vadd.f32 %v1809, %v1855
    %1857 = vmatmul.f32.gmra.mxu0 %v692
    %v1858 = vpop.f32.mrf.mxu0
    %v1859 = vadd.f32 %v1812, %v1858
    %1860 = vmatmul.f32.gmra.mxu0 %v694
    %v1861 = vpop.f32.mrf.mxu0
    %v1862 = vadd.f32 %v1815, %v1861
    %1863 = vmatmul.f32.gmra.mxu0 %v696
    %v1864 = vpop.f32.mrf.mxu0
    %v1865 = vadd.f32 %v1818, %v1864
    %1866 = vmatmul.f32.gmra.mxu0 %v698
    %v1867 = vpop.f32.mrf.mxu0
    %v1868 = vadd.f32 %v1821, %v1867
    %1869 = vmatmul.f32.gmra.mxu0 %v700
    %v1870 = vpop.f32.mrf.mxu0
    %v1871 = vadd.f32 %v1824, %v1870
    %1872 = vdwg.mxu0
    %1873 = vmatpush.msra.mxu0 %v1055
    %1874 = vmatpush.msra.mxu0 %v1051
    %1875 = vmatpush.msra.mxu0 %v1047
    %1876 = vmatpush.msra.mxu0 %v1043
    %1877 = vmatpush.msra.mxu0 %v1039
    %1878 = vmatpush.msra.mxu0 %v1035
    %1879 = vmatpush.msra.mxu0 %v1031
    %1880 = vmatpush.msra.mxu0 %v1027
    %1881 = vmatpush.msra.mxu0 %v1023
    %1882 = vmatpush.msra.mxu0 %v1019
    %1883 = vmatpush.msra.mxu0 %v1015
    %1884 = vmatpush.msra.mxu0 %v1011
    %1885 = vmatpush.msra.mxu0 %v1007
    %1886 = vmatpush.msra.mxu0 %v1003
    %1887 = vmatpush.msra.mxu0 %v999
    %1888 = vmatpush.msra.mxu0 %v995
    %1889 = vmatmul.f32.gmra.mxu0 %v691
    %v1890 = vpop.f32.mrf.mxu0
    %v1891 = vadd.f32 %v1844, %v1890
    %1892 = vmatmul.f32.gmra.mxu0 %v693
    %v1893 = vpop.f32.mrf.mxu0
    %v1894 = vadd.f32 %v1847, %v1893
    %1895 = vmatmul.f32.gmra.mxu0 %v695
    %v1896 = vpop.f32.mrf.mxu0
    %v1897 = vadd.f32 %v1850, %v1896
    %1898 = vmatmul.f32.gmra.mxu0 %v697
    %v1899 = vpop.f32.mrf.mxu0
    %v1900 = vadd.f32 %v1853, %v1899
    %1901 = vmatmul.f32.gmra.mxu0 %v699
    %v1902 = vpop.f32.mrf.mxu0
    %v1903 = vadd.f32 %v1856, %v1902
    %1904 = vmatmul.f32.gmra.mxu0 %v727
    %v1905 = vpop.f32.mrf.mxu0
    %v1906 = vadd.f32 %v1859, %v1905
    %1907 = vmatmul.f32.gmra.mxu0 %v729
    %v1908 = vpop.f32.mrf.mxu0
    %v1909 = vadd.f32 %v1862, %v1908
    %1910 = vmatmul.f32.gmra.mxu0 %v731
    %v1911 = vpop.f32.mrf.mxu0
    %v1912 = vadd.f32 %v1865, %v1911
    %1913 = vmatmul.f32.gmra.mxu0 %v733
    %v1914 = vpop.f32.mrf.mxu0
    %v1915 = vadd.f32 %v1868, %v1914
    %1916 = vmatmul.f32.gmra.mxu0 %v735
    %v1917 = vpop.f32.mrf.mxu0
    %v1918 = vadd.f32 %v1871, %v1917
    %1919 = vdwg.mxu0
    %1920 = vmatpush.msra.mxu0 %v1119
    %1921 = vmatpush.msra.mxu0 %v1115
    %1922 = vmatpush.msra.mxu0 %v1111
    %1923 = vmatpush.msra.mxu0 %v1107
    %1924 = vmatpush.msra.mxu0 %v1103
    %1925 = vmatpush.msra.mxu0 %v1099
    %1926 = vmatpush.msra.mxu0 %v1095
    %1927 = vmatpush.msra.mxu0 %v1091
    %1928 = vmatpush.msra.mxu0 %v1087
    %1929 = vmatpush.msra.mxu0 %v1083
    %1930 = vmatpush.msra.mxu0 %v1079
    %1931 = vmatpush.msra.mxu0 %v1075
    %1932 = vmatpush.msra.mxu0 %v1071
    %1933 = vmatpush.msra.mxu0 %v1067
    %1934 = vmatpush.msra.mxu0 %v1063
    %1935 = vmatpush.msra.mxu0 %v1059
    %1936 = vmatmul.f32.gmra.mxu0 %v692
    %v1937 = vpop.f32.mrf.mxu0
    %v1938 = vadd.f32 %v1891, %v1937
    %1939 = vmatmul.f32.gmra.mxu0 %v694
    %v1940 = vpop.f32.mrf.mxu0
    %v1941 = vadd.f32 %v1894, %v1940
    %1942 = vmatmul.f32.gmra.mxu0 %v696
    %v1943 = vpop.f32.mrf.mxu0
    %v1944 = vadd.f32 %v1897, %v1943
    %1945 = vmatmul.f32.gmra.mxu0 %v698
    %v1946 = vpop.f32.mrf.mxu0
    %v1947 = vadd.f32 %v1900, %v1946
    %1948 = vmatmul.f32.gmra.mxu0 %v700
    %v1949 = vpop.f32.mrf.mxu0
    %v1950 = vadd.f32 %v1903, %v1949
    %1951 = vmatmul.f32.gmra.mxu0 %v728
    %v1952 = vpop.f32.mrf.mxu0
    %v1953 = vadd.f32 %v1906, %v1952
    %1954 = vmatmul.f32.gmra.mxu0 %v730
    %v1955 = vpop.f32.mrf.mxu0
    %v1956 = vadd.f32 %v1909, %v1955
    %1957 = vmatmul.f32.gmra.mxu0 %v732
    %v1958 = vpop.f32.mrf.mxu0
    %v1959 = vadd.f32 %v1912, %v1958
    %1960 = vmatmul.f32.gmra.mxu0 %v734
    %v1961 = vpop.f32.mrf.mxu0
    %v1962 = vadd.f32 %v1915, %v1961
    %1963 = vmatmul.f32.gmra.mxu0 %v736
    %v1964 = vpop.f32.mrf.mxu0
    %v1965 = vadd.f32 %v1918, %v1964
    %1966 = vdwg.mxu0
    %1967 = vmatpush.msra.mxu0 %v800
    %1968 = vmatpush.msra.mxu0 %v796
    %1969 = vmatpush.msra.mxu0 %v792
    %1970 = vmatpush.msra.mxu0 %v788
    %1971 = vmatpush.msra.mxu0 %v784
    %1972 = vmatpush.msra.mxu0 %v780
    %1973 = vmatpush.msra.mxu0 %v776
    %1974 = vmatpush.msra.mxu0 %v772
    %1975 = vmatpush.msra.mxu0 %v768
    %1976 = vmatpush.msra.mxu0 %v764
    %1977 = vmatpush.msra.mxu0 %v760
    %1978 = vmatpush.msra.mxu0 %v756
    %1979 = vmatpush.msra.mxu0 %v752
    %1980 = vmatpush.msra.mxu0 %v748
    %1981 = vmatpush.msra.mxu0 %v744
    %1982 = vmatpush.msra.mxu0 %v740
    %1983 = vmatmul.f32.gmra.mxu0 %v689
    %v1984 = vpop.f32.mrf.mxu0
    %v1985 = vadd.f32 0.0, %v1984
    %1986 = vmatmul.f32.gmra.mxu0 %v691
    %v1987 = vpop.f32.mrf.mxu0
    %v1988 = vadd.f32 0.0, %v1987
    %1989 = vmatmul.f32.gmra.mxu0 %v693
    %v1990 = vpop.f32.mrf.mxu0
    %v1991 = vadd.f32 0.0, %v1990
    %1992 = vmatmul.f32.gmra.mxu0 %v695
    %v1993 = vpop.f32.mrf.mxu0
    %v1994 = vadd.f32 0.0, %v1993
    %1995 = vmatmul.f32.gmra.mxu0 %v697
    %v1996 = vpop.f32.mrf.mxu0
    %v1997 = vadd.f32 0.0, %v1996
    %1998 = vmatmul.f32.gmra.mxu0 %v725
    %v1999 = vpop.f32.mrf.mxu0
    %v2000 = vadd.f32 0.0, %v1999
    %2001 = vmatmul.f32.gmra.mxu0 %v727
    %v2002 = vpop.f32.mrf.mxu0
    %v2003 = vadd.f32 0.0, %v2002
    %2004 = vmatmul.f32.gmra.mxu0 %v729
    %v2005 = vpop.f32.mrf.mxu0
    %v2006 = vadd.f32 0.0, %v2005
    %2007 = vmatmul.f32.gmra.mxu0 %v731
    %v2008 = vpop.f32.mrf.mxu0
    %v2009 = vadd.f32 0.0, %v2008
    %2010 = vmatmul.f32.gmra.mxu0 %v733
    %v2011 = vpop.f32.mrf.mxu0
    %v2012 = vadd.f32 0.0, %v2011
    %2013 = vdwg.mxu0
    %2014 = vmatpush.msra.mxu0 %v864
    %2015 = vmatpush.msra.mxu0 %v860
    %2016 = vmatpush.msra.mxu0 %v856
    %2017 = vmatpush.msra.mxu0 %v852
    %2018 = vmatpush.msra.mxu0 %v848
    %2019 = vmatpush.msra.mxu0 %v844
    %2020 = vmatpush.msra.mxu0 %v840
    %2021 = vmatpush.msra.mxu0 %v836
    %2022 = vmatpush.msra.mxu0 %v832
    %2023 = vmatpush.msra.mxu0 %v828
    %2024 = vmatpush.msra.mxu0 %v824
    %2025 = vmatpush.msra.mxu0 %v820
    %2026 = vmatpush.msra.mxu0 %v816
    %2027 = vmatpush.msra.mxu0 %v812
    %2028 = vmatpush.msra.mxu0 %v808
    %2029 = vmatpush.msra.mxu0 %v804
    %2030 = vmatmul.f32.gmra.mxu0 %v690
    %v2031 = vpop.f32.mrf.mxu0
    %v2032 = vadd.f32 %v1985, %v2031
    %2033 = vmatmul.f32.gmra.mxu0 %v692
    %v2034 = vpop.f32.mrf.mxu0
    %v2035 = vadd.f32 %v1988, %v2034
    %2036 = vmatmul.f32.gmra.mxu0 %v694
    %v2037 = vpop.f32.mrf.mxu0
    %v2038 = vadd.f32 %v1991, %v2037
    %2039 = vmatmul.f32.gmra.mxu0 %v696
    %v2040 = vpop.f32.mrf.mxu0
    %v2041 = vadd.f32 %v1994, %v2040
    %2042 = vmatmul.f32.gmra.mxu0 %v698
    %v2043 = vpop.f32.mrf.mxu0
    %v2044 = vadd.f32 %v1997, %v2043
    %2045 = vmatmul.f32.gmra.mxu0 %v726
    %v2046 = vpop.f32.mrf.mxu0
    %v2047 = vadd.f32 %v2000, %v2046
    %2048 = vmatmul.f32.gmra.mxu0 %v728
    %v2049 = vpop.f32.mrf.mxu0
    %v2050 = vadd.f32 %v2003, %v2049
    %2051 = vmatmul.f32.gmra.mxu0 %v730
    %v2052 = vpop.f32.mrf.mxu0
    %v2053 = vadd.f32 %v2006, %v2052
    %2054 = vmatmul.f32.gmra.mxu0 %v732
    %v2055 = vpop.f32.mrf.mxu0
    %v2056 = vadd.f32 %v2009, %v2055
    %2057 = vmatmul.f32.gmra.mxu0 %v734
    %v2058 = vpop.f32.mrf.mxu0
    %v2059 = vadd.f32 %v2012, %v2058
    %2060 = vdwg.mxu0
    %2061 = vmatpush.msra.mxu0 %v928
    %2062 = vmatpush.msra.mxu0 %v924
    %2063 = vmatpush.msra.mxu0 %v920
    %2064 = vmatpush.msra.mxu0 %v916
    %2065 = vmatpush.msra.mxu0 %v912
    %2066 = vmatpush.msra.mxu0 %v908
    %2067 = vmatpush.msra.mxu0 %v904
    %2068 = vmatpush.msra.mxu0 %v900
    %2069 = vmatpush.msra.mxu0 %v896
    %2070 = vmatpush.msra.mxu0 %v892
    %2071 = vmatpush.msra.mxu0 %v888
    %2072 = vmatpush.msra.mxu0 %v884
    %2073 = vmatpush.msra.mxu0 %v880
    %2074 = vmatpush.msra.mxu0 %v876
    %2075 = vmatpush.msra.mxu0 %v872
    %2076 = vmatpush.msra.mxu0 %v868
    %2077 = vmatmul.f32.gmra.mxu0 %v725
    %v2078 = vpop.f32.mrf.mxu0
    %v2079 = vadd.f32 %v2032, %v2078
    %2080 = vmatmul.f32.gmra.mxu0 %v727
    %v2081 = vpop.f32.mrf.mxu0
    %v2082 = vadd.f32 %v2035, %v2081
    %2083 = vmatmul.f32.gmra.mxu0 %v729
    %v2084 = vpop.f32.mrf.mxu0
    %v2085 = vadd.f32 %v2038, %v2084
    %2086 = vmatmul.f32.gmra.mxu0 %v731
    %v2087 = vpop.f32.mrf.mxu0
    %v2088 = vadd.f32 %v2041, %v2087
    %2089 = vmatmul.f32.gmra.mxu0 %v733
    %v2090 = vpop.f32.mrf.mxu0
    %v2091 = vadd.f32 %v2044, %v2090
    %2092 = vmatmul.f32.gmra.mxu0 %v691
    %v2093 = vpop.f32.mrf.mxu0
    %v2094 = vadd.f32 %v2047, %v2093
    %2095 = vmatmul.f32.gmra.mxu0 %v693
    %v2096 = vpop.f32.mrf.mxu0
    %v2097 = vadd.f32 %v2050, %v2096
    %2098 = vmatmul.f32.gmra.mxu0 %v695
    %v2099 = vpop.f32.mrf.mxu0
    %v2100 = vadd.f32 %v2053, %v2099
    %2101 = vmatmul.f32.gmra.mxu0 %v697
    %v2102 = vpop.f32.mrf.mxu0
    %v2103 = vadd.f32 %v2056, %v2102
    %2104 = vmatmul.f32.gmra.mxu0 %v699
    %v2105 = vpop.f32.mrf.mxu0
    %v2106 = vadd.f32 %v2059, %v2105
    %2107 = vdwg.mxu0
    %2108 = vmatpush.msra.mxu0 %v992
    %2109 = vmatpush.msra.mxu0 %v988
    %2110 = vmatpush.msra.mxu0 %v984
    %2111 = vmatpush.msra.mxu0 %v980
    %2112 = vmatpush.msra.mxu0 %v976
    %2113 = vmatpush.msra.mxu0 %v972
    %2114 = vmatpush.msra.mxu0 %v968
    %2115 = vmatpush.msra.mxu0 %v964
    %2116 = vmatpush.msra.mxu0 %v960
    %2117 = vmatpush.msra.mxu0 %v956
    %2118 = vmatpush.msra.mxu0 %v952
    %2119 = vmatpush.msra.mxu0 %v948
    %2120 = vmatpush.msra.mxu0 %v944
    %2121 = vmatpush.msra.mxu0 %v940
    %2122 = vmatpush.msra.mxu0 %v936
    %2123 = vmatpush.msra.mxu0 %v932
    %2124 = vmatmul.f32.gmra.mxu0 %v726
    %v2125 = vpop.f32.mrf.mxu0
    %v2126 = vadd.f32 %v2079, %v2125
    %2127 = vmatmul.f32.gmra.mxu0 %v728
    %v2128 = vpop.f32.mrf.mxu0
    %v2129 = vadd.f32 %v2082, %v2128
    %2130 = vmatmul.f32.gmra.mxu0 %v730
    %v2131 = vpop.f32.mrf.mxu0
    %v2132 = vadd.f32 %v2085, %v2131
    %2133 = vmatmul.f32.gmra.mxu0 %v732
    %v2134 = vpop.f32.mrf.mxu0
    %v2135 = vadd.f32 %v2088, %v2134
    %2136 = vmatmul.f32.gmra.mxu0 %v734
    %v2137 = vpop.f32.mrf.mxu0
    %v2138 = vadd.f32 %v2091, %v2137
    %2139 = vmatmul.f32.gmra.mxu0 %v692
    %v2140 = vpop.f32.mrf.mxu0
    %v2141 = vadd.f32 %v2094, %v2140
    %2142 = vmatmul.f32.gmra.mxu0 %v694
    %v2143 = vpop.f32.mrf.mxu0
    %v2144 = vadd.f32 %v2097, %v2143
    %2145 = vmatmul.f32.gmra.mxu0 %v696
    %v2146 = vpop.f32.mrf.mxu0
    %v2147 = vadd.f32 %v2100, %v2146
    %2148 = vmatmul.f32.gmra.mxu0 %v698
    %v2149 = vpop.f32.mrf.mxu0
    %v2150 = vadd.f32 %v2103, %v2149
    %2151 = vmatmul.f32.gmra.mxu0 %v700
    %v2152 = vpop.f32.mrf.mxu0
    %v2153 = vadd.f32 %v2106, %v2152
    %2154 = vdwg.mxu0
    %2155 = vmatpush.msra.mxu0 %v1056
    %2156 = vmatpush.msra.mxu0 %v1052
    %2157 = vmatpush.msra.mxu0 %v1048
    %2158 = vmatpush.msra.mxu0 %v1044
    %2159 = vmatpush.msra.mxu0 %v1040
    %2160 = vmatpush.msra.mxu0 %v1036
    %2161 = vmatpush.msra.mxu0 %v1032
    %2162 = vmatpush.msra.mxu0 %v1028
    %2163 = vmatpush.msra.mxu0 %v1024
    %2164 = vmatpush.msra.mxu0 %v1020
    %2165 = vmatpush.msra.mxu0 %v1016
    %2166 = vmatpush.msra.mxu0 %v1012
    %2167 = vmatpush.msra.mxu0 %v1008
    %2168 = vmatpush.msra.mxu0 %v1004
    %2169 = vmatpush.msra.mxu0 %v1000
    %2170 = vmatpush.msra.mxu0 %v996
    %2171 = vmatmul.f32.gmra.mxu0 %v691
    %v2172 = vpop.f32.mrf.mxu0
    %v2173 = vadd.f32 %v2126, %v2172
    %2174 = vmatmul.f32.gmra.mxu0 %v693
    %v2175 = vpop.f32.mrf.mxu0
    %v2176 = vadd.f32 %v2129, %v2175
    %2177 = vmatmul.f32.gmra.mxu0 %v695
    %v2178 = vpop.f32.mrf.mxu0
    %v2179 = vadd.f32 %v2132, %v2178
    %2180 = vmatmul.f32.gmra.mxu0 %v697
    %v2181 = vpop.f32.mrf.mxu0
    %v2182 = vadd.f32 %v2135, %v2181
    %2183 = vmatmul.f32.gmra.mxu0 %v699
    %v2184 = vpop.f32.mrf.mxu0
    %v2185 = vadd.f32 %v2138, %v2184
    %2186 = vmatmul.f32.gmra.mxu0 %v727
    %v2187 = vpop.f32.mrf.mxu0
    %v2188 = vadd.f32 %v2141, %v2187
    %2189 = vmatmul.f32.gmra.mxu0 %v729
    %v2190 = vpop.f32.mrf.mxu0
    %v2191 = vadd.f32 %v2144, %v2190
    %2192 = vmatmul.f32.gmra.mxu0 %v731
    %v2193 = vpop.f32.mrf.mxu0
    %v2194 = vadd.f32 %v2147, %v2193
    %2195 = vmatmul.f32.gmra.mxu0 %v733
    %v2196 = vpop.f32.mrf.mxu0
    %v2197 = vadd.f32 %v2150, %v2196
    %2198 = vmatmul.f32.gmra.mxu0 %v735
    %v2199 = vpop.f32.mrf.mxu0
    %v2200 = vadd.f32 %v2153, %v2199
    %2201 = vdwg.mxu0
    %2202 = vmatpush.msra.mxu0 %v1120
    %2203 = vmatpush.msra.mxu0 %v1116
    %2204 = vmatpush.msra.mxu0 %v1112
    %2205 = vmatpush.msra.mxu0 %v1108
    %2206 = vmatpush.msra.mxu0 %v1104
    %2207 = vmatpush.msra.mxu0 %v1100
    %2208 = vmatpush.msra.mxu0 %v1096
    %2209 = vmatpush.msra.mxu0 %v1092
    %2210 = vmatpush.msra.mxu0 %v1088
    %2211 = vmatpush.msra.mxu0 %v1084
    %2212 = vmatpush.msra.mxu0 %v1080
    %2213 = vmatpush.msra.mxu0 %v1076
    %2214 = vmatpush.msra.mxu0 %v1072
    %2215 = vmatpush.msra.mxu0 %v1068
    %2216 = vmatpush.msra.mxu0 %v1064
    %2217 = vmatpush.msra.mxu0 %v1060
    %2218 = vmatmul.f32.gmra.mxu0 %v692
    %v2219 = vpop.f32.mrf.mxu0
    %v2220 = vadd.f32 %v2173, %v2219
    %2221 = vmatmul.f32.gmra.mxu0 %v694
    %v2222 = vpop.f32.mrf.mxu0
    %v2223 = vadd.f32 %v2176, %v2222
    %2224 = vmatmul.f32.gmra.mxu0 %v696
    %v2225 = vpop.f32.mrf.mxu0
    %v2226 = vadd.f32 %v2179, %v2225
    %2227 = vmatmul.f32.gmra.mxu0 %v698
    %v2228 = vpop.f32.mrf.mxu0
    %v2229 = vadd.f32 %v2182, %v2228
    %2230 = vmatmul.f32.gmra.mxu0 %v700
    %v2231 = vpop.f32.mrf.mxu0
    %v2232 = vadd.f32 %v2185, %v2231
    %2233 = vmatmul.f32.gmra.mxu0 %v728
    %v2234 = vpop.f32.mrf.mxu0
    %v2235 = vadd.f32 %v2188, %v2234
    %2236 = vmatmul.f32.gmra.mxu0 %v730
    %v2237 = vpop.f32.mrf.mxu0
    %v2238 = vadd.f32 %v2191, %v2237
    %2239 = vmatmul.f32.gmra.mxu0 %v732
    %v2240 = vpop.f32.mrf.mxu0
    %v2241 = vadd.f32 %v2194, %v2240
    %2242 = vmatmul.f32.gmra.mxu0 %v734
    %v2243 = vpop.f32.mrf.mxu0
    %v2244 = vadd.f32 %v2197, %v2243
    %2245 = vmatmul.f32.gmra.mxu0 %v736
    %v2246 = vpop.f32.mrf.mxu0
    %v2247 = vadd.f32 %v2200, %v2246
    %2248 = vdwg.mxu0
    %v2249 = vmax.f32 %v1374, %v1389
    %v2250 = vmax.f32 %v1656, %v1671
    %v2251 = vmax.f32 %v1938, %v1953
    %v2252 = vmax.f32 %v2220, %v2235
    %v2253 = vmax.f32 %v1377, %v1392
    %v2254 = vmax.f32 %v1659, %v1674
    %v2255 = vmax.f32 %v1941, %v1956
    %v2256 = vmax.f32 %v2223, %v2238
    %v2257 = vmax.f32 %v1380, %v1395
    %v2258 = vmax.f32 %v1662, %v1677
    %v2259 = vmax.f32 %v1944, %v1959
    %v2260 = vmax.f32 %v2226, %v2241
    %v2261 = vmax.f32 %v1383, %v1398
    %v2262 = vmax.f32 %v1665, %v1680
    %v2263 = vmax.f32 %v1947, %v1962
    %v2264 = vmax.f32 %v2229, %v2244
    %v2265 = vmax.f32 %v1386, %v1401
    %v2266 = vmax.f32 %v1668, %v1683
    %v2267 = vmax.f32 %v1950, %v1965
    %v2268 = vmax.f32 %v2232, %v2247
    %v2269 = vmax.f32 %v2249, %v2251
    %v2270 = vmax.f32 %v2250, %v2252
    %v2271 = vmax.f32 %v2253, %v2255
    %v2272 = vmax.f32 %v2254, %v2256
    %v2273 = vmax.f32 %v2257, %v2259
    %v2274 = vmax.f32 %v2258, %v2260
    %v2275 = vmax.f32 %v2261, %v2263
    %v2276 = vmax.f32 %v2262, %v2264
    %v2277 = vmax.f32 %v2265, %v2267
    %v2278 = vmax.f32 %v2266, %v2268
    %v2279 = vld [vmem:[#allocation7] sm:$0x3]
    %v2281 = vperm.slane %v2279, 0
    %v2282 = vperm.slane %v2279, 1
    %v2285 = vadd.f32 %v2269, %v2281
    %v2286 = vadd.f32 %v2270, %v2282
    %v2287 = vadd.f32 %v2271, %v2281
    %v2288 = vadd.f32 %v2272, %v2282
    %v2289 = vadd.f32 %v2273, %v2281
    %v2290 = vadd.f32 %v2274, %v2282
    %v2291 = vadd.f32 %v2275, %v2281
    %v2292 = vadd.f32 %v2276, %v2282
    %v2293 = vadd.f32 %v2277, %v2281
    %v2294 = vadd.f32 %v2278, %v2282
    %v2295 = vmax.f32 %v2285, 0.0
    %v2296 = vmax.f32 %v2286, 0.0
    %v2297 = vmax.f32 %v2287, 0.0
    %v2298 = vmax.f32 %v2288, 0.0
    %v2299 = vmax.f32 %v2289, 0.0
    %v2300 = vmax.f32 %v2290, 0.0
    %v2301 = vmax.f32 %v2291, 0.0
    %v2302 = vmax.f32 %v2292, 0.0
    %v2303 = vmax.f32 %v2293, 0.0
    %v2304 = vmax.f32 %v2294, 0.0
    %v2305 = vld [vmem:[#allocation9] sm:$0xff]
    %v2306 = vld [vmem:[#allocation9 + $0x8] sm:$0xff]
    %v2307 = vld [vmem:[#allocation9 + $0x10] sm:$0xff]
    %v2308 = vld [vmem:[#allocation9 + $0x18] sm:$0xff]
    %v2309 = vld [vmem:[#allocation9 + $0x20] sm:$0xff]
    %v2310 = vld [vmem:[#allocation9 + $0x28] sm:$0xff]
    %v2311 = vld [vmem:[#allocation9 + $0x30] sm:$0xff]
    %v2312 = vld [vmem:[#allocation9 + $0x38] sm:$0xff]
    %v2313 = vld [vmem:[#allocation9 + $0x40] sm:$0xff]
    %v2314 = vld [vmem:[#allocation9 + $0x48] sm:$0xff]
    %v2315 = vld [vmem:[#allocation9 + $0x50] sm:$0xff]
    %v2316 = vld [vmem:[#allocation9 + $0x58] sm:$0xff]
    %v2317 = vld [vmem:[#allocation9 + $0x60] sm:$0xff]
    %v2318 = vld [vmem:[#allocation9 + $0x68] sm:$0xff]
    %v2319 = vld [vmem:[#allocation9 + $0x70] sm:$0xff]
    %v2320 = vld [vmem:[#allocation9 + $0x78] sm:$0xff]
    %v2321 = vld [vmem:[#allocation9 + $0x80] sm:$0xff]
    %v2322 = vld [vmem:[#allocation9 + $0x88] sm:$0xff]
    %v2323 = vld [vmem:[#allocation9 + $0x90] sm:$0xff]
    %v2324 = vld [vmem:[#allocation9 + $0x98] sm:$0xff]
    %v2325 = vld [vmem:[#allocation9 + $0xa0] sm:$0xff]
    %v2326 = vld [vmem:[#allocation9 + $0xa8] sm:$0xff]
    %v2327 = vld [vmem:[#allocation9 + $0xb0] sm:$0xff]
    %v2328 = vld [vmem:[#allocation9 + $0xb8] sm:$0xff]
    %v2329 = vld [vmem:[#allocation9 + $0xc0] sm:$0xff]
    %v2330 = vld [vmem:[#allocation9 + $0xc8] sm:$0xff]
    %v2331 = vld [vmem:[#allocation9 + $0xd0] sm:$0xff]
    %v2332 = vld [vmem:[#allocation9 + $0xd8] sm:$0xff]
    %v2333 = vld [vmem:[#allocation9 + $0xe0] sm:$0xff]
    %v2334 = vld [vmem:[#allocation9 + $0xe8] sm:$0xff]
    %v2335 = vld [vmem:[#allocation9 + $0xf0] sm:$0xff]
    %v2336 = vld [vmem:[#allocation9 + $0xf8] sm:$0xff]
    %v2337 = vld [vmem:[#allocation9 + $0x100] sm:$0xff]
    %v2338 = vld [vmem:[#allocation9 + $0x108] sm:$0xff]
    %v2339 = vld [vmem:[#allocation9 + $0x110] sm:$0xff]
    %v2340 = vld [vmem:[#allocation9 + $0x118] sm:$0xff]
    %v2341 = vld [vmem:[#allocation9 + $0x120] sm:$0xff]
    %v2342 = vld [vmem:[#allocation9 + $0x128] sm:$0xff]
    %v2343 = vld [vmem:[#allocation9 + $0x130] sm:$0xff]
    %v2344 = vld [vmem:[#allocation9 + $0x138] sm:$0xff]
    %v2345 = vld [vmem:[#allocation9 + $0x140] sm:$0xff]
    %v2346 = vld [vmem:[#allocation9 + $0x148] sm:$0xff]
    %v2347 = vld [vmem:[#allocation9 + $0x150] sm:$0xff]
    %v2348 = vld [vmem:[#allocation9 + $0x158] sm:$0xff]
    %v2349 = vld [vmem:[#allocation9 + $0x160] sm:$0xff]
    %v2350 = vld [vmem:[#allocation9 + $0x168] sm:$0xff]
    %v2351 = vld [vmem:[#allocation9 + $0x170] sm:$0xff]
    %v2352 = vld [vmem:[#allocation9 + $0x178] sm:$0xff]
    %v2353 = vld [vmem:[#allocation9 + $0x180] sm:$0xff]
    %v2354 = vld [vmem:[#allocation9 + $0x188] sm:$0xff]
    %v2355 = vld [vmem:[#allocation9 + $0x190] sm:$0xff]
    %v2356 = vld [vmem:[#allocation9 + $0x198] sm:$0xff]
    %v2357 = vld [vmem:[#allocation9 + $0x1a0] sm:$0xff]
    %v2358 = vld [vmem:[#allocation9 + $0x1a8] sm:$0xff]
    %v2359 = vld [vmem:[#allocation9 + $0x1b0] sm:$0xff]
    %v2360 = vld [vmem:[#allocation9 + $0x1b8] sm:$0xff]
    %v2361 = vld [vmem:[#allocation9 + $0x1c0] sm:$0xff]
    %v2362 = vld [vmem:[#allocation9 + $0x1c8] sm:$0xff]
    %v2363 = vld [vmem:[#allocation9 + $0x1d0] sm:$0xff]
    %v2364 = vld [vmem:[#allocation9 + $0x1d8] sm:$0xff]
    %v2365 = vld [vmem:[#allocation9 + $0x1e0] sm:$0xff]
    %v2366 = vld [vmem:[#allocation9 + $0x1e8] sm:$0xff]
    %v2367 = vld [vmem:[#allocation9 + $0x1f0] sm:$0xff]
    %v2368 = vld [vmem:[#allocation9 + $0x1f8] sm:$0xff]
    %v2369 = vld [vmem:[#allocation9 + $0x200] sm:$0xff]
    %v2370 = vld [vmem:[#allocation9 + $0x208] sm:$0xff]
    %v2371 = vld [vmem:[#allocation9 + $0x210] sm:$0xff]
    %v2372 = vld [vmem:[#allocation9 + $0x218] sm:$0xff]
    %v2373 = vld [vmem:[#allocation9 + $0x220] sm:$0xff]
    %v2374 = vld [vmem:[#allocation9 + $0x228] sm:$0xff]
    %v2375 = vld [vmem:[#allocation9 + $0x230] sm:$0xff]
    %v2376 = vld [vmem:[#allocation9 + $0x238] sm:$0xff]
    %v2377 = vld [vmem:[#allocation9 + $0x240] sm:$0xff]
    %v2378 = vld [vmem:[#allocation9 + $0x248] sm:$0xff]
    %v2379 = vld [vmem:[#allocation9 + $0x250] sm:$0xff]
    %v2380 = vld [vmem:[#allocation9 + $0x258] sm:$0xff]
    %v2381 = vld [vmem:[#allocation9 + $0x260] sm:$0xff]
    %v2382 = vld [vmem:[#allocation9 + $0x268] sm:$0xff]
    %v2383 = vld [vmem:[#allocation9 + $0x270] sm:$0xff]
    %v2384 = vld [vmem:[#allocation9 + $0x278] sm:$0xff]
    %v2385 = vld [vmem:[#allocation9 + $0x280] sm:$0xff]
    %v2386 = vld [vmem:[#allocation9 + $0x288] sm:$0xff]
    %v2387 = vld [vmem:[#allocation9 + $0x290] sm:$0xff]
    %v2388 = vld [vmem:[#allocation9 + $0x298] sm:$0xff]
    %v2389 = vld [vmem:[#allocation9 + $0x2a0] sm:$0xff]
    %v2390 = vld [vmem:[#allocation9 + $0x2a8] sm:$0xff]
    %v2391 = vld [vmem:[#allocation9 + $0x2b0] sm:$0xff]
    %v2392 = vld [vmem:[#allocation9 + $0x2b8] sm:$0xff]
    %v2393 = vld [vmem:[#allocation9 + $0x2c0] sm:$0xff]
    %v2394 = vld [vmem:[#allocation9 + $0x2c8] sm:$0xff]
    %v2395 = vld [vmem:[#allocation9 + $0x2d0] sm:$0xff]
    %v2396 = vld [vmem:[#allocation9 + $0x2d8] sm:$0xff]
    %v2397 = vld [vmem:[#allocation9 + $0x2e0] sm:$0xff]
    %v2398 = vld [vmem:[#allocation9 + $0x2e8] sm:$0xff]
    %v2399 = vld [vmem:[#allocation9 + $0x2f0] sm:$0xff]
    %v2400 = vld [vmem:[#allocation9 + $0x2f8] sm:$0xff]
    %v2401 = vld [vmem:[#allocation9 + $0x300] sm:$0xff]
    %v2402 = vld [vmem:[#allocation9 + $0x308] sm:$0xff]
    %v2403 = vld [vmem:[#allocation9 + $0x310] sm:$0xff]
    %v2404 = vld [vmem:[#allocation9 + $0x318] sm:$0xff]
    %v2405 = vld [vmem:[#allocation9 + $0x320] sm:$0xff]
    %v2406 = vld [vmem:[#allocation9 + $0x328] sm:$0xff]
    %v2407 = vld [vmem:[#allocation9 + $0x330] sm:$0xff]
    %v2408 = vld [vmem:[#allocation9 + $0x338] sm:$0xff]
    %v2409 = vld [vmem:[#allocation9 + $0x340] sm:$0xff]
    %v2410 = vld [vmem:[#allocation9 + $0x348] sm:$0xff]
    %v2411 = vld [vmem:[#allocation9 + $0x350] sm:$0xff]
    %v2412 = vld [vmem:[#allocation9 + $0x358] sm:$0xff]
    %v2413 = vld [vmem:[#allocation9 + $0x360] sm:$0xff]
    %v2414 = vld [vmem:[#allocation9 + $0x368] sm:$0xff]
    %v2415 = vld [vmem:[#allocation9 + $0x370] sm:$0xff]
    %v2416 = vld [vmem:[#allocation9 + $0x378] sm:$0xff]
    %v2417 = vld [vmem:[#allocation9 + $0x380] sm:$0xff]
    %v2418 = vld [vmem:[#allocation9 + $0x388] sm:$0xff]
    %v2419 = vld [vmem:[#allocation9 + $0x390] sm:$0xff]
    %v2420 = vld [vmem:[#allocation9 + $0x398] sm:$0xff]
    %v2421 = vld [vmem:[#allocation9 + $0x3a0] sm:$0xff]
    %v2422 = vld [vmem:[#allocation9 + $0x3a8] sm:$0xff]
    %v2423 = vld [vmem:[#allocation9 + $0x3b0] sm:$0xff]
    %v2424 = vld [vmem:[#allocation9 + $0x3b8] sm:$0xff]
    %v2425 = vld [vmem:[#allocation9 + $0x3c0] sm:$0xff]
    %v2426 = vld [vmem:[#allocation9 + $0x3c8] sm:$0xff]
    %v2427 = vld [vmem:[#allocation9 + $0x3d0] sm:$0xff]
    %v2428 = vld [vmem:[#allocation9 + $0x3d8] sm:$0xff]
    %v2429 = vld [vmem:[#allocation9 + $0x3e0] sm:$0xff]
    %v2430 = vld [vmem:[#allocation9 + $0x3e8] sm:$0xff]
    %v2431 = vld [vmem:[#allocation9 + $0x3f0] sm:$0xff]
    %v2432 = vld [vmem:[#allocation9 + $0x3f8] sm:$0xff]
    %v2433 = vld [vmem:[#allocation9 + $0x400] sm:$0xff]
    %v2434 = vld [vmem:[#allocation9 + $0x408] sm:$0xff]
    %v2435 = vld [vmem:[#allocation9 + $0x410] sm:$0xff]
    %v2436 = vld [vmem:[#allocation9 + $0x418] sm:$0xff]
    %v2437 = vld [vmem:[#allocation9 + $0x420] sm:$0xff]
    %v2438 = vld [vmem:[#allocation9 + $0x428] sm:$0xff]
    %v2439 = vld [vmem:[#allocation9 + $0x430] sm:$0xff]
    %v2440 = vld [vmem:[#allocation9 + $0x438] sm:$0xff]
    %v2441 = vld [vmem:[#allocation9 + $0x440] sm:$0xff]
    %v2442 = vld [vmem:[#allocation9 + $0x448] sm:$0xff]
    %v2443 = vld [vmem:[#allocation9 + $0x450] sm:$0xff]
    %v2444 = vld [vmem:[#allocation9 + $0x458] sm:$0xff]
    %v2445 = vld [vmem:[#allocation9 + $0x460] sm:$0xff]
    %v2446 = vld [vmem:[#allocation9 + $0x468] sm:$0xff]
    %v2447 = vld [vmem:[#allocation9 + $0x470] sm:$0xff]
    %v2448 = vld [vmem:[#allocation9 + $0x478] sm:$0xff]
    %v2449 = vld [vmem:[#allocation9 + $0x480] sm:$0xff]
    %v2450 = vld [vmem:[#allocation9 + $0x488] sm:$0xff]
    %v2451 = vld [vmem:[#allocation9 + $0x490] sm:$0xff]
    %v2452 = vld [vmem:[#allocation9 + $0x498] sm:$0xff]
    %v2453 = vld [vmem:[#allocation9 + $0x4a0] sm:$0xff]
    %v2454 = vld [vmem:[#allocation9 + $0x4a8] sm:$0xff]
    %v2455 = vld [vmem:[#allocation9 + $0x4b0] sm:$0xff]
    %v2456 = vld [vmem:[#allocation9 + $0x4b8] sm:$0xff]
    %v2457 = vld [vmem:[#allocation9 + $0x4c0] sm:$0xff]
    %v2458 = vld [vmem:[#allocation9 + $0x4c8] sm:$0xff]
    %v2459 = vld [vmem:[#allocation9 + $0x4d0] sm:$0xff]
    %v2460 = vld [vmem:[#allocation9 + $0x4d8] sm:$0xff]
    %v2461 = vld [vmem:[#allocation9 + $0x4e0] sm:$0xff]
    %v2462 = vld [vmem:[#allocation9 + $0x4e8] sm:$0xff]
    %v2463 = vld [vmem:[#allocation9 + $0x4f0] sm:$0xff]
    %v2464 = vld [vmem:[#allocation9 + $0x4f8] sm:$0xff]
    %v2465 = vld [vmem:[#allocation10] sm:$0x1]
    %v2467 = vperm.slane %v2465, 0
    %2469 = vmatpush.msra.mxu0 %v2320
    %2470 = vmatpush.msra.mxu0 %v2319
    %2471 = vmatpush.msra.mxu0 %v2318
    %2472 = vmatpush.msra.mxu0 %v2317
    %2473 = vmatpush.msra.mxu0 %v2316
    %2474 = vmatpush.msra.mxu0 %v2315
    %2475 = vmatpush.msra.mxu0 %v2314
    %2476 = vmatpush.msra.mxu0 %v2313
    %2477 = vmatpush.msra.mxu0 %v2312
    %2478 = vmatpush.msra.mxu0 %v2311
    %2479 = vmatpush.msra.mxu0 %v2310
    %2480 = vmatpush.msra.mxu0 %v2309
    %2481 = vmatpush.msra.mxu0 %v2308
    %2482 = vmatpush.msra.mxu0 %v2307
    %2483 = vmatpush.msra.mxu0 %v2306
    %2484 = vmatpush.msra.mxu0 %v2305
    %2485 = vmatmul.f32.gmra.mxu0 %v2295
    %v2486 = vpop.f32.mrf.mxu0
    %v2487 = vadd.f32 %v2467, %v2486
    %2488 = vdwg.mxu0
    %2489 = vmatpush.msra.mxu0 %v2336
    %2490 = vmatpush.msra.mxu0 %v2335
    %2491 = vmatpush.msra.mxu0 %v2334
    %2492 = vmatpush.msra.mxu0 %v2333
    %2493 = vmatpush.msra.mxu0 %v2332
    %2494 = vmatpush.msra.mxu0 %v2331
    %2495 = vmatpush.msra.mxu0 %v2330
    %2496 = vmatpush.msra.mxu0 %v2329
    %2497 = vmatpush.msra.mxu0 %v2328
    %2498 = vmatpush.msra.mxu0 %v2327
    %2499 = vmatpush.msra.mxu0 %v2326
    %2500 = vmatpush.msra.mxu0 %v2325
    %2501 = vmatpush.msra.mxu0 %v2324
    %2502 = vmatpush.msra.mxu0 %v2323
    %2503 = vmatpush.msra.mxu0 %v2322
    %2504 = vmatpush.msra.mxu0 %v2321
    %2505 = vmatmul.f32.gmra.mxu0 %v2296
    %v2506 = vpop.f32.mrf.mxu0
    %v2507 = vadd.f32 %v2487, %v2506
    %2508 = vdwg.mxu0
    %2509 = vmatpush.msra.mxu0 %v2352
    %2510 = vmatpush.msra.mxu0 %v2351
    %2511 = vmatpush.msra.mxu0 %v2350
    %2512 = vmatpush.msra.mxu0 %v2349
    %2513 = vmatpush.msra.mxu0 %v2348
    %2514 = vmatpush.msra.mxu0 %v2347
    %2515 = vmatpush.msra.mxu0 %v2346
    %2516 = vmatpush.msra.mxu0 %v2345
    %2517 = vmatpush.msra.mxu0 %v2344
    %2518 = vmatpush.msra.mxu0 %v2343
    %2519 = vmatpush.msra.mxu0 %v2342
    %2520 = vmatpush.msra.mxu0 %v2341
    %2521 = vmatpush.msra.mxu0 %v2340
    %2522 = vmatpush.msra.mxu0 %v2339
    %2523 = vmatpush.msra.mxu0 %v2338
    %2524 = vmatpush.msra.mxu0 %v2337
    %2525 = vmatmul.f32.gmra.mxu0 %v2297
    %v2526 = vpop.f32.mrf.mxu0
    %v2527 = vadd.f32 %v2507, %v2526
    %2528 = vdwg.mxu0
    %2529 = vmatpush.msra.mxu0 %v2368
    %2530 = vmatpush.msra.mxu0 %v2367
    %2531 = vmatpush.msra.mxu0 %v2366
    %2532 = vmatpush.msra.mxu0 %v2365
    %2533 = vmatpush.msra.mxu0 %v2364
    %2534 = vmatpush.msra.mxu0 %v2363
    %2535 = vmatpush.msra.mxu0 %v2362
    %2536 = vmatpush.msra.mxu0 %v2361
    %2537 = vmatpush.msra.mxu0 %v2360
    %2538 = vmatpush.msra.mxu0 %v2359
    %2539 = vmatpush.msra.mxu0 %v2358
    %2540 = vmatpush.msra.mxu0 %v2357
    %2541 = vmatpush.msra.mxu0 %v2356
    %2542 = vmatpush.msra.mxu0 %v2355
    %2543 = vmatpush.msra.mxu0 %v2354
    %2544 = vmatpush.msra.mxu0 %v2353
    %2545 = vmatmul.f32.gmra.mxu0 %v2298
    %v2546 = vpop.f32.mrf.mxu0
    %v2547 = vadd.f32 %v2527, %v2546
    %2548 = vdwg.mxu0
    %2549 = vmatpush.msra.mxu0 %v2384
    %2550 = vmatpush.msra.mxu0 %v2383
    %2551 = vmatpush.msra.mxu0 %v2382
    %2552 = vmatpush.msra.mxu0 %v2381
    %2553 = vmatpush.msra.mxu0 %v2380
    %2554 = vmatpush.msra.mxu0 %v2379
    %2555 = vmatpush.msra.mxu0 %v2378
    %2556 = vmatpush.msra.mxu0 %v2377
    %2557 = vmatpush.msra.mxu0 %v2376
    %2558 = vmatpush.msra.mxu0 %v2375
    %2559 = vmatpush.msra.mxu0 %v2374
    %2560 = vmatpush.msra.mxu0 %v2373
    %2561 = vmatpush.msra.mxu0 %v2372
    %2562 = vmatpush.msra.mxu0 %v2371
    %2563 = vmatpush.msra.mxu0 %v2370
    %2564 = vmatpush.msra.mxu0 %v2369
    %2565 = vmatmul.f32.gmra.mxu0 %v2299
    %v2566 = vpop.f32.mrf.mxu0
    %v2567 = vadd.f32 %v2547, %v2566
    %2568 = vdwg.mxu0
    %2569 = vmatpush.msra.mxu0 %v2400
    %2570 = vmatpush.msra.mxu0 %v2399
    %2571 = vmatpush.msra.mxu0 %v2398
    %2572 = vmatpush.msra.mxu0 %v2397
    %2573 = vmatpush.msra.mxu0 %v2396
    %2574 = vmatpush.msra.mxu0 %v2395
    %2575 = vmatpush.msra.mxu0 %v2394
    %2576 = vmatpush.msra.mxu0 %v2393
    %2577 = vmatpush.msra.mxu0 %v2392
    %2578 = vmatpush.msra.mxu0 %v2391
    %2579 = vmatpush.msra.mxu0 %v2390
    %2580 = vmatpush.msra.mxu0 %v2389
    %2581 = vmatpush.msra.mxu0 %v2388
    %2582 = vmatpush.msra.mxu0 %v2387
    %2583 = vmatpush.msra.mxu0 %v2386
    %2584 = vmatpush.msra.mxu0 %v2385
    %2585 = vmatmul.f32.gmra.mxu0 %v2300
    %v2586 = vpop.f32.mrf.mxu0
    %v2587 = vadd.f32 %v2567, %v2586
    %2588 = vdwg.mxu0
    %2589 = vmatpush.msra.mxu0 %v2416
    %2590 = vmatpush.msra.mxu0 %v2415
    %2591 = vmatpush.msra.mxu0 %v2414
    %2592 = vmatpush.msra.mxu0 %v2413
    %2593 = vmatpush.msra.mxu0 %v2412
    %2594 = vmatpush.msra.mxu0 %v2411
    %2595 = vmatpush.msra.mxu0 %v2410
    %2596 = vmatpush.msra.mxu0 %v2409
    %2597 = vmatpush.msra.mxu0 %v2408
    %2598 = vmatpush.msra.mxu0 %v2407
    %2599 = vmatpush.msra.mxu0 %v2406
    %2600 = vmatpush.msra.mxu0 %v2405
    %2601 = vmatpush.msra.mxu0 %v2404
    %2602 = vmatpush.msra.mxu0 %v2403
    %2603 = vmatpush.msra.mxu0 %v2402
    %2604 = vmatpush.msra.mxu0 %v2401
    %2605 = vmatmul.f32.gmra.mxu0 %v2301
    %v2606 = vpop.f32.mrf.mxu0
    %v2607 = vadd.f32 %v2587, %v2606
    %2608 = vdwg.mxu0
    %2609 = vmatpush.msra.mxu0 %v2432
    %2610 = vmatpush.msra.mxu0 %v2431
    %2611 = vmatpush.msra.mxu0 %v2430
    %2612 = vmatpush.msra.mxu0 %v2429
    %2613 = vmatpush.msra.mxu0 %v2428
    %2614 = vmatpush.msra.mxu0 %v2427
    %2615 = vmatpush.msra.mxu0 %v2426
    %2616 = vmatpush.msra.mxu0 %v2425
    %2617 = vmatpush.msra.mxu0 %v2424
    %2618 = vmatpush.msra.mxu0 %v2423
    %2619 = vmatpush.msra.mxu0 %v2422
    %2620 = vmatpush.msra.mxu0 %v2421
    %2621 = vmatpush.msra.mxu0 %v2420
    %2622 = vmatpush.msra.mxu0 %v2419
    %2623 = vmatpush.msra.mxu0 %v2418
    %2624 = vmatpush.msra.mxu0 %v2417
    %2625 = vmatmul.f32.gmra.mxu0 %v2302
    %v2626 = vpop.f32.mrf.mxu0
    %v2627 = vadd.f32 %v2607, %v2626
    %2628 = vdwg.mxu0
    %2629 = vmatpush.msra.mxu0 %v2448
    %2630 = vmatpush.msra.mxu0 %v2447
    %2631 = vmatpush.msra.mxu0 %v2446
    %2632 = vmatpush.msra.mxu0 %v2445
    %2633 = vmatpush.msra.mxu0 %v2444
    %2634 = vmatpush.msra.mxu0 %v2443
    %2635 = vmatpush.msra.mxu0 %v2442
    %2636 = vmatpush.msra.mxu0 %v2441
    %2637 = vmatpush.msra.mxu0 %v2440
    %2638 = vmatpush.msra.mxu0 %v2439
    %2639 = vmatpush.msra.mxu0 %v2438
    %2640 = vmatpush.msra.mxu0 %v2437
    %2641 = vmatpush.msra.mxu0 %v2436
    %2642 = vmatpush.msra.mxu0 %v2435
    %2643 = vmatpush.msra.mxu0 %v2434
    %2644 = vmatpush.msra.mxu0 %v2433
    %2645 = vmatmul.f32.gmra.mxu0 %v2303
    %v2646 = vpop.f32.mrf.mxu0
    %v2647 = vadd.f32 %v2627, %v2646
    %2648 = vdwg.mxu0
    %2649 = vmatpush.msra.mxu0 %v2464
    %2650 = vmatpush.msra.mxu0 %v2463
    %2651 = vmatpush.msra.mxu0 %v2462
    %2652 = vmatpush.msra.mxu0 %v2461
    %2653 = vmatpush.msra.mxu0 %v2460
    %2654 = vmatpush.msra.mxu0 %v2459
    %2655 = vmatpush.msra.mxu0 %v2458
    %2656 = vmatpush.msra.mxu0 %v2457
    %2657 = vmatpush.msra.mxu0 %v2456
    %2658 = vmatpush.msra.mxu0 %v2455
    %2659 = vmatpush.msra.mxu0 %v2454
    %2660 = vmatpush.msra.mxu0 %v2453
    %2661 = vmatpush.msra.mxu0 %v2452
    %2662 = vmatpush.msra.mxu0 %v2451
    %2663 = vmatpush.msra.mxu0 %v2450
    %2664 = vmatpush.msra.mxu0 %v2449
    %2665 = vmatmul.f32.gmra.mxu0 %v2304
    %v2666 = vpop.f32.mrf.mxu0
    %v2667 = vadd.f32 %v2647, %v2666
    %2668 = vdwg.mxu0
    %v2669 = vmax.f32 %v2667, 0.0
    %v2670 = vld [vmem:[#allocation12] sm:$0xff]
    %v2671 = vld [vmem:[#allocation12 + $0x8] sm:$0xff]
    %v2672 = vld [vmem:[#allocation12 + $0x10] sm:$0xff]
    %v2673 = vld [vmem:[#allocation12 + $0x18] sm:$0xff]
    %v2674 = vld [vmem:[#allocation12 + $0x20] sm:$0xff]
    %v2675 = vld [vmem:[#allocation12 + $0x28] sm:$0xff]
    %v2676 = vld [vmem:[#allocation12 + $0x30] sm:$0xff]
    %v2677 = vld [vmem:[#allocation12 + $0x38] sm:$0xff]
    %v2678 = vld [vmem:[#allocation12 + $0x40] sm:$0xff]
    %v2679 = vld [vmem:[#allocation12 + $0x48] sm:$0xff]
    %v2680 = vld [vmem:[#allocation12 + $0x50] sm:$0xff]
    %v2681 = vld [vmem:[#allocation12 + $0x58] sm:$0xff]
    %v2682 = vld [vmem:[#allocation12 + $0x60] sm:$0xff]
    %v2683 = vld [vmem:[#allocation12 + $0x68] sm:$0xff]
    %v2684 = vld [vmem:[#allocation12 + $0x70] sm:$0xff]
    %v2685 = vld [vmem:[#allocation12 + $0x78] sm:$0xff]
    %v2686 = vld [vmem:[#allocation13] sm:$0x1]
    %v2688 = vperm.slane %v2686, 0
    %2690 = vmatpush.msra.mxu0 %v2685
    %2691 = vmatpush.msra.mxu0 %v2684
    %2692 = vmatpush.msra.mxu0 %v2683
    %2693 = vmatpush.msra.mxu0 %v2682
    %2694 = vmatpush.msra.mxu0 %v2681
    %2695 = vmatpush.msra.mxu0 %v2680
    %2696 = vmatpush.msra.mxu0 %v2679
    %2697 = vmatpush.msra.mxu0 %v2678
    %2698 = vmatpush.msra.mxu0 %v2677
    %2699 = vmatpush.msra.mxu0 %v2676
    %2700 = vmatpush.msra.mxu0 %v2675
    %2701 = vmatpush.msra.mxu0 %v2674
    %2702 = vmatpush.msra.mxu0 %v2673
    %2703 = vmatpush.msra.mxu0 %v2672
    %2704 = vmatpush.msra.mxu0 %v2671
    %2705 = vmatpush.msra.mxu0 %v2670
    %2706 = vmatmul.f32.gmra.mxu0 %v2669
    %v2707 = vpop.f32.mrf.mxu0
    %v2708 = vadd.f32 %v2688, %v2707
    %2709 = vdwg.mxu0
    %2710 = vmax.xlane.f32.xlu0 %v2708
    %v2711 = vpop.xlane.xlu0 %2710
    %v2712 = vsub.f32 %v2708, %v2711
    %v2713 = vmul.f32 %v2712, 1.442695
    %v2714 = vpow.pop %v2713
    %2715 = vadd.xlane.f32.xlu0 %v2714
    %v2716 = vpop.xlane.xlu0 %2715
    %v2717 = vlog2.pop %v2716
    %v2718 = vmul.f32 %v2717, 0.6931472
    %v2719 = vsub.f32 %v2712, %v2718
    %2720 = vst [vmem:[%s9] sm:$0xff] %v2719
    // Predicated region
    $region70: #{simplenet_forward.1} parent=1 // pred_check
      _
    $region71: #{simplenet_forward.1} parent=1 // pred_check_branch
      %2722 = sbr.rel (0) target = $region73
    $region72: #{simplenet_forward.1} parent=1 // pred_region
      _
    $region73: #{simplenet_forward.1} parent=1 // pred_fallthru
      _
    // Predicated region
    $region74: #{simplenet_forward.1} parent=1 // pred_check
      _
    $region75: #{simplenet_forward.1} parent=1 // pred_check_branch
      %2724 = sbr.rel (0) target = $region77
    $region76: #{simplenet_forward.1} parent=1 // pred_region
      _
    $region77: #{simplenet_forward.1} parent=1 // pred_fallthru
      _
    %2725 = vsyncpa [#allocation3], 1
    %2726 = vsyncpa [#allocation5], 1
    %2727 = vsyncpa [#allocation8], 1
    %2728 = vsyncpa [#allocation11], 1
    %2729 = vsyncpa [#allocation14], 1

</llo_original>
